<compile_context>
chip_gen: v7x
topology: tpu7x:2x2x1
jax: 0.10.0
libtpu: 0.0.40
codegen_flags: <defaults>
</compile_context>

<pallas_src>
import functools

import jax
import jax.numpy as jnp
from jax import lax
from jax.experimental import pallas as pl
from jax.experimental.pallas import tpu as pltpu

EPS = 1e-5  # PyTorch GroupNorm default


def _round_up(a, b):
    return (a + b - 1) // b * b


def singleconv_kernel(xcur_ref, xnxt_ref, w_ref, mask_ref, memb_ref,
                      gamma_ref, beta_ref, out_ref,
                      conv_ref, s1_ref, s2_ref, scale_ref, shift_ref, xwin_ref,
                      *, s_tile, pad_start, tap_offsets, inv_count, eps,
                      activation):
    p = pl.program_id(1)   # 0: conv + statistics pass, 1: normalize/write pass
    t = pl.program_id(2)   # spatial tile index (flattened padded volume)

    @pl.when(p == 0)
    def _conv_and_stats():
        # Stats accumulators are per-batch; p and t restart for every n because
        # the grid is iterated row-major with n outermost.
        @pl.when(t == 0)
        def _init():
            s1_ref[...] = jnp.zeros_like(s1_ref)
            s2_ref[...] = jnp.zeros_like(s2_ref)

        # Assemble the halo'd input window [tile t | tile t+1] in VMEM.
        xwin_ref[:, :s_tile] = xcur_ref[...]
        xwin_ref[:, s_tile:] = xnxt_ref[...]

        # 3x3x3 conv == sum over 27 taps of (Cout,Cin) @ (Cin,s_tile) on the
        # MXU; each tap is a constant lane shift of the flattened volume.
        acc = None
        for tap, off in enumerate(tap_offsets):
            lo = pad_start + off                       # static, >= 0 by construction
            part = jnp.dot(w_ref[tap], xwin_ref[:, lo:lo + s_tile],
                           preferred_element_type=jnp.float32)
            acc = part if acc is None else acc + part

        idx = pl.multiple_of(t * s_tile, 128)
        conv_ref[:, pl.ds(idx, s_tile)] = acc          # resident raw conv result

        # Masked statistics (borders of the padded grid are excluded).  Lane
        # reductions routed to the MXU via a ones vector.
        # TODO(synk): switch to mean-shifted accumulation if E[x^2]-E[x]^2
        # cancellation ever matters for very deep layers.
        ym = acc * mask_ref[...]
        ones = jnp.ones((s_tile, 1), jnp.float32)
        s1_ref[...] += jnp.dot(ym, ones, preferred_element_type=jnp.float32)
        s2_ref[...] += jnp.dot(ym * acc, ones, preferred_element_type=jnp.float32)

    @pl.when(p == 1)
    def _normalize():
        # Fold GroupNorm into a per-channel scale/shift once per batch.
        @pl.when(t == 0)
        def _finalize_stats():
            gs1 = jnp.dot(memb_ref[...], s1_ref[...],
                          preferred_element_type=jnp.float32)
            gs2 = jnp.dot(memb_ref[...], s2_ref[...],
                          preferred_element_type=jnp.float32)
            mean = gs1 * inv_count
            var = gs2 * inv_count - mean * mean        # biased variance (PyTorch)
            inv = lax.rsqrt(var + eps)
            sc = inv * gamma_ref[...]
            scale_ref[...] = sc
            shift_ref[...] = beta_ref[...] - mean * sc

        idx = pl.multiple_of(t * s_tile, 128)
        y = conv_ref[:, pl.ds(idx, s_tile)]
        yn = y * scale_ref[...] + shift_ref[...]
        if activation:
            # ELU (alpha=1); clamp the exp argument so the unselected branch
            # cannot overflow.
            yn = jnp.where(yn > 0, yn, jnp.exp(jnp.minimum(yn, 0.0)) - 1.0)
        out_ref[...] = yn.astype(out_ref.dtype)


def single_conv(x, weight, gamma, beta, *, num_groups=8, activation=True,
                padding=1, stride=1, s_tile_max=2048, compute_dtype=None,
                vmem_limit_bytes=64 * 1024 * 1024):
    """x: (N, Cin, D, H, W); weight: (Cout, Cin, k, k, k), no bias.
    Returns (N, Cout, D', H', W') matching PyTorch SingleConv.forward."""
    N, Cin, D, H, W = x.shape
    Cout = weight.shape[0]
    k = weight.shape[2]
    assert weight.shape[1] == Cin and weight.shape[3] == k and weight.shape[4] == k
    assert k % 2 == 1, "odd kernel sizes only"
    assert stride == 1  # TODO(synk): strided conv not implemented in this kernel.
    if Cout < num_groups:                 # mirrors the PyTorch module
        num_groups = 1
    assert Cout % num_groups == 0, "GroupNorm requires Cout % num_groups == 0"
    cg = Cout // num_groups

    # Compute dtype for the MXU operands (bf16 recommended for production; the
    # accumulator and all GroupNorm math stay in f32 either way).
    cdtype = jnp.dtype(compute_dtype) if compute_dtype is not None else jnp.dtype(x.dtype)
    dsize = cdtype.itemsize
    sublane = {4: 8, 2: 16, 1: 32}[dsize]
    Cin_pad = _round_up(Cin, sublane)

    c = k // 2
    Dp, Hp, Wp = D + 2 * padding, H + 2 * padding, W + 2 * padding
    Do, Ho, Wo = Dp - k + 1, Hp - k + 1, Wp - k + 1
    assert Do > 0 and Ho > 0 and Wo > 0
    Stot = Dp * Hp * Wp
    R = c * (Hp * Wp + Wp + 1)            # max |tap offset| on the flattened axis

    # ---- tile selection: multiple of 128, >= 2*R (halo fits in [t, t+1]),
    # ---- and double-buffered inputs kept under a fraction of the VMEM budget.
    min_tile = _round_up(max(2 * R, 128), 128)
    cap = max(min_tile, _round_up(min(max(s_tile_max, 128), max(Stot, 128)), 128))
    s_tile = cap
    while s_tile > min_tile:
        per_step = (2 * 2 * Cin_pad * s_tile * dsize          # xcur/xnxt, double-buffered
                    + 2 * Cin_pad * s_tile * dsize            # halo window scratch
                    + 2 * Cout * s_tile * (x.dtype.itemsize + 4))  # out blocks + acc
        if per_step <= vmem_limit_bytes // 2:
            break
        s_tile -= 128
    n_tiles = -(-Stot // s_tile)
    L_out = n_tiles * s_tile
    L_in = (n_tiles + 1) * s_tile
    pad_start = R
    assert s_tile >= 2 * R

    conv_bytes = Cout * L_out * 4
    # TODO(synk): when the resident (Cout, S) conv scratch does not fit in VMEM
    # (very deep layers / large volumes, esp. v7x's 64 MiB), split into two
    # pallas_calls (conv+stats, then normalize) and stream the raw conv output
    # through HBM instead of keeping it resident.
    assert conv_bytes <= vmem_limit_bytes // 2, (
        f"resident conv scratch ({conv_bytes} B) exceeds VMEM budget; "
        "use the split-call fallback")

    # ---- input: pad spatially (cheap, ~1.1x), flatten, pad channels/length.
    xp = jnp.pad(x, ((0, 0), (0, 0),
                     (padding, padding), (padding, padding), (padding, padding)))
    xpf = xp.reshape(N, Cin, Stot).astype(cdtype)
    xpf = jnp.pad(xpf, ((0, 0), (0, Cin_pad - Cin),
                        (pad_start, L_in - Stot - pad_start)))

    # ---- weights: one (Cout, Cin_pad) matrix per tap, plus the tap offsets.
    w_taps = jnp.transpose(weight, (2, 3, 4, 0, 1)).reshape(k ** 3, Cout, Cin)
    w_taps = jnp.pad(w_taps, ((0, 0), (0, 0), (0, Cin_pad - Cin))).astype(cdtype)
    tap_offsets = tuple((kd - c) * Hp * Wp + (kh - c) * Wp + (kw - c)
                        for kd in range(k) for kh in range(k) for kw in range(k))

    # ---- validity mask over the padded grid (excludes border garbage).
    dv = (jnp.arange(Dp) >= c) & (jnp.arange(Dp) < c + Do)
    hv = (jnp.arange(Hp) >= c) & (jnp.arange(Hp) < c + Ho)
    wv = (jnp.arange(Wp) >= c) & (jnp.arange(Wp) < c + Wo)
    vmask = (dv[:, None, None] & hv[None, :, None] & wv[None, None, :]).reshape(Stot)
    vmask = jnp.pad(vmask.astype(jnp.float32), (0, L_out - Stot)).reshape(1, L_out)

    # ---- GroupNorm constants.
    gid = jnp.arange(Cout) // cg
    memb = (gid[:, None] == gid[None, :]).astype(jnp.float32)   # (Cout, Cout)
    gamma2 = jnp.asarray(gamma, jnp.float32).reshape(Cout, 1)
    beta2 = jnp.asarray(beta, jnp.float32).reshape(Cout, 1)
    inv_count = 1.0 / float(cg * Do * Ho * Wo)

    kernel = functools.partial(
        singleconv_kernel, s_tile=s_tile, pad_start=pad_start,
        tap_offsets=tap_offsets, inv_count=inv_count, eps=EPS,
        activation=activation)

    # x blocks collapse to a constant index during pass 1 (no re-fetch); the
    # output block index is held constant during pass 0 (no redundant store).
    out = pl.pallas_call(
        kernel,
        out_shape=jax.ShapeDtypeStruct((N, Cout, L_out), x.dtype),
        grid_spec=pltpu.PrefetchScalarGridSpec(
            num_scalar_prefetch=0,
            grid=(N, 2, n_tiles),            # batch x {conv+stats, normalize} x tiles
            in_specs=[
                pl.BlockSpec((None, Cin_pad, s_tile),
                             lambda n, p, t: (n, 0, t * (1 - p))),        # tile t
                pl.BlockSpec((None, Cin_pad, s_tile),
                             lambda n, p, t: (n, 0, (t + 1) * (1 - p))),  # tile t+1
                pl.BlockSpec((k ** 3, Cout, Cin_pad), lambda n, p, t: (0, 0, 0)),
                pl.BlockSpec((1, s_tile), lambda n, p, t: (0, t * (1 - p))),
                pl.BlockSpec((Cout, Cout), lambda n, p, t: (0, 0)),
                pl.BlockSpec((Cout, 1), lambda n, p, t: (0, 0)),
                pl.BlockSpec((Cout, 1), lambda n, p, t: (0, 0)),
            ],
            out_specs=pl.BlockSpec((None, Cout, s_tile),
                                   lambda n, p, t: (n, 0, t * p)),
            scratch_shapes=[
                pltpu.VMEM((Cout, L_out), jnp.float32),    # resident raw conv result
                pltpu.VMEM((Cout, 1), jnp.float32),        # per-channel sum
                pltpu.VMEM((Cout, 1), jnp.float32),        # per-channel sum of squares
                pltpu.VMEM((Cout, 1), jnp.float32),        # folded scale
                pltpu.VMEM((Cout, 1), jnp.float32),        # folded shift
                pltpu.VMEM((Cin_pad, 2 * s_tile), cdtype), # halo'd input window
            ]),
        compiler_params=pltpu.CompilerParams(
            # TODO(synk): when N==1 on v7x, add a parallel axis over group
            # chunks so the second TensorCore is not idle.
            dimension_semantics=("parallel", "arbitrary", "arbitrary"),
            vmem_limit_bytes=vmem_limit_bytes),
    )(xpf, xpf, w_taps, vmask, memb, gamma2, beta2)

    y_full = out[:, :, :Stot].reshape(N, Cout, Dp, Hp, Wp)
    return y_full[:, :, c:c + Do, c:c + Ho, c:c + Wo]


def single_conv_ref(x, weight, gamma, beta, *, num_groups=8, activation=True,
                    padding=1, stride=1):
    """Pure-JAX reference mirroring the PyTorch SingleConv module."""
    Cout = weight.shape[0]
    if Cout < num_groups:
        num_groups = 1
    y = lax.conv_general_dilated(
        x.astype(jnp.float32), weight.astype(jnp.float32),
        window_strides=(stride,) * 3,
        padding=((padding, padding),) * 3,
        dimension_numbers=("NCDHW", "OIDHW", "NCDHW"),
        precision=lax.Precision.HIGHEST)
    N, C, D, H, W = y.shape
    yr = y.reshape(N, num_groups, C // num_groups, D, H, W)
    m = yr.mean(axis=(2, 3, 4, 5), keepdims=True)
    v = yr.var(axis=(2, 3, 4, 5), keepdims=True)
    yn = ((yr - m) / jnp.sqrt(v + EPS)).reshape(N, C, D, H, W)
    yn = yn * gamma.reshape(1, C, 1, 1, 1) + beta.reshape(1, C, 1, 1, 1)
    if activation:
        yn = jnp.where(yn > 0, yn, jnp.exp(jnp.minimum(yn, 0.0)) - 1.0)
    return yn.astype(x.dtype)


if __name__ == "__main__":
    key = jax.random.PRNGKey(0)
    N, Cin, Cout = 2, 4, 16
    D, H, W = 4, 8, 8            # padded flat volume = 600 -> 3 tiles of 256

    ks = jax.random.split(key, 4)
    x = jax.random.normal(ks[0], (N, Cin, D, H, W), dtype=jnp.float32)
    w = 0.1 * jax.random.normal(ks[1], (Cout, Cin, 3, 3, 3), dtype=jnp.float32)
    gamma = 1.0 + 0.1 * jax.random.normal(ks[2], (Cout,), dtype=jnp.float32)
    beta = 0.1 * jax.random.normal(ks[3], (Cout,), dtype=jnp.float32)

    out = single_conv(x, w, gamma, beta, num_groups=8, activation=True,
                      s_tile_max=256)   # small tiles -> exercises halo/multi-tile path
    out = jax.block_until_ready(out)

    ref = single_conv_ref(x, w, gamma, beta, num_groups=8, activation=True)
    assert out.shape == (N, Cout, D, H, W), out.shape
    max_err = float(jnp.max(jnp.abs(out - ref)))
    assert jnp.allclose(out, ref, atol=1e-3, rtol=1e-3), \
        f"mismatch vs JAX reference (max abs err {max_err})"
    print("KERNEL_OK")
</pallas_src>

<mosaic_0001>
module attributes {stable_mosaic.version = 11 : i64} {
  func.func @singleconv_kernel(%arg0: i32, %arg1: i32, %arg2: i32, %arg3: memref<1x8x256xf32, #tpu.memory_space<vmem>>, %arg4: memref<1x8x256xf32, #tpu.memory_space<vmem>>, %arg5: memref<27x16x8xf32, #tpu.memory_space<vmem>>, %arg6: memref<1x256xf32, #tpu.memory_space<vmem>>, %arg7: memref<16x16xf32, #tpu.memory_space<vmem>>, %arg8: memref<16x1xf32, #tpu.memory_space<vmem>>, %arg9: memref<16x1xf32, #tpu.memory_space<vmem>>, %arg10: memref<1x16x256xf32, #tpu.memory_space<vmem>>, %arg11: memref<16x768xf32, #tpu.memory_space<vmem>>, %arg12: memref<16x1xf32, #tpu.memory_space<vmem>>, %arg13: memref<16x1xf32, #tpu.memory_space<vmem>>, %arg14: memref<16x1xf32, #tpu.memory_space<vmem>>, %arg15: memref<16x1xf32, #tpu.memory_space<vmem>>, %arg16: memref<8x512xf32, #tpu.memory_space<vmem>>) attributes {dimension_semantics = [#tpu.dimension_semantics<parallel>, #tpu.dimension_semantics<arbitrary>, #tpu.dimension_semantics<arbitrary>], iteration_bounds = array<i64: 2, 2, 3>, scalar_prefetch = 0 : i64, scratch_operands = 6 : i64, tpu.core_type = #tpu.core_type<tc>, window_params = [{transform_indices = @transform_0, window_bounds = array<i64: 1, 8, 256>}, {transform_indices = @transform_1, window_bounds = array<i64: 1, 8, 256>}, {pipeline_mode = #tpu.pipeline_mode<synchronous>, transform_indices = @transform_2, window_bounds = array<i64: 27, 16, 8>}, {transform_indices = @transform_3, window_bounds = array<i64: 1, 256>}, {pipeline_mode = #tpu.pipeline_mode<synchronous>, transform_indices = @transform_4, window_bounds = array<i64: 16, 16>}, {pipeline_mode = #tpu.pipeline_mode<synchronous>, transform_indices = @transform_5, window_bounds = array<i64: 16, 1>}, {pipeline_mode = #tpu.pipeline_mode<synchronous>, transform_indices = @transform_6, window_bounds = array<i64: 16, 1>}, {transform_indices = @transform_7, window_bounds = array<i64: 1, 16, 256>}]} {
    %c0_i32 = arith.constant 0 : i32
    %0 = arith.cmpi eq, %arg1, %c0_i32 : i32
    %1 = arith.extui %0 : i1 to i32
    %c0_i32_0 = arith.constant 0 : i32
    %2 = arith.cmpi ne, %1, %c0_i32_0 : i32
    scf.if %2 {
      %c0_i32_2 = arith.constant 0 : i32
      %6 = arith.cmpi eq, %arg2, %c0_i32_2 : i32
      %7 = arith.extui %6 : i1 to i32
      %c0_i32_3 = arith.constant 0 : i32
      %8 = arith.cmpi ne, %7, %c0_i32_3 : i32
      scf.if %8 {
        %cst_143 = arith.constant 0.000000e+00 : f32
        %166 = vector.broadcast %cst_143 : f32 to vector<16x1xf32>
        %c0_144 = arith.constant 0 : index
        %c0_145 = arith.constant 0 : index
        %167 = vector.load %arg12[%c0_144, %c0_145] : memref<16x1xf32, #tpu.memory_space<vmem>>, vector<16x1xf32>
        tpu.vector_store %arg12[%c0_144, %c0_145], %166 {strides = array<i32>} : memref<16x1xf32, #tpu.memory_space<vmem>>, vector<16x1xf32>,
        %cst_146 = arith.constant 0.000000e+00 : f32
        %168 = vector.broadcast %cst_146 : f32 to vector<16x1xf32>
        %c0_147 = arith.constant 0 : index
        %c0_148 = arith.constant 0 : index
        %169 = vector.load %arg13[%c0_147, %c0_148] : memref<16x1xf32, #tpu.memory_space<vmem>>, vector<16x1xf32>
        tpu.vector_store %arg13[%c0_147, %c0_148], %168 {strides = array<i32>} : memref<16x1xf32, #tpu.memory_space<vmem>>, vector<16x1xf32>,
      } else {
      }
      %c0 = arith.constant 0 : index
      %c0_4 = arith.constant 0 : index
      %c0_5 = arith.constant 0 : index
      %9 = vector.load %arg3[%c0, %c0_4, %c0_5] : memref<1x8x256xf32, #tpu.memory_space<vmem>>, vector<1x8x256xf32>
      %10 = vector.shape_cast %9 : vector<1x8x256xf32> to vector<8x256xf32>
      %c0_6 = arith.constant 0 : index
      %c0_7 = arith.constant 0 : index
      %11 = vector.load %arg16[%c0_6, %c0_7] : memref<8x512xf32, #tpu.memory_space<vmem>>, vector<8x256xf32>
      tpu.vector_store %arg16[%c0_6, %c0_7], %10 {strides = array<i32>} : memref<8x512xf32, #tpu.memory_space<vmem>>, vector<8x256xf32>,
      %c0_8 = arith.constant 0 : index
      %c0_9 = arith.constant 0 : index
      %c0_10 = arith.constant 0 : index
      %12 = vector.load %arg4[%c0_8, %c0_9, %c0_10] : memref<1x8x256xf32, #tpu.memory_space<vmem>>, vector<1x8x256xf32>
      %13 = vector.shape_cast %12 : vector<1x8x256xf32> to vector<8x256xf32>
      %c0_11 = arith.constant 0 : index
      %c256 = arith.constant 256 : index
      %14 = vector.load %arg16[%c0_11, %c256] : memref<8x512xf32, #tpu.memory_space<vmem>>, vector<8x256xf32>
      tpu.vector_store %arg16[%c0_11, %c256], %13 {strides = array<i32>} : memref<8x512xf32, #tpu.memory_space<vmem>>, vector<8x256xf32>,
      %c0_12 = arith.constant 0 : index
      %c0_13 = arith.constant 0 : index
      %c0_14 = arith.constant 0 : index
      %15 = vector.load %arg5[%c0_12, %c0_13, %c0_14] : memref<27x16x8xf32, #tpu.memory_space<vmem>>, vector<1x16x8xf32>
      %16 = vector.shape_cast %15 : vector<1x16x8xf32> to vector<16x8xf32>
      %c0_15 = arith.constant 0 : index
      %c0_16 = arith.constant 0 : index
      %17 = vector.load %arg16[%c0_15, %c0_16] : memref<8x512xf32, #tpu.memory_space<vmem>>, vector<8x256xf32>
      %cst = arith.constant dense<0.000000e+00> : vector<16x256xf32>
      %18 = tpu.matmul %16, %17, %cst {dimension_numbers = #tpu.dot_dimension_numbers<[1], [0], [0], [1], [0, 0, 1, 1], [], []>} : vector<16x8xf32>, vector<8x256xf32>, vector<16x256xf32> -> vector<16x256xf32>
      %c1 = arith.constant 1 : index
      %c0_17 = arith.constant 0 : index
      %c0_18 = arith.constant 0 : index
      %19 = vector.load %arg5[%c1, %c0_17, %c0_18] : memref<27x16x8xf32, #tpu.memory_space<vmem>>, vector<1x16x8xf32>
      %20 = vector.shape_cast %19 : vector<1x16x8xf32> to vector<16x8xf32>
      %c0_19 = arith.constant 0 : index
      %c1_20 = arith.constant 1 : index
      %21 = vector.load %arg16[%c0_19, %c1_20] : memref<8x512xf32, #tpu.memory_space<vmem>>, vector<8x256xf32>
      %cst_21 = arith.constant dense<0.000000e+00> : vector<16x256xf32>
      %22 = tpu.matmul %20, %21, %cst_21 {dimension_numbers = #tpu.dot_dimension_numbers<[1], [0], [0], [1], [0, 0, 1, 1], [], []>} : vector<16x8xf32>, vector<8x256xf32>, vector<16x256xf32> -> vector<16x256xf32>
      %23 = arith.addf %18, %22 : vector<16x256xf32>
      %c2 = arith.constant 2 : index
      %c0_22 = arith.constant 0 : index
      %c0_23 = arith.constant 0 : index
      %24 = vector.load %arg5[%c2, %c0_22, %c0_23] : memref<27x16x8xf32, #tpu.memory_space<vmem>>, vector<1x16x8xf32>
      %25 = vector.shape_cast %24 : vector<1x16x8xf32> to vector<16x8xf32>
      %c0_24 = arith.constant 0 : index
      %c2_25 = arith.constant 2 : index
      %26 = vector.load %arg16[%c0_24, %c2_25] : memref<8x512xf32, #tpu.memory_space<vmem>>, vector<8x256xf32>
      %cst_26 = arith.constant dense<0.000000e+00> : vector<16x256xf32>
      %27 = tpu.matmul %25, %26, %cst_26 {dimension_numbers = #tpu.dot_dimension_numbers<[1], [0], [0], [1], [0, 0, 1, 1], [], []>} : vector<16x8xf32>, vector<8x256xf32>, vector<16x256xf32> -> vector<16x256xf32>
      %28 = arith.addf %23, %27 : vector<16x256xf32>
      %c3 = arith.constant 3 : index
      %c0_27 = arith.constant 0 : index
      %c0_28 = arith.constant 0 : index
      %29 = vector.load %arg5[%c3, %c0_27, %c0_28] : memref<27x16x8xf32, #tpu.memory_space<vmem>>, vector<1x16x8xf32>
      %30 = vector.shape_cast %29 : vector<1x16x8xf32> to vector<16x8xf32>
      %c0_29 = arith.constant 0 : index
      %c10 = arith.constant 10 : index
      %31 = vector.load %arg16[%c0_29, %c10] : memref<8x512xf32, #tpu.memory_space<vmem>>, vector<8x256xf32>
      %cst_30 = arith.constant dense<0.000000e+00> : vector<16x256xf32>
      %32 = tpu.matmul %30, %31, %cst_30 {dimension_numbers = #tpu.dot_dimension_numbers<[1], [0], [0], [1], [0, 0, 1, 1], [], []>} : vector<16x8xf32>, vector<8x256xf32>, vector<16x256xf32> -> vector<16x256xf32>
      %33 = arith.addf %28, %32 : vector<16x256xf32>
      %c4 = arith.constant 4 : index
      %c0_31 = arith.constant 0 : index
      %c0_32 = arith.constant 0 : index
      %34 = vector.load %arg5[%c4, %c0_31, %c0_32] : memref<27x16x8xf32, #tpu.memory_space<vmem>>, vector<1x16x8xf32>
      %35 = vector.shape_cast %34 : vector<1x16x8xf32> to vector<16x8xf32>
      %c0_33 = arith.constant 0 : index
      %c11 = arith.constant 11 : index
      %36 = vector.load %arg16[%c0_33, %c11] : memref<8x512xf32, #tpu.memory_space<vmem>>, vector<8x256xf32>
      %cst_34 = arith.constant dense<0.000000e+00> : vector<16x256xf32>
      %37 = tpu.matmul %35, %36, %cst_34 {dimension_numbers = #tpu.dot_dimension_numbers<[1], [0], [0], [1], [0, 0, 1, 1], [], []>} : vector<16x8xf32>, vector<8x256xf32>, vector<16x256xf32> -> vector<16x256xf32>
      %38 = arith.addf %33, %37 : vector<16x256xf32>
      %c5 = arith.constant 5 : index
      %c0_35 = arith.constant 0 : index
      %c0_36 = arith.constant 0 : index
      %39 = vector.load %arg5[%c5, %c0_35, %c0_36] : memref<27x16x8xf32, #tpu.memory_space<vmem>>, vector<1x16x8xf32>
      %40 = vector.shape_cast %39 : vector<1x16x8xf32> to vector<16x8xf32>
      %c0_37 = arith.constant 0 : index
      %c12 = arith.constant 12 : index
      %41 = vector.load %arg16[%c0_37, %c12] : memref<8x512xf32, #tpu.memory_space<vmem>>, vector<8x256xf32>
      %cst_38 = arith.constant dense<0.000000e+00> : vector<16x256xf32>
      %42 = tpu.matmul %40, %41, %cst_38 {dimension_numbers = #tpu.dot_dimension_numbers<[1], [0], [0], [1], [0, 0, 1, 1], [], []>} : vector<16x8xf32>, vector<8x256xf32>, vector<16x256xf32> -> vector<16x256xf32>
      %43 = arith.addf %38, %42 : vector<16x256xf32>
      %c6 = arith.constant 6 : index
      %c0_39 = arith.constant 0 : index
      %c0_40 = arith.constant 0 : index
      %44 = vector.load %arg5[%c6, %c0_39, %c0_40] : memref<27x16x8xf32, #tpu.memory_space<vmem>>, vector<1x16x8xf32>
      %45 = vector.shape_cast %44 : vector<1x16x8xf32> to vector<16x8xf32>
      %c0_41 = arith.constant 0 : index
      %c20 = arith.constant 20 : index
      %46 = vector.load %arg16[%c0_41, %c20] : memref<8x512xf32, #tpu.memory_space<vmem>>, vector<8x256xf32>
      %cst_42 = arith.constant dense<0.000000e+00> : vector<16x256xf32>
      %47 = tpu.matmul %45, %46, %cst_42 {dimension_numbers = #tpu.dot_dimension_numbers<[1], [0], [0], [1], [0, 0, 1, 1], [], []>} : vector<16x8xf32>, vector<8x256xf32>, vector<16x256xf32> -> vector<16x256xf32>
      %48 = arith.addf %43, %47 : vector<16x256xf32>
      %c7 = arith.constant 7 : index
      %c0_43 = arith.constant 0 : index
      %c0_44 = arith.constant 0 : index
      %49 = vector.load %arg5[%c7, %c0_43, %c0_44] : memref<27x16x8xf32, #tpu.memory_space<vmem>>, vector<1x16x8xf32>
      %50 = vector.shape_cast %49 : vector<1x16x8xf32> to vector<16x8xf32>
      %c0_45 = arith.constant 0 : index
      %c21 = arith.constant 21 : index
      %51 = vector.load %arg16[%c0_45, %c21] : memref<8x512xf32, #tpu.memory_space<vmem>>, vector<8x256xf32>
      %cst_46 = arith.constant dense<0.000000e+00> : vector<16x256xf32>
      %52 = tpu.matmul %50, %51, %cst_46 {dimension_numbers = #tpu.dot_dimension_numbers<[1], [0], [0], [1], [0, 0, 1, 1], [], []>} : vector<16x8xf32>, vector<8x256xf32>, vector<16x256xf32> -> vector<16x256xf32>
      %53 = arith.addf %48, %52 : vector<16x256xf32>
      %c8 = arith.constant 8 : index
      %c0_47 = arith.constant 0 : index
      %c0_48 = arith.constant 0 : index
      %54 = vector.load %arg5[%c8, %c0_47, %c0_48] : memref<27x16x8xf32, #tpu.memory_space<vmem>>, vector<1x16x8xf32>
      %55 = vector.shape_cast %54 : vector<1x16x8xf32> to vector<16x8xf32>
      %c0_49 = arith.constant 0 : index
      %c22 = arith.constant 22 : index
      %56 = vector.load %arg16[%c0_49, %c22] : memref<8x512xf32, #tpu.memory_space<vmem>>, vector<8x256xf32>
      %cst_50 = arith.constant dense<0.000000e+00> : vector<16x256xf32>
      %57 = tpu.matmul %55, %56, %cst_50 {dimension_numbers = #tpu.dot_dimension_numbers<[1], [0], [0], [1], [0, 0, 1, 1], [], []>} : vector<16x8xf32>, vector<8x256xf32>, vector<16x256xf32> -> vector<16x256xf32>
      %58 = arith.addf %53, %57 : vector<16x256xf32>
      %c9 = arith.constant 9 : index
      %c0_51 = arith.constant 0 : index
      %c0_52 = arith.constant 0 : index
      %59 = vector.load %arg5[%c9, %c0_51, %c0_52] : memref<27x16x8xf32, #tpu.memory_space<vmem>>, vector<1x16x8xf32>
      %60 = vector.shape_cast %59 : vector<1x16x8xf32> to vector<16x8xf32>
      %c0_53 = arith.constant 0 : index
      %c100 = arith.constant 100 : index
      %61 = vector.load %arg16[%c0_53, %c100] : memref<8x512xf32, #tpu.memory_space<vmem>>, vector<8x256xf32>
      %cst_54 = arith.constant dense<0.000000e+00> : vector<16x256xf32>
      %62 = tpu.matmul %60, %61, %cst_54 {dimension_numbers = #tpu.dot_dimension_numbers<[1], [0], [0], [1], [0, 0, 1, 1], [], []>} : vector<16x8xf32>, vector<8x256xf32>, vector<16x256xf32> -> vector<16x256xf32>
      %63 = arith.addf %58, %62 : vector<16x256xf32>
      %c10_55 = arith.constant 10 : index
      %c0_56 = arith.constant 0 : index
      %c0_57 = arith.constant 0 : index
      %64 = vector.load %arg5[%c10_55, %c0_56, %c0_57] : memref<27x16x8xf32, #tpu.memory_space<vmem>>, vector<1x16x8xf32>
      %65 = vector.shape_cast %64 : vector<1x16x8xf32> to vector<16x8xf32>
      %c0_58 = arith.constant 0 : index
      %c101 = arith.constant 101 : index
      %66 = vector.load %arg16[%c0_58, %c101] : memref<8x512xf32, #tpu.memory_space<vmem>>, vector<8x256xf32>
      %cst_59 = arith.constant dense<0.000000e+00> : vector<16x256xf32>
      %67 = tpu.matmul %65, %66, %cst_59 {dimension_numbers = #tpu.dot_dimension_numbers<[1], [0], [0], [1], [0, 0, 1, 1], [], []>} : vector<16x8xf32>, vector<8x256xf32>, vector<16x256xf32> -> vector<16x256xf32>
      %68 = arith.addf %63, %67 : vector<16x256xf32>
      %c11_60 = arith.constant 11 : index
      %c0_61 = arith.constant 0 : index
      %c0_62 = arith.constant 0 : index
      %69 = vector.load %arg5[%c11_60, %c0_61, %c0_62] : memref<27x16x8xf32, #tpu.memory_space<vmem>>, vector<1x16x8xf32>
      %70 = vector.shape_cast %69 : vector<1x16x8xf32> to vector<16x8xf32>
      %c0_63 = arith.constant 0 : index
      %c102 = arith.constant 102 : index
      %71 = vector.load %arg16[%c0_63, %c102] : memref<8x512xf32, #tpu.memory_space<vmem>>, vector<8x256xf32>
      %cst_64 = arith.constant dense<0.000000e+00> : vector<16x256xf32>
      %72 = tpu.matmul %70, %71, %cst_64 {dimension_numbers = #tpu.dot_dimension_numbers<[1], [0], [0], [1], [0, 0, 1, 1], [], []>} : vector<16x8xf32>, vector<8x256xf32>, vector<16x256xf32> -> vector<16x256xf32>
      %73 = arith.addf %68, %72 : vector<16x256xf32>
      %c12_65 = arith.constant 12 : index
      %c0_66 = arith.constant 0 : index
      %c0_67 = arith.constant 0 : index
      %74 = vector.load %arg5[%c12_65, %c0_66, %c0_67] : memref<27x16x8xf32, #tpu.memory_space<vmem>>, vector<1x16x8xf32>
      %75 = vector.shape_cast %74 : vector<1x16x8xf32> to vector<16x8xf32>
      %c0_68 = arith.constant 0 : index
      %c110 = arith.constant 110 : index
      %76 = vector.load %arg16[%c0_68, %c110] : memref<8x512xf32, #tpu.memory_space<vmem>>, vector<8x256xf32>
      %cst_69 = arith.constant dense<0.000000e+00> : vector<16x256xf32>
      %77 = tpu.matmul %75, %76, %cst_69 {dimension_numbers = #tpu.dot_dimension_numbers<[1], [0], [0], [1], [0, 0, 1, 1], [], []>} : vector<16x8xf32>, vector<8x256xf32>, vector<16x256xf32> -> vector<16x256xf32>
      %78 = arith.addf %73, %77 : vector<16x256xf32>
      %c13 = arith.constant 13 : index
      %c0_70 = arith.constant 0 : index
      %c0_71 = arith.constant 0 : index
      %79 = vector.load %arg5[%c13, %c0_70, %c0_71] : memref<27x16x8xf32, #tpu.memory_space<vmem>>, vector<1x16x8xf32>
      %80 = vector.shape_cast %79 : vector<1x16x8xf32> to vector<16x8xf32>
      %c0_72 = arith.constant 0 : index
      %c111 = arith.constant 111 : index
      %81 = vector.load %arg16[%c0_72, %c111] : memref<8x512xf32, #tpu.memory_space<vmem>>, vector<8x256xf32>
      %cst_73 = arith.constant dense<0.000000e+00> : vector<16x256xf32>
      %82 = tpu.matmul %80, %81, %cst_73 {dimension_numbers = #tpu.dot_dimension_numbers<[1], [0], [0], [1], [0, 0, 1, 1], [], []>} : vector<16x8xf32>, vector<8x256xf32>, vector<16x256xf32> -> vector<16x256xf32>
      %83 = arith.addf %78, %82 : vector<16x256xf32>
      %c14 = arith.constant 14 : index
      %c0_74 = arith.constant 0 : index
      %c0_75 = arith.constant 0 : index
      %84 = vector.load %arg5[%c14, %c0_74, %c0_75] : memref<27x16x8xf32, #tpu.memory_space<vmem>>, vector<1x16x8xf32>
      %85 = vector.shape_cast %84 : vector<1x16x8xf32> to vector<16x8xf32>
      %c0_76 = arith.constant 0 : index
      %c112 = arith.constant 112 : index
      %86 = vector.load %arg16[%c0_76, %c112] : memref<8x512xf32, #tpu.memory_space<vmem>>, vector<8x256xf32>
      %cst_77 = arith.constant dense<0.000000e+00> : vector<16x256xf32>
      %87 = tpu.matmul %85, %86, %cst_77 {dimension_numbers = #tpu.dot_dimension_numbers<[1], [0], [0], [1], [0, 0, 1, 1], [], []>} : vector<16x8xf32>, vector<8x256xf32>, vector<16x256xf32> -> vector<16x256xf32>
      %88 = arith.addf %83, %87 : vector<16x256xf32>
      %c15 = arith.constant 15 : index
      %c0_78 = arith.constant 0 : index
      %c0_79 = arith.constant 0 : index
      %89 = vector.load %arg5[%c15, %c0_78, %c0_79] : memref<27x16x8xf32, #tpu.memory_space<vmem>>, vector<1x16x8xf32>
      %90 = vector.shape_cast %89 : vector<1x16x8xf32> to vector<16x8xf32>
      %c0_80 = arith.constant 0 : index
      %c120 = arith.constant 120 : index
      %91 = vector.load %arg16[%c0_80, %c120] : memref<8x512xf32, #tpu.memory_space<vmem>>, vector<8x256xf32>
      %cst_81 = arith.constant dense<0.000000e+00> : vector<16x256xf32>
      %92 = tpu.matmul %90, %91, %cst_81 {dimension_numbers = #tpu.dot_dimension_numbers<[1], [0], [0], [1], [0, 0, 1, 1], [], []>} : vector<16x8xf32>, vector<8x256xf32>, vector<16x256xf32> -> vector<16x256xf32>
      %93 = arith.addf %88, %92 : vector<16x256xf32>
      %c16 = arith.constant 16 : index
      %c0_82 = arith.constant 0 : index
      %c0_83 = arith.constant 0 : index
      %94 = vector.load %arg5[%c16, %c0_82, %c0_83] : memref<27x16x8xf32, #tpu.memory_space<vmem>>, vector<1x16x8xf32>
      %95 = vector.shape_cast %94 : vector<1x16x8xf32> to vector<16x8xf32>
      %c0_84 = arith.constant 0 : index
      %c121 = arith.constant 121 : index
      %96 = vector.load %arg16[%c0_84, %c121] : memref<8x512xf32, #tpu.memory_space<vmem>>, vector<8x256xf32>
      %cst_85 = arith.constant dense<0.000000e+00> : vector<16x256xf32>
      %97 = tpu.matmul %95, %96, %cst_85 {dimension_numbers = #tpu.dot_dimension_numbers<[1], [0], [0], [1], [0, 0, 1, 1], [], []>} : vector<16x8xf32>, vector<8x256xf32>, vector<16x256xf32> -> vector<16x256xf32>
      %98 = arith.addf %93, %97 : vector<16x256xf32>
      %c17 = arith.constant 17 : index
      %c0_86 = arith.constant 0 : index
      %c0_87 = arith.constant 0 : index
      %99 = vector.load %arg5[%c17, %c0_86, %c0_87] : memref<27x16x8xf32, #tpu.memory_space<vmem>>, vector<1x16x8xf32>
      %100 = vector.shape_cast %99 : vector<1x16x8xf32> to vector<16x8xf32>
      %c0_88 = arith.constant 0 : index
      %c122 = arith.constant 122 : index
      %101 = vector.load %arg16[%c0_88, %c122] : memref<8x512xf32, #tpu.memory_space<vmem>>, vector<8x256xf32>
      %cst_89 = arith.constant dense<0.000000e+00> : vector<16x256xf32>
      %102 = tpu.matmul %100, %101, %cst_89 {dimension_numbers = #tpu.dot_dimension_numbers<[1], [0], [0], [1], [0, 0, 1, 1], [], []>} : vector<16x8xf32>, vector<8x256xf32>, vector<16x256xf32> -> vector<16x256xf32>
      %103 = arith.addf %98, %102 : vector<16x256xf32>
      %c18 = arith.constant 18 : index
      %c0_90 = arith.constant 0 : index
      %c0_91 = arith.constant 0 : index
      %104 = vector.load %arg5[%c18, %c0_90, %c0_91] : memref<27x16x8xf32, #tpu.memory_space<vmem>>, vector<1x16x8xf32>
      %105 = vector.shape_cast %104 : vector<1x16x8xf32> to vector<16x8xf32>
      %c0_92 = arith.constant 0 : index
      %c200 = arith.constant 200 : index
      %106 = vector.load %arg16[%c0_92, %c200] : memref<8x512xf32, #tpu.memory_space<vmem>>, vector<8x256xf32>
      %cst_93 = arith.constant dense<0.000000e+00> : vector<16x256xf32>
      %107 = tpu.matmul %105, %106, %cst_93 {dimension_numbers = #tpu.dot_dimension_numbers<[1], [0], [0], [1], [0, 0, 1, 1], [], []>} : vector<16x8xf32>, vector<8x256xf32>, vector<16x256xf32> -> vector<16x256xf32>
      %108 = arith.addf %103, %107 : vector<16x256xf32>
      %c19 = arith.constant 19 : index
      %c0_94 = arith.constant 0 : index
      %c0_95 = arith.constant 0 : index
      %109 = vector.load %arg5[%c19, %c0_94, %c0_95] : memref<27x16x8xf32, #tpu.memory_space<vmem>>, vector<1x16x8xf32>
      %110 = vector.shape_cast %109 : vector<1x16x8xf32> to vector<16x8xf32>
      %c0_96 = arith.constant 0 : index
      %c201 = arith.constant 201 : index
      %111 = vector.load %arg16[%c0_96, %c201] : memref<8x512xf32, #tpu.memory_space<vmem>>, vector<8x256xf32>
      %cst_97 = arith.constant dense<0.000000e+00> : vector<16x256xf32>
      %112 = tpu.matmul %110, %111, %cst_97 {dimension_numbers = #tpu.dot_dimension_numbers<[1], [0], [0], [1], [0, 0, 1, 1], [], []>} : vector<16x8xf32>, vector<8x256xf32>, vector<16x256xf32> -> vector<16x256xf32>
      %113 = arith.addf %108, %112 : vector<16x256xf32>
      %c20_98 = arith.constant 20 : index
      %c0_99 = arith.constant 0 : index
      %c0_100 = arith.constant 0 : index
      %114 = vector.load %arg5[%c20_98, %c0_99, %c0_100] : memref<27x16x8xf32, #tpu.memory_space<vmem>>, vector<1x16x8xf32>
      %115 = vector.shape_cast %114 : vector<1x16x8xf32> to vector<16x8xf32>
      %c0_101 = arith.constant 0 : index
      %c202 = arith.constant 202 : index
      %116 = vector.load %arg16[%c0_101, %c202] : memref<8x512xf32, #tpu.memory_space<vmem>>, vector<8x256xf32>
      %cst_102 = arith.constant dense<0.000000e+00> : vector<16x256xf32>
      %117 = tpu.matmul %115, %116, %cst_102 {dimension_numbers = #tpu.dot_dimension_numbers<[1], [0], [0], [1], [0, 0, 1, 1], [], []>} : vector<16x8xf32>, vector<8x256xf32>, vector<16x256xf32> -> vector<16x256xf32>
      %118 = arith.addf %113, %117 : vector<16x256xf32>
      %c21_103 = arith.constant 21 : index
      %c0_104 = arith.constant 0 : index
      %c0_105 = arith.constant 0 : index
      %119 = vector.load %arg5[%c21_103, %c0_104, %c0_105] : memref<27x16x8xf32, #tpu.memory_space<vmem>>, vector<1x16x8xf32>
      %120 = vector.shape_cast %119 : vector<1x16x8xf32> to vector<16x8xf32>
      %c0_106 = arith.constant 0 : index
      %c210 = arith.constant 210 : index
      %121 = vector.load %arg16[%c0_106, %c210] : memref<8x512xf32, #tpu.memory_space<vmem>>, vector<8x256xf32>
      %cst_107 = arith.constant dense<0.000000e+00> : vector<16x256xf32>
      %122 = tpu.matmul %120, %121, %cst_107 {dimension_numbers = #tpu.dot_dimension_numbers<[1], [0], [0], [1], [0, 0, 1, 1], [], []>} : vector<16x8xf32>, vector<8x256xf32>, vector<16x256xf32> -> vector<16x256xf32>
      %123 = arith.addf %118, %122 : vector<16x256xf32>
      %c22_108 = arith.constant 22 : index
      %c0_109 = arith.constant 0 : index
      %c0_110 = arith.constant 0 : index
      %124 = vector.load %arg5[%c22_108, %c0_109, %c0_110] : memref<27x16x8xf32, #tpu.memory_space<vmem>>, vector<1x16x8xf32>
      %125 = vector.shape_cast %124 : vector<1x16x8xf32> to vector<16x8xf32>
      %c0_111 = arith.constant 0 : index
      %c211 = arith.constant 211 : index
      %126 = vector.load %arg16[%c0_111, %c211] : memref<8x512xf32, #tpu.memory_space<vmem>>, vector<8x256xf32>
      %cst_112 = arith.constant dense<0.000000e+00> : vector<16x256xf32>
      %127 = tpu.matmul %125, %126, %cst_112 {dimension_numbers = #tpu.dot_dimension_numbers<[1], [0], [0], [1], [0, 0, 1, 1], [], []>} : vector<16x8xf32>, vector<8x256xf32>, vector<16x256xf32> -> vector<16x256xf32>
      %128 = arith.addf %123, %127 : vector<16x256xf32>
      %c23 = arith.constant 23 : index
      %c0_113 = arith.constant 0 : index
      %c0_114 = arith.constant 0 : index
      %129 = vector.load %arg5[%c23, %c0_113, %c0_114] : memref<27x16x8xf32, #tpu.memory_space<vmem>>, vector<1x16x8xf32>
      %130 = vector.shape_cast %129 : vector<1x16x8xf32> to vector<16x8xf32>
      %c0_115 = arith.constant 0 : index
      %c212 = arith.constant 212 : index
      %131 = vector.load %arg16[%c0_115, %c212] : memref<8x512xf32, #tpu.memory_space<vmem>>, vector<8x256xf32>
      %cst_116 = arith.constant dense<0.000000e+00> : vector<16x256xf32>
      %132 = tpu.matmul %130, %131, %cst_116 {dimension_numbers = #tpu.dot_dimension_numbers<[1], [0], [0], [1], [0, 0, 1, 1], [], []>} : vector<16x8xf32>, vector<8x256xf32>, vector<16x256xf32> -> vector<16x256xf32>
      %133 = arith.addf %128, %132 : vector<16x256xf32>
      %c24 = arith.constant 24 : index
      %c0_117 = arith.constant 0 : index
      %c0_118 = arith.constant 0 : index
      %134 = vector.load %arg5[%c24, %c0_117, %c0_118] : memref<27x16x8xf32, #tpu.memory_space<vmem>>, vector<1x16x8xf32>
      %135 = vector.shape_cast %134 : vector<1x16x8xf32> to vector<16x8xf32>
      %c0_119 = arith.constant 0 : index
      %c220 = arith.constant 220 : index
      %136 = vector.load %arg16[%c0_119, %c220] : memref<8x512xf32, #tpu.memory_space<vmem>>, vector<8x256xf32>
      %cst_120 = arith.constant dense<0.000000e+00> : vector<16x256xf32>
      %137 = tpu.matmul %135, %136, %cst_120 {dimension_numbers = #tpu.dot_dimension_numbers<[1], [0], [0], [1], [0, 0, 1, 1], [], []>} : vector<16x8xf32>, vector<8x256xf32>, vector<16x256xf32> -> vector<16x256xf32>
      %138 = arith.addf %133, %137 : vector<16x256xf32>
      %c25 = arith.constant 25 : index
      %c0_121 = arith.constant 0 : index
      %c0_122 = arith.constant 0 : index
      %139 = vector.load %arg5[%c25, %c0_121, %c0_122] : memref<27x16x8xf32, #tpu.memory_space<vmem>>, vector<1x16x8xf32>
      %140 = vector.shape_cast %139 : vector<1x16x8xf32> to vector<16x8xf32>
      %c0_123 = arith.constant 0 : index
      %c221 = arith.constant 221 : index
      %141 = vector.load %arg16[%c0_123, %c221] : memref<8x512xf32, #tpu.memory_space<vmem>>, vector<8x256xf32>
      %cst_124 = arith.constant dense<0.000000e+00> : vector<16x256xf32>
      %142 = tpu.matmul %140, %141, %cst_124 {dimension_numbers = #tpu.dot_dimension_numbers<[1], [0], [0], [1], [0, 0, 1, 1], [], []>} : vector<16x8xf32>, vector<8x256xf32>, vector<16x256xf32> -> vector<16x256xf32>
      %143 = arith.addf %138, %142 : vector<16x256xf32>
      %c26 = arith.constant 26 : index
      %c0_125 = arith.constant 0 : index
      %c0_126 = arith.constant 0 : index
      %144 = vector.load %arg5[%c26, %c0_125, %c0_126] : memref<27x16x8xf32, #tpu.memory_space<vmem>>, vector<1x16x8xf32>
      %145 = vector.shape_cast %144 : vector<1x16x8xf32> to vector<16x8xf32>
      %c0_127 = arith.constant 0 : index
      %c222 = arith.constant 222 : index
      %146 = vector.load %arg16[%c0_127, %c222] : memref<8x512xf32, #tpu.memory_space<vmem>>, vector<8x256xf32>
      %cst_128 = arith.constant dense<0.000000e+00> : vector<16x256xf32>
      %147 = tpu.matmul %145, %146, %cst_128 {dimension_numbers = #tpu.dot_dimension_numbers<[1], [0], [0], [1], [0, 0, 1, 1], [], []>} : vector<16x8xf32>, vector<8x256xf32>, vector<16x256xf32> -> vector<16x256xf32>
      %148 = arith.addf %143, %147 : vector<16x256xf32>
      %c256_i32 = arith.constant 256 : i32
      %149 = arith.muli %arg2, %c256_i32 : i32
      %150 = tpu.assume_multiple %149, 128 : i32
      %c0_129 = arith.constant 0 : index
      %151 = arith.index_cast %150 : i32 to index
      %152 = vector.load %arg11[%c0_129, %151] : memref<16x768xf32, #tpu.memory_space<vmem>>, vector<16x256xf32>
      tpu.vector_store %arg11[%c0_129, %151], %148 {strides = array<i32>} : memref<16x768xf32, #tpu.memory_space<vmem>>, vector<16x256xf32>,
      %c0_130 = arith.constant 0 : index
      %c0_131 = arith.constant 0 : index
      %153 = vector.load %arg6[%c0_130, %c0_131] : memref<1x256xf32, #tpu.memory_space<vmem>>, vector<1x256xf32>
      %154 = vector.broadcast %153 : vector<1x256xf32> to vector<16x256xf32>
      %155 = arith.mulf %148, %154 : vector<16x256xf32>
      %cst_132 = arith.constant 1.000000e+00 : f32
      %156 = vector.broadcast %cst_132 : f32 to vector<256x1xf32>
      %c0_133 = arith.constant 0 : index
      %c0_134 = arith.constant 0 : index
      %157 = vector.load %arg12[%c0_133, %c0_134] : memref<16x1xf32, #tpu.memory_space<vmem>>, vector<16x1xf32>
      %cst_135 = arith.constant dense<0.000000e+00> : vector<16x1xf32>
      %158 = tpu.matmul %155, %156, %cst_135 {dimension_numbers = #tpu.dot_dimension_numbers<[1], [0], [0], [1], [0, 0, 1, 1], [], []>} : vector<16x256xf32>, vector<256x1xf32>, vector<16x1xf32> -> vector<16x1xf32>
      %159 = arith.addf %157, %158 : vector<16x1xf32>
      %c0_136 = arith.constant 0 : index
      %c0_137 = arith.constant 0 : index
      %160 = vector.load %arg12[%c0_136, %c0_137] : memref<16x1xf32, #tpu.memory_space<vmem>>, vector<16x1xf32>
      tpu.vector_store %arg12[%c0_136, %c0_137], %159 {strides = array<i32>} : memref<16x1xf32, #tpu.memory_space<vmem>>, vector<16x1xf32>,
      %c0_138 = arith.constant 0 : index
      %c0_139 = arith.constant 0 : index
      %161 = vector.load %arg13[%c0_138, %c0_139] : memref<16x1xf32, #tpu.memory_space<vmem>>, vector<16x1xf32>
      %162 = arith.mulf %155, %148 : vector<16x256xf32>
      %cst_140 = arith.constant dense<0.000000e+00> : vector<16x1xf32>
      %163 = tpu.matmul %162, %156, %cst_140 {dimension_numbers = #tpu.dot_dimension_numbers<[1], [0], [0], [1], [0, 0, 1, 1], [], []>} : vector<16x256xf32>, vector<256x1xf32>, vector<16x1xf32> -> vector<16x1xf32>
      %164 = arith.addf %161, %163 : vector<16x1xf32>
      %c0_141 = arith.constant 0 : index
      %c0_142 = arith.constant 0 : index
      %165 = vector.load %arg13[%c0_141, %c0_142] : memref<16x1xf32, #tpu.memory_space<vmem>>, vector<16x1xf32>
      tpu.vector_store %arg13[%c0_141, %c0_142], %164 {strides = array<i32>} : memref<16x1xf32, #tpu.memory_space<vmem>>, vector<16x1xf32>,
    } else {
    }
    %c1_i32 = arith.constant 1 : i32
    %3 = arith.cmpi eq, %arg1, %c1_i32 : i32
    %4 = arith.extui %3 : i1 to i32
    %c0_i32_1 = arith.constant 0 : i32
    %5 = arith.cmpi ne, %4, %c0_i32_1 : i32
    scf.if %5 {
      %c0_i32_2 = arith.constant 0 : i32
      %6 = arith.cmpi eq, %arg2, %c0_i32_2 : i32
      %7 = arith.extui %6 : i1 to i32
      %c0_i32_3 = arith.constant 0 : i32
      %8 = arith.cmpi ne, %7, %c0_i32_3 : i32
      scf.if %8 {
        %c0_13 = arith.constant 0 : index
        %c0_14 = arith.constant 0 : index
        %30 = vector.load %arg7[%c0_13, %c0_14] : memref<16x16xf32, #tpu.memory_space<vmem>>, vector<16x16xf32>
        %c0_15 = arith.constant 0 : index
        %c0_16 = arith.constant 0 : index
        %31 = vector.load %arg12[%c0_15, %c0_16] : memref<16x1xf32, #tpu.memory_space<vmem>>, vector<16x1xf32>
        %cst_17 = arith.constant dense<0.000000e+00> : vector<16x1xf32>
        %32 = tpu.matmul %30, %31, %cst_17 {dimension_numbers = #tpu.dot_dimension_numbers<[1], [0], [0], [1], [0, 0, 1, 1], [], []>} : vector<16x16xf32>, vector<16x1xf32>, vector<16x1xf32> -> vector<16x1xf32>
        %c0_18 = arith.constant 0 : index
        %c0_19 = arith.constant 0 : index
        %33 = vector.load %arg7[%c0_18, %c0_19] : memref<16x16xf32, #tpu.memory_space<vmem>>, vector<16x16xf32>
        %c0_20 = arith.constant 0 : index
        %c0_21 = arith.constant 0 : index
        %34 = vector.load %arg13[%c0_20, %c0_21] : memref<16x1xf32, #tpu.memory_space<vmem>>, vector<16x1xf32>
        %cst_22 = arith.constant dense<0.000000e+00> : vector<16x1xf32>
        %35 = tpu.matmul %33, %34, %cst_22 {dimension_numbers = #tpu.dot_dimension_numbers<[1], [0], [0], [1], [0, 0, 1, 1], [], []>} : vector<16x16xf32>, vector<16x1xf32>, vector<16x1xf32> -> vector<16x1xf32>
        %cst_23 = arith.constant 0.001953125 : f32
        %36 = vector.broadcast %cst_23 : f32 to vector<16x1xf32>
        %37 = arith.mulf %32, %36 : vector<16x1xf32>
        %cst_24 = arith.constant 0.001953125 : f32
        %38 = vector.broadcast %cst_24 : f32 to vector<16x1xf32>
        %39 = arith.mulf %35, %38 : vector<16x1xf32>
        %40 = arith.mulf %37, %37 : vector<16x1xf32>
        %41 = arith.subf %39, %40 : vector<16x1xf32>
        %cst_25 = arith.constant 9.99999974E-6 : f32
        %42 = vector.broadcast %cst_25 : f32 to vector<16x1xf32>
        %43 = arith.addf %41, %42 : vector<16x1xf32>
        %44 = math.rsqrt %43 : vector<16x1xf32>
        %c0_26 = arith.constant 0 : index
        %c0_27 = arith.constant 0 : index
        %45 = vector.load %arg8[%c0_26, %c0_27] : memref<16x1xf32, #tpu.memory_space<vmem>>, vector<16x1xf32>
        %46 = arith.mulf %44, %45 : vector<16x1xf32>
        %c0_28 = arith.constant 0 : index
        %c0_29 = arith.constant 0 : index
        %47 = vector.load %arg14[%c0_28, %c0_29] : memref<16x1xf32, #tpu.memory_space<vmem>>, vector<16x1xf32>
        tpu.vector_store %arg14[%c0_28, %c0_29], %46 {strides = array<i32>} : memref<16x1xf32, #tpu.memory_space<vmem>>, vector<16x1xf32>,
        %c0_30 = arith.constant 0 : index
        %c0_31 = arith.constant 0 : index
        %48 = vector.load %arg9[%c0_30, %c0_31] : memref<16x1xf32, #tpu.memory_space<vmem>>, vector<16x1xf32>
        %49 = arith.mulf %37, %46 : vector<16x1xf32>
        %50 = arith.subf %48, %49 : vector<16x1xf32>
        %c0_32 = arith.constant 0 : index
        %c0_33 = arith.constant 0 : index
        %51 = vector.load %arg15[%c0_32, %c0_33] : memref<16x1xf32, #tpu.memory_space<vmem>>, vector<16x1xf32>
        tpu.vector_store %arg15[%c0_32, %c0_33], %50 {strides = array<i32>} : memref<16x1xf32, #tpu.memory_space<vmem>>, vector<16x1xf32>,
      } else {
      }
      %c256_i32 = arith.constant 256 : i32
      %9 = arith.muli %arg2, %c256_i32 : i32
      %10 = tpu.assume_multiple %9, 128 : i32
      %c0 = arith.constant 0 : index
      %11 = arith.index_cast %10 : i32 to index
      %12 = vector.load %arg11[%c0, %11] : memref<16x768xf32, #tpu.memory_space<vmem>>, vector<16x256xf32>
      %c0_4 = arith.constant 0 : index
      %c0_5 = arith.constant 0 : index
      %13 = vector.load %arg14[%c0_4, %c0_5] : memref<16x1xf32, #tpu.memory_space<vmem>>, vector<16x1xf32>
      %14 = vector.broadcast %13 : vector<16x1xf32> to vector<16x256xf32>
      %15 = arith.mulf %12, %14 : vector<16x256xf32>
      %c0_6 = arith.constant 0 : index
      %c0_7 = arith.constant 0 : index
      %16 = vector.load %arg15[%c0_6, %c0_7] : memref<16x1xf32, #tpu.memory_space<vmem>>, vector<16x1xf32>
      %17 = vector.broadcast %16 : vector<16x1xf32> to vector<16x256xf32>
      %18 = arith.addf %15, %17 : vector<16x256xf32>
      %cst = arith.constant 0.000000e+00 : f32
      %19 = vector.broadcast %cst : f32 to vector<16x256xf32>
      %20 = arith.cmpf ogt, %18, %19 : vector<16x256xf32>
      %cst_8 = arith.constant 0.000000e+00 : f32
      %21 = vector.broadcast %cst_8 : f32 to vector<16x256xf32>
      %22 = arith.minimumf %18, %21 : vector<16x256xf32>
      %23 = math.exp %22 : vector<16x256xf32>
      %cst_9 = arith.constant 1.000000e+00 : f32
      %24 = vector.broadcast %cst_9 : f32 to vector<16x256xf32>
      %25 = arith.subf %23, %24 : vector<16x256xf32>
      %26 = arith.select %20, %18, %25 : vector<16x256xi1>, vector<16x256xf32>
      %c0_10 = arith.constant 0 : index
      %c0_11 = arith.constant 0 : index
      %c0_12 = arith.constant 0 : index
      %27 = vector.load %arg10[%c0_10, %c0_11, %c0_12] : memref<1x16x256xf32, #tpu.memory_space<vmem>>, vector<1x16x256xf32>
      %28 = vector.shape_cast %27 : vector<1x16x256xf32> to vector<16x256xf32>
      %29 = vector.shape_cast %26 : vector<16x256xf32> to vector<1x16x256xf32>
      tpu.vector_store %arg10[%c0_10, %c0_11, %c0_12], %29 {strides = array<i32>} : memref<1x16x256xf32, #tpu.memory_space<vmem>>, vector<1x16x256xf32>,
    } else {
    }
    return
  }
  func.func @transform_0(%arg0: i32, %arg1: i32, %arg2: i32) -> (i32, i32, i32) {
    %c1_i32 = arith.constant 1 : i32
    %0 = arith.subi %c1_i32, %arg1 : i32
    %1 = arith.muli %arg2, %0 : i32
    %c0_i32 = arith.constant 0 : i32
    %c0_i32_0 = arith.constant 0 : i32
    return %arg0, %c0_i32, %1 : i32, i32, i32
  }
  func.func @transform_1(%arg0: i32, %arg1: i32, %arg2: i32) -> (i32, i32, i32) {
    %c1_i32 = arith.constant 1 : i32
    %0 = arith.addi %arg2, %c1_i32 : i32
    %c1_i32_0 = arith.constant 1 : i32
    %1 = arith.subi %c1_i32_0, %arg1 : i32
    %2 = arith.muli %0, %1 : i32
    %c0_i32 = arith.constant 0 : i32
    %c0_i32_1 = arith.constant 0 : i32
    return %arg0, %c0_i32, %2 : i32, i32, i32
  }
  func.func @transform_2(%arg0: i32, %arg1: i32, %arg2: i32) -> (i32, i32, i32) {
    %c0_i32 = arith.constant 0 : i32
    %c0_i32_0 = arith.constant 0 : i32
    %c0_i32_1 = arith.constant 0 : i32
    %c0_i32_2 = arith.constant 0 : i32
    return %c0_i32, %c0_i32_0, %c0_i32_1 : i32, i32, i32
  }
  func.func @transform_3(%arg0: i32, %arg1: i32, %arg2: i32) -> (i32, i32) {
    %c1_i32 = arith.constant 1 : i32
    %0 = arith.subi %c1_i32, %arg1 : i32
    %1 = arith.muli %arg2, %0 : i32
    %c0_i32 = arith.constant 0 : i32
    %c0_i32_0 = arith.constant 0 : i32
    return %c0_i32, %1 : i32, i32
  }
  func.func @transform_4(%arg0: i32, %arg1: i32, %arg2: i32) -> (i32, i32) {
    %c0_i32 = arith.constant 0 : i32
    %c0_i32_0 = arith.constant 0 : i32
    %c0_i32_1 = arith.constant 0 : i32
    return %c0_i32, %c0_i32_0 : i32, i32
  }
  func.func @transform_5(%arg0: i32, %arg1: i32, %arg2: i32) -> (i32, i32) {
    %c0_i32 = arith.constant 0 : i32
    %c0_i32_0 = arith.constant 0 : i32
    %c0_i32_1 = arith.constant 0 : i32
    return %c0_i32, %c0_i32_0 : i32, i32
  }
  func.func @transform_6(%arg0: i32, %arg1: i32, %arg2: i32) -> (i32, i32) {
    %c0_i32 = arith.constant 0 : i32
    %c0_i32_0 = arith.constant 0 : i32
    %c0_i32_1 = arith.constant 0 : i32
    return %c0_i32, %c0_i32_0 : i32, i32
  }
  func.func @transform_7(%arg0: i32, %arg1: i32, %arg2: i32) -> (i32, i32, i32) {
    %0 = arith.muli %arg2, %arg1 : i32
    %c0_i32 = arith.constant 0 : i32
    %c0_i32_0 = arith.constant 0 : i32
    return %arg0, %c0_i32, %0 : i32, i32, i32
  }
}

</mosaic_0001>

<llo_original>
// kernel: tpu_custom_call.1
$region0: #{tpu_custom_call.1}
  #allocation0 [shape = 'u32[]', space=smem, size = 0x4, offset = 0x4, fixed_abs, tag = 'smem constant byte address 0x4 - core index']
  #allocation1 [shape = 'u32[144,128]{1,0:T(1,128)}', space=vmem, size = 0x12000, scoped, tag = 'internal scratch']
  #allocation2 [shape = 'f32[16,768]{1,0:T(8,128)}', space=vmem, size = 0xc000, scoped, tag = 'scratch operand']
  #allocation3 [shape = 'f32[16,1]{1,0:T(8,128)}', space=vmem, size = 0x2000, scoped, tag = 'scratch operand']
  #allocation4 [shape = 'f32[16,1]{1,0:T(8,128)}', space=vmem, size = 0x2000, scoped, tag = 'scratch operand']
  #allocation5 [shape = 'f32[16,1]{1,0:T(8,128)}', space=vmem, size = 0x2000, scoped, tag = 'scratch operand']
  #allocation6 [shape = 'f32[16,1]{1,0:T(8,128)}', space=vmem, size = 0x2000, scoped, tag = 'scratch operand']
  #allocation7 [shape = 'f32[8,512]{1,0:T(8,128)}', space=vmem, size = 0x4000, scoped, tag = 'scratch operand']
  %s0 = inlined_call_operand.hbm [shape: f32[2,8,1024], index: 0, kind: input, shape index: {}]
  %s1 = inlined_call_operand.hbm [shape: f32[2,8,1024], index: 1, kind: input, shape index: {}]
  %s2 = inlined_call_operand.hbm [shape: f32[27,16,8], index: 2, kind: input, shape index: {}]
  %s3 = inlined_call_operand.hbm [shape: f32[1,768], index: 3, kind: input, shape index: {}]
  %s4 = inlined_call_operand.hbm [shape: f32[16,16], index: 4, kind: input, shape index: {}]
  %s5 = inlined_call_operand.hbm [shape: f32[16,1], index: 5, kind: input, shape index: {}]
  %s6 = inlined_call_operand.hbm [shape: f32[16,1], index: 6, kind: input, shape index: {}]
  %s7 = inlined_call_operand.hbm [shape: f32[2,16,768], index: 7, kind: output, shape index: {}]
  %s8 = sld [smem:[#allocation0]]
  $region105: #{tpu_custom_call.1} parent=0
    _
  %s10 = ssub.s32 1, %s8
  %s11 = scalar_select 0, %s10, %s8
  $region1: #{tpu_custom_call.1} parent=0
    #allocation8 [shape = 'u8[16384]{0}', space=vmem, size = 0x4000, scoped, tag = 'input window, operand 0']
    #allocation9 [shape = 's32[2]{0}', space=sflag, size = 0x8, scoped, tag = 'scoped memory for tpu_custom_call.1']
    #allocation10 [shape = 's32[2]{0}', space=sflag, size = 0x8, scoped, tag = 'scoped memory for tpu_custom_call.1']
    #allocation11 [shape = 'u8[16384]{0}', space=vmem, size = 0x4000, scoped, tag = 'input window, operand 1']
    #allocation12 [shape = 's32[2]{0}', space=sflag, size = 0x8, scoped, tag = 'scoped memory for tpu_custom_call.1']
    #allocation13 [shape = 'u8[221184]{0}', space=vmem, size = 0x36000, scoped, tag = 'input window, operand 2, single buffered']
    #allocation14 [shape = 'u8[2048]{0}', space=vmem, size = 0x800, scoped, tag = 'input window, operand 3']
    #allocation15 [shape = 's32[2]{0}', space=sflag, size = 0x8, scoped, tag = 'scoped memory for tpu_custom_call.1']
    #allocation16 [shape = 'u8[8192]{0}', space=vmem, size = 0x2000, scoped, tag = 'input window, operand 4, single buffered']
    #allocation17 [shape = 'u8[8192]{0}', space=vmem, size = 0x2000, scoped, tag = 'input window, operand 5, single buffered']
    #allocation18 [shape = 's32[1]{0}', space=sflag, size = 0x4, scoped, tag = 'scoped memory for tpu_custom_call.1']
    #allocation19 [shape = 'u8[8192]{0}', space=vmem, size = 0x2000, scoped, tag = 'input window, operand 6, single buffered']
    #allocation20 [shape = 'u8[32768]{0}', space=vmem, size = 0x8000, scoped, tag = 'output window, operand 0']
    %12 = vsyncpa [#allocation9], 0
    %s13 = scalar_lea.sflag [#allocation9], 1
    %14 = vsyncpa %s13, 0
    %15 = vsyncpa [#allocation12], 0
    %s16 = scalar_lea.sflag [#allocation12], 1
    %17 = vsyncpa %s16, 0
    %18 = vsyncpa [#allocation15], 0
    %s19 = scalar_lea.sflag [#allocation15], 1
    %20 = vsyncpa %s19, 0
    %21 = vsyncpa [#allocation18], 0
    %22 = vsyncpa [#allocation10], 0
    %s23 = scalar_lea.sflag [#allocation10], 1
    %24 = vsyncpa %s23, 0
    loop: start=0, step=1, limit=14
    $region2: #{tpu_custom_call.1} parent=1 // loop_pre_header
      _
    $region3: #{tpu_custom_call.1} parent=1 // loop_header
      %s26 = sphi 0, %s30
      %p27 = scmp.ge.s32.totalorder %s26, 14
      %s33 = sphi 0, %s52
      %s34 = sphi 0, %s48
      %s35 = sphi 0, %s44
      %s36 = sphi 0, %s33
      %s37 = sphi 0, %s34
      %s38 = sphi 0, %s35
      %s39 = sphi 0, %s36
      %s40 = sphi 0, %s37
      %s41 = sphi 0, %s38
      %s61 = sphi 0, %s63
      %s64 = sphi 0, %s61
      %s65 = sphi 0, %s64
      %s81 = sphi 0, %s65
      %s95 = sphi 0, %s97
      %s98 = sphi 0, %s95
      %s99 = sphi 0, %s98
      %s115 = sphi 0, %s99
      %s119 = sphi 0, %s119
      %s121 = sphi 0, %s119
      %s122 = sphi 0, %s121
      %s136 = sphi 0, %s122
      %s146 = sphi 0, %s148
      %s149 = sphi 0, %s146
      %s150 = sphi 0, %s149
      %s166 = sphi 0, %s150
      %s170 = sphi 0, %s170
      %s172 = sphi 0, %s170
      %s173 = sphi 0, %s172
      %s187 = sphi 0, %s173
      %s191 = sphi 0, %s191
      %s193 = sphi 0, %s191
      %s194 = sphi 0, %s193
      %s208 = sphi 0, %s194
      %s212 = sphi 0, %s212
      %s214 = sphi 0, %s212
      %s215 = sphi 0, %s214
      %s229 = sphi 0, %s215
      %s239 = sphi 0, %s241
      %s242 = sphi 0, %s239
      %s243 = sphi 0, %s242
      %s259 = sphi 0, %s243
    $region4: #{tpu_custom_call.1} parent=1 // loop_header_branch
      %29 = sbr.rel (%p27) target = $region8
    $region5: #{tpu_custom_call.1} parent=1 // loop_body
      %s31 = ssub.s32 %s26, 1
      %s32 = ssub.s32 %s26, 2
      %s42 = sadd.s32 1, %s35
      %p43 = scmp.ge.s32.totalorder %s42, 3
      %s44 = scalar_select %p43, 0, %s42
      %s45 = sadd.s32 1, %s34
      %s46 = scalar_select %p43, %s45, %s34
      %p47 = scmp.ge.s32.totalorder %s46, 2
      %s48 = scalar_select %p47, 0, %s46
      %s49 = sadd.s32 1, %s33
      %s50 = scalar_select %p47, %s49, %s33
      %p51 = scmp.ge.s32.totalorder %s50, 2
      %s52 = scalar_select %p51, 0, %s50
      %s53 = ssub.s32 1, %s34
      %s54 = smul.u32 %s35, %s53
      %s55 = ssub.s32 1, %s48
      %s56 = smul.u32 %s44, %s55
      %s57 = ssub.s32 %s33, %s52
      %s58 = ssub.s32 %s54, %s56
      %s59 = sor.u32 %s57, %s58
      %p60 = scmp.eq.s32.totalorder %s59, 0
      %s62 = sadd.s32 %s61, 1
      %s63 = scalar_select %p60, %s61, %s62
      %p66 = pneg %p60
      %p67 = scmp.eq.s32.totalorder %s26, 11
      %p68 = por %p66, %p67
      %p69 = scmp.ne.s32.totalorder %s61, %s64
      %p70 = scmp.eq.s32.totalorder %s26, 0
      %p71 = por %p69, %p70
      %p72 = scmp.ne.s32.totalorder %s61, %s64
      %p73 = scmp.eq.s32.totalorder %s31, 11
      %p74 = por %p72, %p73
      %p75 = scmp.ne.s32.totalorder %s64, %s65
      %p76 = scmp.eq.s32.totalorder %s31, 0
      %p77 = por %p75, %p76
      %p78 = scmp.ne.s32.totalorder %s64, %s65
      %p79 = scmp.eq.s32.totalorder %s32, 11
      %p80 = por %p78, %p79
      %p82 = scmp.ne.s32.totalorder %s65, %s81
      %p83 = scmp.eq.s32.totalorder %s32, 0
      %p84 = por %p82, %p83
      %s85 = sadd.s32 %s35, 1
      %s86 = ssub.s32 1, %s34
      %s87 = smul.u32 %s85, %s86
      %s88 = sadd.s32 %s44, 1
      %s89 = ssub.s32 1, %s48
      %s90 = smul.u32 %s88, %s89
      %s91 = ssub.s32 %s33, %s52
      %s92 = ssub.s32 %s87, %s90
      %s93 = sor.u32 %s91, %s92
      %p94 = scmp.eq.s32.totalorder %s93, 0
      %s96 = sadd.s32 %s95, 1
      %s97 = scalar_select %p94, %s95, %s96
      %p100 = pneg %p94
      %p101 = scmp.eq.s32.totalorder %s26, 11
      %p102 = por %p100, %p101
      %p103 = scmp.ne.s32.totalorder %s95, %s98
      %p104 = scmp.eq.s32.totalorder %s26, 0
      %p105 = por %p103, %p104
      %p106 = scmp.ne.s32.totalorder %s95, %s98
      %p107 = scmp.eq.s32.totalorder %s31, 11
      %p108 = por %p106, %p107
      %p109 = scmp.ne.s32.totalorder %s98, %s99
      %p110 = scmp.eq.s32.totalorder %s31, 0
      %p111 = por %p109, %p110
      %p112 = scmp.ne.s32.totalorder %s98, %s99
      %p113 = scmp.eq.s32.totalorder %s32, 11
      %p114 = por %p112, %p113
      %p116 = scmp.ne.s32.totalorder %s99, %s115
      %p117 = scmp.eq.s32.totalorder %s32, 0
      %p118 = por %p116, %p117
      %s120 = sadd.s32 %s119, 1
      %p123 = scmp.eq.s32.totalorder %s26, 11
      %p124 = scmp.ne.s32.totalorder %s119, %s121
      %p125 = scmp.eq.s32.totalorder %s26, 0
      %p126 = por %p124, %p125
      %p127 = scmp.ne.s32.totalorder %s119, %s121
      %p128 = scmp.eq.s32.totalorder %s31, 11
      %p129 = por %p127, %p128
      %p130 = scmp.ne.s32.totalorder %s121, %s122
      %p131 = scmp.eq.s32.totalorder %s31, 0
      %p132 = por %p130, %p131
      %p133 = scmp.ne.s32.totalorder %s121, %s122
      %p134 = scmp.eq.s32.totalorder %s32, 11
      %p135 = por %p133, %p134
      %p137 = scmp.ne.s32.totalorder %s122, %s136
      %p138 = scmp.eq.s32.totalorder %s32, 0
      %p139 = por %p137, %p138
      %s140 = ssub.s32 1, %s34
      %s141 = smul.u32 %s35, %s140
      %s142 = ssub.s32 1, %s48
      %s143 = smul.u32 %s44, %s142
      %s144 = ssub.s32 %s141, %s143
      %p145 = scmp.eq.s32.totalorder %s144, 0
      %s147 = sadd.s32 %s146, 1
      %s148 = scalar_select %p145, %s146, %s147
      %p151 = pneg %p145
      %p152 = scmp.eq.s32.totalorder %s26, 11
      %p153 = por %p151, %p152
      %p154 = scmp.ne.s32.totalorder %s146, %s149
      %p155 = scmp.eq.s32.totalorder %s26, 0
      %p156 = por %p154, %p155
      %p157 = scmp.ne.s32.totalorder %s146, %s149
      %p158 = scmp.eq.s32.totalorder %s31, 11
      %p159 = por %p157, %p158
      %p160 = scmp.ne.s32.totalorder %s149, %s150
      %p161 = scmp.eq.s32.totalorder %s31, 0
      %p162 = por %p160, %p161
      %p163 = scmp.ne.s32.totalorder %s149, %s150
      %p164 = scmp.eq.s32.totalorder %s32, 11
      %p165 = por %p163, %p164
      %p167 = scmp.ne.s32.totalorder %s150, %s166
      %p168 = scmp.eq.s32.totalorder %s32, 0
      %p169 = por %p167, %p168
      %s171 = sadd.s32 %s170, 1
      %p174 = scmp.eq.s32.totalorder %s26, 11
      %p175 = scmp.ne.s32.totalorder %s170, %s172
      %p176 = scmp.eq.s32.totalorder %s26, 0
      %p177 = por %p175, %p176
      %p178 = scmp.ne.s32.totalorder %s170, %s172
      %p179 = scmp.eq.s32.totalorder %s31, 11
      %p180 = por %p178, %p179
      %p181 = scmp.ne.s32.totalorder %s172, %s173
      %p182 = scmp.eq.s32.totalorder %s31, 0
      %p183 = por %p181, %p182
      %p184 = scmp.ne.s32.totalorder %s172, %s173
      %p185 = scmp.eq.s32.totalorder %s32, 11
      %p186 = por %p184, %p185
      %p188 = scmp.ne.s32.totalorder %s173, %s187
      %p189 = scmp.eq.s32.totalorder %s32, 0
      %p190 = por %p188, %p189
      %s192 = sadd.s32 %s191, 1
      %p195 = scmp.eq.s32.totalorder %s26, 11
      %p196 = scmp.ne.s32.totalorder %s191, %s193
      %p197 = scmp.eq.s32.totalorder %s26, 0
      %p198 = por %p196, %p197
      %p199 = scmp.ne.s32.totalorder %s191, %s193
      %p200 = scmp.eq.s32.totalorder %s31, 11
      %p201 = por %p199, %p200
      %p202 = scmp.ne.s32.totalorder %s193, %s194
      %p203 = scmp.eq.s32.totalorder %s31, 0
      %p204 = por %p202, %p203
      %p205 = scmp.ne.s32.totalorder %s193, %s194
      %p206 = scmp.eq.s32.totalorder %s32, 11
      %p207 = por %p205, %p206
      %p209 = scmp.ne.s32.totalorder %s194, %s208
      %p210 = scmp.eq.s32.totalorder %s32, 0
      %p211 = por %p209, %p210
      %s213 = sadd.s32 %s212, 1
      %p216 = scmp.eq.s32.totalorder %s26, 11
      %p217 = scmp.ne.s32.totalorder %s212, %s214
      %p218 = scmp.eq.s32.totalorder %s26, 0
      %p219 = por %p217, %p218
      %p220 = scmp.ne.s32.totalorder %s212, %s214
      %p221 = scmp.eq.s32.totalorder %s31, 11
      %p222 = por %p220, %p221
      %p223 = scmp.ne.s32.totalorder %s214, %s215
      %p224 = scmp.eq.s32.totalorder %s31, 0
      %p225 = por %p223, %p224
      %p226 = scmp.ne.s32.totalorder %s214, %s215
      %p227 = scmp.eq.s32.totalorder %s32, 11
      %p228 = por %p226, %p227
      %p230 = scmp.ne.s32.totalorder %s215, %s229
      %p231 = scmp.eq.s32.totalorder %s32, 0
      %p232 = por %p230, %p231
      %s233 = smul.u32 %s35, %s34
      %s234 = smul.u32 %s44, %s48
      %s235 = ssub.s32 %s33, %s52
      %s236 = ssub.s32 %s233, %s234
      %s237 = sor.u32 %s235, %s236
      %p238 = scmp.eq.s32.totalorder %s237, 0
      %s240 = sadd.s32 %s239, 1
      %s241 = scalar_select %p238, %s239, %s240
      %p244 = pneg %p238
      %p245 = scmp.eq.s32.totalorder %s26, 11
      %p246 = por %p244, %p245
      %p247 = scmp.ne.s32.totalorder %s239, %s242
      %p248 = scmp.eq.s32.totalorder %s26, 0
      %p249 = por %p247, %p248
      %p250 = scmp.ne.s32.totalorder %s239, %s242
      %p251 = scmp.eq.s32.totalorder %s31, 11
      %p252 = por %p250, %p251
      %p253 = scmp.ne.s32.totalorder %s242, %s243
      %p254 = scmp.eq.s32.totalorder %s31, 0
      %p255 = por %p253, %p254
      %p256 = scmp.ne.s32.totalorder %s242, %s243
      %p257 = scmp.eq.s32.totalorder %s32, 11
      %p258 = por %p256, %p257
      %p260 = scmp.ne.s32.totalorder %s243, %s259
      %p261 = scmp.eq.s32.totalorder %s32, 0
      %p262 = por %p260, %p261
      %p263 = scmp.le.s32.totalorder 1, %s26
      %p264 = scmp.lt.s32.totalorder %s26, 13
      %p265 = pnand %p263, %p264
      %p266 = pneg %p265
      // Predicated region
      $region9: #{tpu_custom_call.1} parent=5 // pred_check
        _
      $region10: #{tpu_custom_call.1} parent=5 // pred_check_branch
        %268 = sbr.rel (%p265) target = $region12
      $region11: #{tpu_custom_call.1} parent=5 // pred_region
        %s269 = ssub.s32 %s26, 1
        // Predicated region
        $region13: #{tpu_custom_call.1} parent=11 // pred_check
          %p270 = pneg %p132
        $region14: #{tpu_custom_call.1} parent=11 // pred_check_branch
          %272 = sbr.rel (%p270) target = $region16
        $region15: #{tpu_custom_call.1} parent=11 // pred_region
          %s274 = ssub.s32 6912, 6912
          %275 = vsyncadd [#allocation12], %s274
          %s276 = sshll.u32 [#allocation13], 4
          %s277 = int_to_ptr.vmem [resolvable:$true] %s276
          %282 = dma.hbm_to_vmem [thread:$0]  %s2, 6912, %s277, [#allocation12], 128, 128, 8
        $region16: #{tpu_custom_call.1} parent=11 // pred_fallthru
          _
        // Predicated region
        $region17: #{tpu_custom_call.1} parent=11 // pred_check
          %p283 = pneg %p183
        $region18: #{tpu_custom_call.1} parent=11 // pred_check_branch
          %285 = sbr.rel (%p283) target = $region20
        $region19: #{tpu_custom_call.1} parent=11 // pred_region
          %s287 = ssub.s32 256, 256
          %288 = vsyncadd [#allocation15], %s287
          %s289 = sshll.u32 [#allocation16], 4
          %s290 = int_to_ptr.vmem [resolvable:$true] %s289
          %295 = dma.hbm_to_vmem [thread:$0]  %s4, 256, %s290, [#allocation15], 128, 128, 8
        $region20: #{tpu_custom_call.1} parent=11 // pred_fallthru
          _
        // Predicated region
        $region21: #{tpu_custom_call.1} parent=11 // pred_check
          %p296 = pneg %p204
        $region22: #{tpu_custom_call.1} parent=11 // pred_check_branch
          %298 = sbr.rel (%p296) target = $region24
        $region23: #{tpu_custom_call.1} parent=11 // pred_region
          %s300 = ssub.s32 256, 256
          %301 = vsyncadd [#allocation18], %s300
          %s302 = sshll.u32 [#allocation17], 4
          %s303 = int_to_ptr.vmem [resolvable:$true] %s302
          %308 = dma.hbm_to_vmem [thread:$0]  %s5, 256, %s303, [#allocation18], 128, 128, 8
        $region24: #{tpu_custom_call.1} parent=11 // pred_fallthru
          _
        // Predicated region
        $region25: #{tpu_custom_call.1} parent=11 // pred_check
          %p309 = pneg %p225
        $region26: #{tpu_custom_call.1} parent=11 // pred_check_branch
          %311 = sbr.rel (%p309) target = $region28
        $region27: #{tpu_custom_call.1} parent=11 // pred_region
          %s313 = ssub.s32 256, 256
          %314 = vsyncadd [#allocation18], %s313
          %s315 = sshll.u32 [#allocation19], 4
          %s316 = int_to_ptr.vmem [resolvable:$true] %s315
          %321 = dma.hbm_to_vmem [thread:$0]  %s6, 256, %s316, [#allocation18], 128, 128, 8
        $region28: #{tpu_custom_call.1} parent=11 // pred_fallthru
          _
      $region12: #{tpu_custom_call.1} parent=5 // pred_fallthru
        _
      %p322 = scmp.lt.s32.totalorder %s26, 12
      // Predicated region
      $region29: #{tpu_custom_call.1} parent=5 // pred_check
        %p323 = pneg %p322
      $region30: #{tpu_custom_call.1} parent=5 // pred_check_branch
        %325 = sbr.rel (%p323) target = $region32
      $region31: #{tpu_custom_call.1} parent=5 // pred_region
        // Predicated region
        $region33: #{tpu_custom_call.1} parent=31 // pred_check
          %p326 = pneg %p71
        $region34: #{tpu_custom_call.1} parent=31 // pred_check_branch
          %328 = sbr.rel (%p326) target = $region36
        $region35: #{tpu_custom_call.1} parent=31 // pred_region
          %s329 = sand.u32 %s61, 1
          %s330 = scalar_lea.sflag [#allocation9], %s329
          %s331 = sand.u32 %s61, 1
          %s332 = smul.addr %s331, 16
          %s333 = scalar_lea.vmem [#allocation8], %s332
          %s334 = ssub.s32 1, %s34
          %s335 = smul.u32 %s35, %s334
          %s336 = smul.u32 2, %s335
          %s338 = ssub.s32 256, 256
          %339 = vsyncadd %s330, %s338
          %s340 = smul.addr %s33, 8
          %s341 = sadd.s32 %s336, %s340
          %s342 = smul.addr %s341, 128
          %s343 = scalar_lea.hbm %s0, %s342
          %s345 = sshll.u32 %s333, 4
          %s346 = int_to_ptr.vmem [resolvable:$true] %s345
          %348 = dma.hbm_to_vmem [thread:$0]  %s343, 256, %s346, %s330
        $region36: #{tpu_custom_call.1} parent=31 // pred_fallthru
          _
        // Predicated region
        $region37: #{tpu_custom_call.1} parent=31 // pred_check
          %p349 = pneg %p105
        $region38: #{tpu_custom_call.1} parent=31 // pred_check_branch
          %351 = sbr.rel (%p349) target = $region40
        $region39: #{tpu_custom_call.1} parent=31 // pred_region
          %s352 = sand.u32 %s26, 1
          %s353 = scalar_lea.sflag [#allocation12], %s352
          %s354 = sand.u32 %s95, 1
          %s355 = smul.addr %s354, 16
          %s356 = scalar_lea.vmem [#allocation11], %s355
          %s357 = sadd.s32 %s35, 1
          %s358 = ssub.s32 1, %s34
          %s359 = smul.u32 %s357, %s358
          %s360 = smul.u32 2, %s359
          %s362 = ssub.s32 256, 256
          %363 = vsyncadd %s353, %s362
          %s364 = smul.addr %s33, 8
          %s365 = sadd.s32 %s360, %s364
          %s366 = smul.addr %s365, 128
          %s367 = scalar_lea.hbm %s1, %s366
          %s369 = sshll.u32 %s356, 4
          %s370 = int_to_ptr.vmem [resolvable:$true] %s369
          %372 = dma.hbm_to_vmem [thread:$0]  %s367, 256, %s370, %s353
        $region40: #{tpu_custom_call.1} parent=31 // pred_fallthru
          _
        // Predicated region
        $region41: #{tpu_custom_call.1} parent=31 // pred_check
          %p373 = pneg %p156
        $region42: #{tpu_custom_call.1} parent=31 // pred_check_branch
          %375 = sbr.rel (%p373) target = $region44
        $region43: #{tpu_custom_call.1} parent=31 // pred_region
          %s376 = sand.u32 %s26, 1
          %s377 = scalar_lea.sflag [#allocation15], %s376
          %s378 = sand.u32 %s146, 1
          %s379 = smul.addr %s378, 2
          %s380 = scalar_lea.vmem [#allocation14], %s379
          %s381 = ssub.s32 1, %s34
          %s382 = smul.u32 %s35, %s381
          %s383 = smul.u32 2, %s382
          %s385 = ssub.s32 32, 32
          %386 = vsyncadd %s377, %s385
          %s387 = smul.addr %s383, 16
          %s388 = scalar_lea.hbm %s3, %s387
          %s390 = sshll.u32 %s380, 4
          %s391 = int_to_ptr.vmem [resolvable:$true] %s390
          %393 = dma.hbm_to_vmem [thread:$0]  %s388, 32, %s391, %s377
        $region44: #{tpu_custom_call.1} parent=31 // pred_fallthru
          _
      $region32: #{tpu_custom_call.1} parent=5 // pred_fallthru
        _
      %p394 = scmp.le.s32.totalorder 1, %s26
      %p395 = scmp.lt.s32.totalorder %s26, 13
      %p396 = pnand %p394, %p395
      %p397 = pneg %p396
      // Predicated region
      $region45: #{tpu_custom_call.1} parent=5 // pred_check
        _
      $region46: #{tpu_custom_call.1} parent=5 // pred_check_branch
        %399 = sbr.rel (%p396) target = $region48
      $region47: #{tpu_custom_call.1} parent=5 // pred_region
        %s400 = ssub.s32 %s26, 1
        %s401 = sand.u32 %s64, 1
        %s402 = scalar_lea.sflag [#allocation9], %s401
        %s403 = sand.u32 %s64, 1
        %s404 = smul.addr %s403, 16
        %s405 = scalar_lea.vmem [#allocation8], %s404
        // Predicated region
        $region49: #{tpu_custom_call.1} parent=47 // pred_check
          %p406 = pneg %p77
        $region50: #{tpu_custom_call.1} parent=47 // pred_check_branch
          %408 = sbr.rel (%p406) target = $region52
        $region51: #{tpu_custom_call.1} parent=47 // pred_region
          %409 = dma.done %s402, 256
        $region52: #{tpu_custom_call.1} parent=47 // pred_fallthru
          _
        %s410 = sand.u32 %s31, 1
        %s411 = scalar_lea.sflag [#allocation12], %s410
        %s412 = sand.u32 %s98, 1
        %s413 = smul.addr %s412, 16
        %s414 = scalar_lea.vmem [#allocation11], %s413
        // Predicated region
        $region53: #{tpu_custom_call.1} parent=47 // pred_check
          %p415 = pneg %p111
        $region54: #{tpu_custom_call.1} parent=47 // pred_check_branch
          %417 = sbr.rel (%p415) target = $region56
        $region55: #{tpu_custom_call.1} parent=47 // pred_region
          %418 = dma.done %s411, 256
        $region56: #{tpu_custom_call.1} parent=47 // pred_fallthru
          _
        // Predicated region
        $region57: #{tpu_custom_call.1} parent=47 // pred_check
          %p419 = pneg %p132
        $region58: #{tpu_custom_call.1} parent=47 // pred_check_branch
          %421 = sbr.rel (%p419) target = $region60
        $region59: #{tpu_custom_call.1} parent=47 // pred_region
          %422 = dma.done [#allocation12], 6912
        $region60: #{tpu_custom_call.1} parent=47 // pred_fallthru
          _
        %s423 = sand.u32 %s31, 1
        %s424 = scalar_lea.sflag [#allocation15], %s423
        %s425 = sand.u32 %s149, 1
        %s426 = smul.addr %s425, 2
        %s427 = scalar_lea.vmem [#allocation14], %s426
        // Predicated region
        $region61: #{tpu_custom_call.1} parent=47 // pred_check
          %p428 = pneg %p162
        $region62: #{tpu_custom_call.1} parent=47 // pred_check_branch
          %430 = sbr.rel (%p428) target = $region64
        $region63: #{tpu_custom_call.1} parent=47 // pred_region
          %431 = dma.done %s424, 32
        $region64: #{tpu_custom_call.1} parent=47 // pred_fallthru
          _
        // Predicated region
        $region65: #{tpu_custom_call.1} parent=47 // pred_check
          %p432 = pneg %p183
        $region66: #{tpu_custom_call.1} parent=47 // pred_check_branch
          %434 = sbr.rel (%p432) target = $region68
        $region67: #{tpu_custom_call.1} parent=47 // pred_region
          %435 = dma.done [#allocation15], 256
        $region68: #{tpu_custom_call.1} parent=47 // pred_fallthru
          _
        // Predicated region
        $region69: #{tpu_custom_call.1} parent=47 // pred_check
          %p436 = pneg %p204
        $region70: #{tpu_custom_call.1} parent=47 // pred_check_branch
          %438 = sbr.rel (%p436) target = $region72
        $region71: #{tpu_custom_call.1} parent=47 // pred_region
          %439 = dma.done [#allocation18], 256
        $region72: #{tpu_custom_call.1} parent=47 // pred_fallthru
          _
        // Predicated region
        $region73: #{tpu_custom_call.1} parent=47 // pred_check
          %p440 = pneg %p225
        $region74: #{tpu_custom_call.1} parent=47 // pred_check_branch
          %442 = sbr.rel (%p440) target = $region76
        $region75: #{tpu_custom_call.1} parent=47 // pred_region
          %443 = dma.done [#allocation18], 256
        $region76: #{tpu_custom_call.1} parent=47 // pred_fallthru
          _
        %s444 = sand.u32 %s64, 1
        %s445 = scalar_lea.sflag [#allocation9], %s444
        %s446 = sand.u32 %s64, 1
        %s447 = smul.addr %s446, 16
        %s448 = scalar_lea.vmem [#allocation8], %s447
        %p449 = pneg %p77
        %p450 = pneg %p74
        %s451 = sand.u32 %s31, 1
        %s452 = scalar_lea.sflag [#allocation12], %s451
        %s453 = sand.u32 %s98, 1
        %s454 = smul.addr %s453, 16
        %s455 = scalar_lea.vmem [#allocation11], %s454
        %p456 = pneg %p111
        %p457 = pneg %p108
        %p458 = pneg %p132
        %p459 = pneg %p129
        %s460 = sand.u32 %s31, 1
        %s461 = scalar_lea.sflag [#allocation15], %s460
        %s462 = sand.u32 %s149, 1
        %s463 = smul.addr %s462, 2
        %s464 = scalar_lea.vmem [#allocation14], %s463
        %p465 = pneg %p162
        %p466 = pneg %p159
        %p467 = pneg %p183
        %p468 = pneg %p180
        %p469 = pneg %p204
        %p470 = pneg %p201
        %p471 = pneg %p225
        %p472 = pneg %p222
        %p473 = pneg %p255
        %p474 = pneg %p252
        %s475 = sand.u32 %s242, 1
        %s476 = scalar_lea.sflag [#allocation10], %s475
        %s477 = sand.u32 %s242, 1
        %s478 = smul.addr %s477, 32
        %s479 = scalar_lea.vmem [#allocation20], %s478
        %s480 = ssub.s32 1, %s37
        %s481 = smul.u32 %s38, %s480
        %s482 = smul.u32 2, %s481
        %s483 = sadd.s32 %s38, 1
        %s484 = ssub.s32 1, %s37
        %s485 = smul.u32 %s483, %s484
        %s486 = smul.u32 2, %s485
        %s487 = ssub.s32 1, %s37
        %s488 = smul.u32 %s38, %s487
        %s489 = smul.u32 2, %s488
        %s490 = smul.u32 %s38, %s37
        %s491 = smul.u32 2, %s490
        %p492 = scmp.eq.s32.totalorder %s37, 0
        // Predicated region
        $region77: #{tpu_custom_call.1} parent=47 // pred_check
          %p493 = pneg %p492
        $region78: #{tpu_custom_call.1} parent=47 // pred_check_branch
          %495 = sbr.rel (%p493) target = $region80
        $region79: #{tpu_custom_call.1} parent=47 // pred_region
          %p496 = scmp.eq.s32.totalorder %s38, 0
          // Predicated region
          $region81: #{tpu_custom_call.1} parent=79 // pred_check
            %p497 = pneg %p496
          $region82: #{tpu_custom_call.1} parent=79 // pred_check_branch
            %499 = sbr.rel (%p497) target = $region84
          $region83: #{tpu_custom_call.1} parent=79 // pred_region
            %vm500 = vcmask 7168
            %501 = vst.msk [vmem:[#allocation3] sm:$0xff] %vm500, 0.0
            %502 = vst.msk [vmem:[#allocation3 + $0x8] sm:$0xff] %vm500, 0.0
            %503 = vst.msk [vmem:[#allocation4] sm:$0xff] %vm500, 0.0
            %504 = vst.msk [vmem:[#allocation4 + $0x8] sm:$0xff] %vm500, 0.0
          $region84: #{tpu_custom_call.1} parent=79 // pred_fallthru
            _
          %v505 = vld [vmem:[%s405] sm:$0xff]
          %v506 = vld [vmem:[%s405 + $0x8] sm:$0xff]
          %507 = vst [vmem:[#allocation7] sm:$0xff] %v505
          %508 = vst [vmem:[#allocation7 + $0x8] sm:$0xff] %v506
          %v509 = vld [vmem:[%s414] sm:$0xff]
          %v510 = vld [vmem:[%s414 + $0x8] sm:$0xff]
          %511 = vst [vmem:[#allocation7 + $0x10] sm:$0xff] %v509
          %512 = vst [vmem:[#allocation7 + $0x18] sm:$0xff] %v510
          %v513 = vld [vmem:[#allocation13] sm:$0xff]
          %v514 = vld [vmem:[#allocation13 + $0x8] sm:$0xff]
          %v515 = vld [vmem:[#allocation7] sm:$0xff]
          %v516 = vld [vmem:[#allocation7 + $0x8] sm:$0xff]
          %s517 = scalar_lea.vmem [#allocation13], 16
          %v518 = vld [vmem:[%s517] sm:$0xff]
          %v519 = vld [vmem:[%s517 + $0x8] sm:$0xff]
          %v520 = vld [vmem:[#allocation7 + $0x10] sm:$0xff]
          %524 = vrot.lane.b32.xlu0 %v515, 127
          %v525 = vpop.permute.xlu0 %524
          %526 = vrot.lane.b32.xlu0 %v516, 127
          %v527 = vpop.permute.xlu0 %526
          %528 = vrot.lane.b32.xlu0 %v520, 127
          %v529 = vpop.permute.xlu0 %528
          %vm530 = vcmask 1039360
          %v531 = vsel %vm530, %v525, %v527
          %v532 = vsel %vm530, %v527, %v529
          %vm535 = vcmask 64512
          %v537 = vsel %vm535, %v518, 0
          %v540 = vsel %vm535, %v519, 0
          %542 = vmatprep.subr.mxu0 %v532
          %543 = vmatpush1.msra.mxu0 %v531
          %544 = vmatprep.subr.mxu0 0.0
          %545 = vmatpush1.msra.mxu0 0.0
          %546 = vmatprep.subr.mxu0 0.0
          %547 = vmatpush1.msra.mxu0 0.0
          %548 = vmatprep.subr.mxu0 0.0
          %549 = vmatpush1.msra.mxu0 0.0
          %550 = vmatprep.subr.mxu0 0.0
          %551 = vmatpush1.msra.mxu0 0.0
          %552 = vmatprep.subr.mxu0 0.0
          %553 = vmatpush1.msra.mxu0 0.0
          %554 = vmatprep.subr.mxu0 0.0
          %555 = vmatpush1.msra.mxu0 0.0
          %556 = vmatprep.subr.mxu0 0.0
          %557 = vmatpush1.msra.mxu0 0.0
          %558 = vmatprep.subr.mxu0 0.0
          %559 = vmatpush1.msra.mxu0 0.0
          %560 = vmatprep.subr.mxu0 0.0
          %561 = vmatpush1.msra.mxu0 0.0
          %562 = vmatprep.subr.mxu0 0.0
          %563 = vmatpush1.msra.mxu0 0.0
          %564 = vmatprep.subr.mxu0 0.0
          %565 = vmatpush1.msra.mxu0 0.0
          %566 = vmatprep.subr.mxu0 0.0
          %567 = vmatpush1.msra.mxu0 0.0
          %568 = vmatprep.subr.mxu0 0.0
          %569 = vmatpush1.msra.mxu0 0.0
          %570 = vmatprep.subr.mxu0 0.0
          %571 = vmatpush1.msra.mxu0 0.0
          %572 = vmatprep.subr.mxu0 0.0
          %573 = vmatpush1.msra.mxu0 0.0
          %574 = vmatprep.subr.mxu0 0.0
          %575 = vmatpush1.msra.mxu0 0.0
          %576 = vmatprep.subr.mxu0 0.0
          %577 = vmatpush1.msra.mxu0 0.0
          %578 = vmatprep.subr.mxu0 0.0
          %579 = vmatpush1.msra.mxu0 0.0
          %580 = vmatprep.subr.mxu0 0.0
          %581 = vmatpush1.msra.mxu0 0.0
          %582 = vmatprep.subr.mxu0 0.0
          %583 = vmatpush1.msra.mxu0 0.0
          %584 = vmatprep.subr.mxu0 0.0
          %585 = vmatpush1.msra.mxu0 0.0
          %586 = vmatprep.subr.mxu0 0.0
          %587 = vmatpush1.msra.mxu0 0.0
          %588 = vmatprep.subr.mxu0 0.0
          %589 = vmatpush1.msra.mxu0 0.0
          %590 = vmatprep.subr.mxu0 0.0
          %591 = vmatpush1.msra.mxu0 0.0
          %592 = vmatprep.subr.mxu0 0.0
          %593 = vmatpush1.msra.mxu0 0.0
          %594 = vmatprep.subr.mxu0 0.0
          %595 = vmatpush1.msra.mxu0 0.0
          %596 = vmatprep.subr.mxu0 0.0
          %597 = vmatpush1.msra.mxu0 0.0
          %598 = vmatprep.subr.mxu0 0.0
          %599 = vmatpush1.msra.mxu0 0.0
          %600 = vmatprep.subr.mxu0 0.0
          %601 = vmatpush1.msra.mxu0 0.0
          %602 = vmatprep.subr.mxu0 0.0
          %603 = vmatpush1.msra.mxu0 0.0
          %604 = vmatprep.subr.mxu0 0.0
          %605 = vmatpush1.msra.mxu0 0.0
          %606 = vmatprep.mubr.f32.mxu0 0.0
          %607 = vmatmul.mubr.f32.gmra.mrb[0].mxu0 %v537
          %v608 = vpop.f32.mrb[0].mxu0
          %v609 = vadd.f32 0.0, %v608
          %v610 = vpop.f32.mrb[0].mxu0
          %v611 = vadd.f32 0.0, %v610
          %612 = vmatprep.mubr.f32.mxu0 0.0
          %613 = vmatmul.mubr.f32.gmra.mrb[0].mxu0 %v540
          %v614 = vpop.f32.mrb[0].mxu0
          %v615 = vadd.f32 0.0, %v614
          %v616 = vpop.f32.mrb[0].mxu0
          %v617 = vadd.f32 0.0, %v616
          %618 = vdwg.mxu0
          %v620 = vsel %vm535, %v513, 0
          %v623 = vsel %vm535, %v514, 0
          %625 = vmatprep.subr.mxu0 %v516
          %626 = vmatpush1.msra.mxu0 %v515
          %627 = vmatprep.subr.mxu0 0.0
          %628 = vmatpush1.msra.mxu0 0.0
          %629 = vmatprep.subr.mxu0 0.0
          %630 = vmatpush1.msra.mxu0 0.0
          %631 = vmatprep.subr.mxu0 0.0
          %632 = vmatpush1.msra.mxu0 0.0
          %633 = vmatprep.subr.mxu0 0.0
          %634 = vmatpush1.msra.mxu0 0.0
          %635 = vmatprep.subr.mxu0 0.0
          %636 = vmatpush1.msra.mxu0 0.0
          %637 = vmatprep.subr.mxu0 0.0
          %638 = vmatpush1.msra.mxu0 0.0
          %639 = vmatprep.subr.mxu0 0.0
          %640 = vmatpush1.msra.mxu0 0.0
          %641 = vmatprep.subr.mxu0 0.0
          %642 = vmatpush1.msra.mxu0 0.0
          %643 = vmatprep.subr.mxu0 0.0
          %644 = vmatpush1.msra.mxu0 0.0
          %645 = vmatprep.subr.mxu0 0.0
          %646 = vmatpush1.msra.mxu0 0.0
          %647 = vmatprep.subr.mxu0 0.0
          %648 = vmatpush1.msra.mxu0 0.0
          %649 = vmatprep.subr.mxu0 0.0
          %650 = vmatpush1.msra.mxu0 0.0
          %651 = vmatprep.subr.mxu0 0.0
          %652 = vmatpush1.msra.mxu0 0.0
          %653 = vmatprep.subr.mxu0 0.0
          %654 = vmatpush1.msra.mxu0 0.0
          %655 = vmatprep.subr.mxu0 0.0
          %656 = vmatpush1.msra.mxu0 0.0
          %657 = vmatprep.subr.mxu0 0.0
          %658 = vmatpush1.msra.mxu0 0.0
          %659 = vmatprep.subr.mxu0 0.0
          %660 = vmatpush1.msra.mxu0 0.0
          %661 = vmatprep.subr.mxu0 0.0
          %662 = vmatpush1.msra.mxu0 0.0
          %663 = vmatprep.subr.mxu0 0.0
          %664 = vmatpush1.msra.mxu0 0.0
          %665 = vmatprep.subr.mxu0 0.0
          %666 = vmatpush1.msra.mxu0 0.0
          %667 = vmatprep.subr.mxu0 0.0
          %668 = vmatpush1.msra.mxu0 0.0
          %669 = vmatprep.subr.mxu0 0.0
          %670 = vmatpush1.msra.mxu0 0.0
          %671 = vmatprep.subr.mxu0 0.0
          %672 = vmatpush1.msra.mxu0 0.0
          %673 = vmatprep.subr.mxu0 0.0
          %674 = vmatpush1.msra.mxu0 0.0
          %675 = vmatprep.subr.mxu0 0.0
          %676 = vmatpush1.msra.mxu0 0.0
          %677 = vmatprep.subr.mxu0 0.0
          %678 = vmatpush1.msra.mxu0 0.0
          %679 = vmatprep.subr.mxu0 0.0
          %680 = vmatpush1.msra.mxu0 0.0
          %681 = vmatprep.subr.mxu0 0.0
          %682 = vmatpush1.msra.mxu0 0.0
          %683 = vmatprep.subr.mxu0 0.0
          %684 = vmatpush1.msra.mxu0 0.0
          %685 = vmatprep.subr.mxu0 0.0
          %686 = vmatpush1.msra.mxu0 0.0
          %687 = vmatprep.subr.mxu0 0.0
          %688 = vmatpush1.msra.mxu0 0.0
          %689 = vmatprep.mubr.f32.mxu0 0.0
          %690 = vmatmul.mubr.f32.gmra.mrb[0].mxu0 %v620
          %v691 = vpop.f32.mrb[0].mxu0
          %v692 = vadd.f32 %v609, %v691
          %v693 = vpop.f32.mrb[0].mxu0
          %v694 = vadd.f32 %v611, %v693
          %695 = vmatprep.mubr.f32.mxu0 0.0
          %696 = vmatmul.mubr.f32.gmra.mrb[0].mxu0 %v623
          %v697 = vpop.f32.mrb[0].mxu0
          %v698 = vadd.f32 %v615, %v697
          %v699 = vpop.f32.mrb[0].mxu0
          %v700 = vadd.f32 %v617, %v699
          %701 = vdwg.mxu0
          %s702 = scalar_lea.vmem [#allocation13], 32
          %v703 = vld [vmem:[%s702] sm:$0xff]
          %v704 = vld [vmem:[%s702 + $0x8] sm:$0xff]
          %705 = vrot.lane.b32.xlu0 %v515, 126
          %v706 = vpop.permute.xlu0 %705
          %707 = vrot.lane.b32.xlu0 %v516, 126
          %v708 = vpop.permute.xlu0 %707
          %709 = vrot.lane.b32.xlu0 %v520, 126
          %v710 = vpop.permute.xlu0 %709
          %vm711 = vcmask 1031168
          %v712 = vsel %vm711, %v706, %v708
          %v713 = vsel %vm711, %v708, %v710
          %v717 = vsel %vm535, %v703, 0
          %v720 = vsel %vm535, %v704, 0
          %722 = vmatprep.subr.mxu0 %v713
          %723 = vmatpush1.msra.mxu0 %v712
          %724 = vmatprep.subr.mxu0 0.0
          %725 = vmatpush1.msra.mxu0 0.0
          %726 = vmatprep.subr.mxu0 0.0
          %727 = vmatpush1.msra.mxu0 0.0
          %728 = vmatprep.subr.mxu0 0.0
          %729 = vmatpush1.msra.mxu0 0.0
          %730 = vmatprep.subr.mxu0 0.0
          %731 = vmatpush1.msra.mxu0 0.0
          %732 = vmatprep.subr.mxu0 0.0
          %733 = vmatpush1.msra.mxu0 0.0
          %734 = vmatprep.subr.mxu0 0.0
          %735 = vmatpush1.msra.mxu0 0.0
          %736 = vmatprep.subr.mxu0 0.0
          %737 = vmatpush1.msra.mxu0 0.0
          %738 = vmatprep.subr.mxu0 0.0
          %739 = vmatpush1.msra.mxu0 0.0
          %740 = vmatprep.subr.mxu0 0.0
          %741 = vmatpush1.msra.mxu0 0.0
          %742 = vmatprep.subr.mxu0 0.0
          %743 = vmatpush1.msra.mxu0 0.0
          %744 = vmatprep.subr.mxu0 0.0
          %745 = vmatpush1.msra.mxu0 0.0
          %746 = vmatprep.subr.mxu0 0.0
          %747 = vmatpush1.msra.mxu0 0.0
          %748 = vmatprep.subr.mxu0 0.0
          %749 = vmatpush1.msra.mxu0 0.0
          %750 = vmatprep.subr.mxu0 0.0
          %751 = vmatpush1.msra.mxu0 0.0
          %752 = vmatprep.subr.mxu0 0.0
          %753 = vmatpush1.msra.mxu0 0.0
          %754 = vmatprep.subr.mxu0 0.0
          %755 = vmatpush1.msra.mxu0 0.0
          %756 = vmatprep.subr.mxu0 0.0
          %757 = vmatpush1.msra.mxu0 0.0
          %758 = vmatprep.subr.mxu0 0.0
          %759 = vmatpush1.msra.mxu0 0.0
          %760 = vmatprep.subr.mxu0 0.0
          %761 = vmatpush1.msra.mxu0 0.0
          %762 = vmatprep.subr.mxu0 0.0
          %763 = vmatpush1.msra.mxu0 0.0
          %764 = vmatprep.subr.mxu0 0.0
          %765 = vmatpush1.msra.mxu0 0.0
          %766 = vmatprep.subr.mxu0 0.0
          %767 = vmatpush1.msra.mxu0 0.0
          %768 = vmatprep.subr.mxu0 0.0
          %769 = vmatpush1.msra.mxu0 0.0
          %770 = vmatprep.subr.mxu0 0.0
          %771 = vmatpush1.msra.mxu0 0.0
          %772 = vmatprep.subr.mxu0 0.0
          %773 = vmatpush1.msra.mxu0 0.0
          %774 = vmatprep.subr.mxu0 0.0
          %775 = vmatpush1.msra.mxu0 0.0
          %776 = vmatprep.subr.mxu0 0.0
          %777 = vmatpush1.msra.mxu0 0.0
          %778 = vmatprep.subr.mxu0 0.0
          %779 = vmatpush1.msra.mxu0 0.0
          %780 = vmatprep.subr.mxu0 0.0
          %781 = vmatpush1.msra.mxu0 0.0
          %782 = vmatprep.subr.mxu0 0.0
          %783 = vmatpush1.msra.mxu0 0.0
          %784 = vmatprep.subr.mxu0 0.0
          %785 = vmatpush1.msra.mxu0 0.0
          %786 = vmatprep.mubr.f32.mxu0 0.0
          %787 = vmatmul.mubr.f32.gmra.mrb[0].mxu0 %v717
          %v788 = vpop.f32.mrb[0].mxu0
          %v789 = vadd.f32 0.0, %v788
          %v790 = vpop.f32.mrb[0].mxu0
          %v791 = vadd.f32 0.0, %v790
          %792 = vmatprep.mubr.f32.mxu0 0.0
          %793 = vmatmul.mubr.f32.gmra.mrb[0].mxu0 %v720
          %v794 = vpop.f32.mrb[0].mxu0
          %v795 = vadd.f32 0.0, %v794
          %v796 = vpop.f32.mrb[0].mxu0
          %v797 = vadd.f32 0.0, %v796
          %798 = vdwg.mxu0
          %v799 = vadd.f32 %v692, %v789
          %v800 = vadd.f32 %v694, %v791
          %v801 = vadd.f32 %v698, %v795
          %v802 = vadd.f32 %v700, %v797
          %s803 = scalar_lea.vmem [#allocation13], 48
          %v804 = vld [vmem:[%s803] sm:$0xff]
          %v805 = vld [vmem:[%s803 + $0x8] sm:$0xff]
          %806 = vrot.lane.b32.xlu0 %v515, 118
          %v807 = vpop.permute.xlu0 %806
          %808 = vrot.lane.b32.xlu0 %v516, 118
          %v809 = vpop.permute.xlu0 %808
          %810 = vrot.lane.b32.xlu0 %v520, 118
          %v811 = vpop.permute.xlu0 %810
          %vm812 = vcmask 965632
          %v813 = vsel %vm812, %v807, %v809
          %v814 = vsel %vm812, %v809, %v811
          %v818 = vsel %vm535, %v804, 0
          %v821 = vsel %vm535, %v805, 0
          %823 = vmatprep.subr.mxu0 %v814
          %824 = vmatpush1.msra.mxu0 %v813
          %825 = vmatprep.subr.mxu0 0.0
          %826 = vmatpush1.msra.mxu0 0.0
          %827 = vmatprep.subr.mxu0 0.0
          %828 = vmatpush1.msra.mxu0 0.0
          %829 = vmatprep.subr.mxu0 0.0
          %830 = vmatpush1.msra.mxu0 0.0
          %831 = vmatprep.subr.mxu0 0.0
          %832 = vmatpush1.msra.mxu0 0.0
          %833 = vmatprep.subr.mxu0 0.0
          %834 = vmatpush1.msra.mxu0 0.0
          %835 = vmatprep.subr.mxu0 0.0
          %836 = vmatpush1.msra.mxu0 0.0
          %837 = vmatprep.subr.mxu0 0.0
          %838 = vmatpush1.msra.mxu0 0.0
          %839 = vmatprep.subr.mxu0 0.0
          %840 = vmatpush1.msra.mxu0 0.0
          %841 = vmatprep.subr.mxu0 0.0
          %842 = vmatpush1.msra.mxu0 0.0
          %843 = vmatprep.subr.mxu0 0.0
          %844 = vmatpush1.msra.mxu0 0.0
          %845 = vmatprep.subr.mxu0 0.0
          %846 = vmatpush1.msra.mxu0 0.0
          %847 = vmatprep.subr.mxu0 0.0
          %848 = vmatpush1.msra.mxu0 0.0
          %849 = vmatprep.subr.mxu0 0.0
          %850 = vmatpush1.msra.mxu0 0.0
          %851 = vmatprep.subr.mxu0 0.0
          %852 = vmatpush1.msra.mxu0 0.0
          %853 = vmatprep.subr.mxu0 0.0
          %854 = vmatpush1.msra.mxu0 0.0
          %855 = vmatprep.subr.mxu0 0.0
          %856 = vmatpush1.msra.mxu0 0.0
          %857 = vmatprep.subr.mxu0 0.0
          %858 = vmatpush1.msra.mxu0 0.0
          %859 = vmatprep.subr.mxu0 0.0
          %860 = vmatpush1.msra.mxu0 0.0
          %861 = vmatprep.subr.mxu0 0.0
          %862 = vmatpush1.msra.mxu0 0.0
          %863 = vmatprep.subr.mxu0 0.0
          %864 = vmatpush1.msra.mxu0 0.0
          %865 = vmatprep.subr.mxu0 0.0
          %866 = vmatpush1.msra.mxu0 0.0
          %867 = vmatprep.subr.mxu0 0.0
          %868 = vmatpush1.msra.mxu0 0.0
          %869 = vmatprep.subr.mxu0 0.0
          %870 = vmatpush1.msra.mxu0 0.0
          %871 = vmatprep.subr.mxu0 0.0
          %872 = vmatpush1.msra.mxu0 0.0
          %873 = vmatprep.subr.mxu0 0.0
          %874 = vmatpush1.msra.mxu0 0.0
          %875 = vmatprep.subr.mxu0 0.0
          %876 = vmatpush1.msra.mxu0 0.0
          %877 = vmatprep.subr.mxu0 0.0
          %878 = vmatpush1.msra.mxu0 0.0
          %879 = vmatprep.subr.mxu0 0.0
          %880 = vmatpush1.msra.mxu0 0.0
          %881 = vmatprep.subr.mxu0 0.0
          %882 = vmatpush1.msra.mxu0 0.0
          %883 = vmatprep.subr.mxu0 0.0
          %884 = vmatpush1.msra.mxu0 0.0
          %885 = vmatprep.subr.mxu0 0.0
          %886 = vmatpush1.msra.mxu0 0.0
          %887 = vmatprep.mubr.f32.mxu0 0.0
          %888 = vmatmul.mubr.f32.gmra.mrb[0].mxu0 %v818
          %v889 = vpop.f32.mrb[0].mxu0
          %v890 = vadd.f32 0.0, %v889
          %v891 = vpop.f32.mrb[0].mxu0
          %v892 = vadd.f32 0.0, %v891
          %893 = vmatprep.mubr.f32.mxu0 0.0
          %894 = vmatmul.mubr.f32.gmra.mrb[0].mxu0 %v821
          %v895 = vpop.f32.mrb[0].mxu0
          %v896 = vadd.f32 0.0, %v895
          %v897 = vpop.f32.mrb[0].mxu0
          %v898 = vadd.f32 0.0, %v897
          %899 = vdwg.mxu0
          %v900 = vadd.f32 %v799, %v890
          %v901 = vadd.f32 %v800, %v892
          %v902 = vadd.f32 %v801, %v896
          %v903 = vadd.f32 %v802, %v898
          %s904 = scalar_lea.vmem [#allocation13], 64
          %v905 = vld [vmem:[%s904] sm:$0xff]
          %v906 = vld [vmem:[%s904 + $0x8] sm:$0xff]
          %907 = vrot.lane.b32.xlu0 %v515, 117
          %v908 = vpop.permute.xlu0 %907
          %909 = vrot.lane.b32.xlu0 %v516, 117
          %v910 = vpop.permute.xlu0 %909
          %911 = vrot.lane.b32.xlu0 %v520, 117
          %v912 = vpop.permute.xlu0 %911
          %vm913 = vcmask 957440
          %v914 = vsel %vm913, %v908, %v910
          %v915 = vsel %vm913, %v910, %v912
          %v919 = vsel %vm535, %v905, 0
          %v922 = vsel %vm535, %v906, 0
          %924 = vmatprep.subr.mxu0 %v915
          %925 = vmatpush1.msra.mxu0 %v914
          %926 = vmatprep.subr.mxu0 0.0
          %927 = vmatpush1.msra.mxu0 0.0
          %928 = vmatprep.subr.mxu0 0.0
          %929 = vmatpush1.msra.mxu0 0.0
          %930 = vmatprep.subr.mxu0 0.0
          %931 = vmatpush1.msra.mxu0 0.0
          %932 = vmatprep.subr.mxu0 0.0
          %933 = vmatpush1.msra.mxu0 0.0
          %934 = vmatprep.subr.mxu0 0.0
          %935 = vmatpush1.msra.mxu0 0.0
          %936 = vmatprep.subr.mxu0 0.0
          %937 = vmatpush1.msra.mxu0 0.0
          %938 = vmatprep.subr.mxu0 0.0
          %939 = vmatpush1.msra.mxu0 0.0
          %940 = vmatprep.subr.mxu0 0.0
          %941 = vmatpush1.msra.mxu0 0.0
          %942 = vmatprep.subr.mxu0 0.0
          %943 = vmatpush1.msra.mxu0 0.0
          %944 = vmatprep.subr.mxu0 0.0
          %945 = vmatpush1.msra.mxu0 0.0
          %946 = vmatprep.subr.mxu0 0.0
          %947 = vmatpush1.msra.mxu0 0.0
          %948 = vmatprep.subr.mxu0 0.0
          %949 = vmatpush1.msra.mxu0 0.0
          %950 = vmatprep.subr.mxu0 0.0
          %951 = vmatpush1.msra.mxu0 0.0
          %952 = vmatprep.subr.mxu0 0.0
          %953 = vmatpush1.msra.mxu0 0.0
          %954 = vmatprep.subr.mxu0 0.0
          %955 = vmatpush1.msra.mxu0 0.0
          %956 = vmatprep.subr.mxu0 0.0
          %957 = vmatpush1.msra.mxu0 0.0
          %958 = vmatprep.subr.mxu0 0.0
          %959 = vmatpush1.msra.mxu0 0.0
          %960 = vmatprep.subr.mxu0 0.0
          %961 = vmatpush1.msra.mxu0 0.0
          %962 = vmatprep.subr.mxu0 0.0
          %963 = vmatpush1.msra.mxu0 0.0
          %964 = vmatprep.subr.mxu0 0.0
          %965 = vmatpush1.msra.mxu0 0.0
          %966 = vmatprep.subr.mxu0 0.0
          %967 = vmatpush1.msra.mxu0 0.0
          %968 = vmatprep.subr.mxu0 0.0
          %969 = vmatpush1.msra.mxu0 0.0
          %970 = vmatprep.subr.mxu0 0.0
          %971 = vmatpush1.msra.mxu0 0.0
          %972 = vmatprep.subr.mxu0 0.0
          %973 = vmatpush1.msra.mxu0 0.0
          %974 = vmatprep.subr.mxu0 0.0
          %975 = vmatpush1.msra.mxu0 0.0
          %976 = vmatprep.subr.mxu0 0.0
          %977 = vmatpush1.msra.mxu0 0.0
          %978 = vmatprep.subr.mxu0 0.0
          %979 = vmatpush1.msra.mxu0 0.0
          %980 = vmatprep.subr.mxu0 0.0
          %981 = vmatpush1.msra.mxu0 0.0
          %982 = vmatprep.subr.mxu0 0.0
          %983 = vmatpush1.msra.mxu0 0.0
          %984 = vmatprep.subr.mxu0 0.0
          %985 = vmatpush1.msra.mxu0 0.0
          %986 = vmatprep.subr.mxu0 0.0
          %987 = vmatpush1.msra.mxu0 0.0
          %988 = vmatprep.mubr.f32.mxu0 0.0
          %989 = vmatmul.mubr.f32.gmra.mrb[0].mxu0 %v919
          %v990 = vpop.f32.mrb[0].mxu0
          %v991 = vadd.f32 0.0, %v990
          %v992 = vpop.f32.mrb[0].mxu0
          %v993 = vadd.f32 0.0, %v992
          %994 = vmatprep.mubr.f32.mxu0 0.0
          %995 = vmatmul.mubr.f32.gmra.mrb[0].mxu0 %v922
          %v996 = vpop.f32.mrb[0].mxu0
          %v997 = vadd.f32 0.0, %v996
          %v998 = vpop.f32.mrb[0].mxu0
          %v999 = vadd.f32 0.0, %v998
          %1000 = vdwg.mxu0
          %v1001 = vadd.f32 %v900, %v991
          %v1002 = vadd.f32 %v901, %v993
          %v1003 = vadd.f32 %v902, %v997
          %v1004 = vadd.f32 %v903, %v999
          %s1005 = scalar_lea.vmem [#allocation13], 80
          %v1006 = vld [vmem:[%s1005] sm:$0xff]
          %v1007 = vld [vmem:[%s1005 + $0x8] sm:$0xff]
          %1008 = vrot.lane.b32.xlu0 %v515, 116
          %v1009 = vpop.permute.xlu0 %1008
          %1010 = vrot.lane.b32.xlu0 %v516, 116
          %v1011 = vpop.permute.xlu0 %1010
          %1012 = vrot.lane.b32.xlu0 %v520, 116
          %v1013 = vpop.permute.xlu0 %1012
          %vm1014 = vcmask 949248
          %v1015 = vsel %vm1014, %v1009, %v1011
          %v1016 = vsel %vm1014, %v1011, %v1013
          %v1020 = vsel %vm535, %v1006, 0
          %v1023 = vsel %vm535, %v1007, 0
          %1025 = vmatprep.subr.mxu0 %v1016
          %1026 = vmatpush1.msra.mxu0 %v1015
          %1027 = vmatprep.subr.mxu0 0.0
          %1028 = vmatpush1.msra.mxu0 0.0
          %1029 = vmatprep.subr.mxu0 0.0
          %1030 = vmatpush1.msra.mxu0 0.0
          %1031 = vmatprep.subr.mxu0 0.0
          %1032 = vmatpush1.msra.mxu0 0.0
          %1033 = vmatprep.subr.mxu0 0.0
          %1034 = vmatpush1.msra.mxu0 0.0
          %1035 = vmatprep.subr.mxu0 0.0
          %1036 = vmatpush1.msra.mxu0 0.0
          %1037 = vmatprep.subr.mxu0 0.0
          %1038 = vmatpush1.msra.mxu0 0.0
          %1039 = vmatprep.subr.mxu0 0.0
          %1040 = vmatpush1.msra.mxu0 0.0
          %1041 = vmatprep.subr.mxu0 0.0
          %1042 = vmatpush1.msra.mxu0 0.0
          %1043 = vmatprep.subr.mxu0 0.0
          %1044 = vmatpush1.msra.mxu0 0.0
          %1045 = vmatprep.subr.mxu0 0.0
          %1046 = vmatpush1.msra.mxu0 0.0
          %1047 = vmatprep.subr.mxu0 0.0
          %1048 = vmatpush1.msra.mxu0 0.0
          %1049 = vmatprep.subr.mxu0 0.0
          %1050 = vmatpush1.msra.mxu0 0.0
          %1051 = vmatprep.subr.mxu0 0.0
          %1052 = vmatpush1.msra.mxu0 0.0
          %1053 = vmatprep.subr.mxu0 0.0
          %1054 = vmatpush1.msra.mxu0 0.0
          %1055 = vmatprep.subr.mxu0 0.0
          %1056 = vmatpush1.msra.mxu0 0.0
          %1057 = vmatprep.subr.mxu0 0.0
          %1058 = vmatpush1.msra.mxu0 0.0
          %1059 = vmatprep.subr.mxu0 0.0
          %1060 = vmatpush1.msra.mxu0 0.0
          %1061 = vmatprep.subr.mxu0 0.0
          %1062 = vmatpush1.msra.mxu0 0.0
          %1063 = vmatprep.subr.mxu0 0.0
          %1064 = vmatpush1.msra.mxu0 0.0
          %1065 = vmatprep.subr.mxu0 0.0
          %1066 = vmatpush1.msra.mxu0 0.0
          %1067 = vmatprep.subr.mxu0 0.0
          %1068 = vmatpush1.msra.mxu0 0.0
          %1069 = vmatprep.subr.mxu0 0.0
          %1070 = vmatpush1.msra.mxu0 0.0
          %1071 = vmatprep.subr.mxu0 0.0
          %1072 = vmatpush1.msra.mxu0 0.0
          %1073 = vmatprep.subr.mxu0 0.0
          %1074 = vmatpush1.msra.mxu0 0.0
          %1075 = vmatprep.subr.mxu0 0.0
          %1076 = vmatpush1.msra.mxu0 0.0
          %1077 = vmatprep.subr.mxu0 0.0
          %1078 = vmatpush1.msra.mxu0 0.0
          %1079 = vmatprep.subr.mxu0 0.0
          %1080 = vmatpush1.msra.mxu0 0.0
          %1081 = vmatprep.subr.mxu0 0.0
          %1082 = vmatpush1.msra.mxu0 0.0
          %1083 = vmatprep.subr.mxu0 0.0
          %1084 = vmatpush1.msra.mxu0 0.0
          %1085 = vmatprep.subr.mxu0 0.0
          %1086 = vmatpush1.msra.mxu0 0.0
          %1087 = vmatprep.subr.mxu0 0.0
          %1088 = vmatpush1.msra.mxu0 0.0
          %1089 = vmatprep.mubr.f32.mxu0 0.0
          %1090 = vmatmul.mubr.f32.gmra.mrb[0].mxu0 %v1020
          %v1091 = vpop.f32.mrb[0].mxu0
          %v1092 = vadd.f32 0.0, %v1091
          %v1093 = vpop.f32.mrb[0].mxu0
          %v1094 = vadd.f32 0.0, %v1093
          %1095 = vmatprep.mubr.f32.mxu0 0.0
          %1096 = vmatmul.mubr.f32.gmra.mrb[0].mxu0 %v1023
          %v1097 = vpop.f32.mrb[0].mxu0
          %v1098 = vadd.f32 0.0, %v1097
          %v1099 = vpop.f32.mrb[0].mxu0
          %v1100 = vadd.f32 0.0, %v1099
          %1101 = vdwg.mxu0
          %v1102 = vadd.f32 %v1001, %v1092
          %v1103 = vadd.f32 %v1002, %v1094
          %v1104 = vadd.f32 %v1003, %v1098
          %v1105 = vadd.f32 %v1004, %v1100
          %s1106 = scalar_lea.vmem [#allocation13], 96
          %v1107 = vld [vmem:[%s1106] sm:$0xff]
          %v1108 = vld [vmem:[%s1106 + $0x8] sm:$0xff]
          %1109 = vrot.lane.b32.xlu0 %v515, 108
          %v1110 = vpop.permute.xlu0 %1109
          %1111 = vrot.lane.b32.xlu0 %v516, 108
          %v1112 = vpop.permute.xlu0 %1111
          %1113 = vrot.lane.b32.xlu0 %v520, 108
          %v1114 = vpop.permute.xlu0 %1113
          %vm1115 = vcmask 883712
          %v1116 = vsel %vm1115, %v1110, %v1112
          %v1117 = vsel %vm1115, %v1112, %v1114
          %v1121 = vsel %vm535, %v1107, 0
          %v1124 = vsel %vm535, %v1108, 0
          %1126 = vmatprep.subr.mxu0 %v1117
          %1127 = vmatpush1.msra.mxu0 %v1116
          %1128 = vmatprep.subr.mxu0 0.0
          %1129 = vmatpush1.msra.mxu0 0.0
          %1130 = vmatprep.subr.mxu0 0.0
          %1131 = vmatpush1.msra.mxu0 0.0
          %1132 = vmatprep.subr.mxu0 0.0
          %1133 = vmatpush1.msra.mxu0 0.0
          %1134 = vmatprep.subr.mxu0 0.0
          %1135 = vmatpush1.msra.mxu0 0.0
          %1136 = vmatprep.subr.mxu0 0.0
          %1137 = vmatpush1.msra.mxu0 0.0
          %1138 = vmatprep.subr.mxu0 0.0
          %1139 = vmatpush1.msra.mxu0 0.0
          %1140 = vmatprep.subr.mxu0 0.0
          %1141 = vmatpush1.msra.mxu0 0.0
          %1142 = vmatprep.subr.mxu0 0.0
          %1143 = vmatpush1.msra.mxu0 0.0
          %1144 = vmatprep.subr.mxu0 0.0
          %1145 = vmatpush1.msra.mxu0 0.0
          %1146 = vmatprep.subr.mxu0 0.0
          %1147 = vmatpush1.msra.mxu0 0.0
          %1148 = vmatprep.subr.mxu0 0.0
          %1149 = vmatpush1.msra.mxu0 0.0
          %1150 = vmatprep.subr.mxu0 0.0
          %1151 = vmatpush1.msra.mxu0 0.0
          %1152 = vmatprep.subr.mxu0 0.0
          %1153 = vmatpush1.msra.mxu0 0.0
          %1154 = vmatprep.subr.mxu0 0.0
          %1155 = vmatpush1.msra.mxu0 0.0
          %1156 = vmatprep.subr.mxu0 0.0
          %1157 = vmatpush1.msra.mxu0 0.0
          %1158 = vmatprep.subr.mxu0 0.0
          %1159 = vmatpush1.msra.mxu0 0.0
          %1160 = vmatprep.subr.mxu0 0.0
          %1161 = vmatpush1.msra.mxu0 0.0
          %1162 = vmatprep.subr.mxu0 0.0
          %1163 = vmatpush1.msra.mxu0 0.0
          %1164 = vmatprep.subr.mxu0 0.0
          %1165 = vmatpush1.msra.mxu0 0.0
          %1166 = vmatprep.subr.mxu0 0.0
          %1167 = vmatpush1.msra.mxu0 0.0
          %1168 = vmatprep.subr.mxu0 0.0
          %1169 = vmatpush1.msra.mxu0 0.0
          %1170 = vmatprep.subr.mxu0 0.0
          %1171 = vmatpush1.msra.mxu0 0.0
          %1172 = vmatprep.subr.mxu0 0.0
          %1173 = vmatpush1.msra.mxu0 0.0
          %1174 = vmatprep.subr.mxu0 0.0
          %1175 = vmatpush1.msra.mxu0 0.0
          %1176 = vmatprep.subr.mxu0 0.0
          %1177 = vmatpush1.msra.mxu0 0.0
          %1178 = vmatprep.subr.mxu0 0.0
          %1179 = vmatpush1.msra.mxu0 0.0
          %1180 = vmatprep.subr.mxu0 0.0
          %1181 = vmatpush1.msra.mxu0 0.0
          %1182 = vmatprep.subr.mxu0 0.0
          %1183 = vmatpush1.msra.mxu0 0.0
          %1184 = vmatprep.subr.mxu0 0.0
          %1185 = vmatpush1.msra.mxu0 0.0
          %1186 = vmatprep.subr.mxu0 0.0
          %1187 = vmatpush1.msra.mxu0 0.0
          %1188 = vmatprep.subr.mxu0 0.0
          %1189 = vmatpush1.msra.mxu0 0.0
          %1190 = vmatprep.mubr.f32.mxu0 0.0
          %1191 = vmatmul.mubr.f32.gmra.mrb[0].mxu0 %v1121
          %v1192 = vpop.f32.mrb[0].mxu0
          %v1193 = vadd.f32 0.0, %v1192
          %v1194 = vpop.f32.mrb[0].mxu0
          %v1195 = vadd.f32 0.0, %v1194
          %1196 = vmatprep.mubr.f32.mxu0 0.0
          %1197 = vmatmul.mubr.f32.gmra.mrb[0].mxu0 %v1124
          %v1198 = vpop.f32.mrb[0].mxu0
          %v1199 = vadd.f32 0.0, %v1198
          %v1200 = vpop.f32.mrb[0].mxu0
          %v1201 = vadd.f32 0.0, %v1200
          %1202 = vdwg.mxu0
          %v1203 = vadd.f32 %v1102, %v1193
          %v1204 = vadd.f32 %v1103, %v1195
          %v1205 = vadd.f32 %v1104, %v1199
          %v1206 = vadd.f32 %v1105, %v1201
          %s1207 = scalar_lea.vmem [#allocation13], 112
          %v1208 = vld [vmem:[%s1207] sm:$0xff]
          %v1209 = vld [vmem:[%s1207 + $0x8] sm:$0xff]
          %1210 = vrot.lane.b32.xlu0 %v515, 107
          %v1211 = vpop.permute.xlu0 %1210
          %1212 = vrot.lane.b32.xlu0 %v516, 107
          %v1213 = vpop.permute.xlu0 %1212
          %1214 = vrot.lane.b32.xlu0 %v520, 107
          %v1215 = vpop.permute.xlu0 %1214
          %vm1216 = vcmask 875520
          %v1217 = vsel %vm1216, %v1211, %v1213
          %v1218 = vsel %vm1216, %v1213, %v1215
          %v1222 = vsel %vm535, %v1208, 0
          %v1225 = vsel %vm535, %v1209, 0
          %1227 = vmatprep.subr.mxu0 %v1218
          %1228 = vmatpush1.msra.mxu0 %v1217
          %1229 = vmatprep.subr.mxu0 0.0
          %1230 = vmatpush1.msra.mxu0 0.0
          %1231 = vmatprep.subr.mxu0 0.0
          %1232 = vmatpush1.msra.mxu0 0.0
          %1233 = vmatprep.subr.mxu0 0.0
          %1234 = vmatpush1.msra.mxu0 0.0
          %1235 = vmatprep.subr.mxu0 0.0
          %1236 = vmatpush1.msra.mxu0 0.0
          %1237 = vmatprep.subr.mxu0 0.0
          %1238 = vmatpush1.msra.mxu0 0.0
          %1239 = vmatprep.subr.mxu0 0.0
          %1240 = vmatpush1.msra.mxu0 0.0
          %1241 = vmatprep.subr.mxu0 0.0
          %1242 = vmatpush1.msra.mxu0 0.0
          %1243 = vmatprep.subr.mxu0 0.0
          %1244 = vmatpush1.msra.mxu0 0.0
          %1245 = vmatprep.subr.mxu0 0.0
          %1246 = vmatpush1.msra.mxu0 0.0
          %1247 = vmatprep.subr.mxu0 0.0
          %1248 = vmatpush1.msra.mxu0 0.0
          %1249 = vmatprep.subr.mxu0 0.0
          %1250 = vmatpush1.msra.mxu0 0.0
          %1251 = vmatprep.subr.mxu0 0.0
          %1252 = vmatpush1.msra.mxu0 0.0
          %1253 = vmatprep.subr.mxu0 0.0
          %1254 = vmatpush1.msra.mxu0 0.0
          %1255 = vmatprep.subr.mxu0 0.0
          %1256 = vmatpush1.msra.mxu0 0.0
          %1257 = vmatprep.subr.mxu0 0.0
          %1258 = vmatpush1.msra.mxu0 0.0
          %1259 = vmatprep.subr.mxu0 0.0
          %1260 = vmatpush1.msra.mxu0 0.0
          %1261 = vmatprep.subr.mxu0 0.0
          %1262 = vmatpush1.msra.mxu0 0.0
          %1263 = vmatprep.subr.mxu0 0.0
          %1264 = vmatpush1.msra.mxu0 0.0
          %1265 = vmatprep.subr.mxu0 0.0
          %1266 = vmatpush1.msra.mxu0 0.0
          %1267 = vmatprep.subr.mxu0 0.0
          %1268 = vmatpush1.msra.mxu0 0.0
          %1269 = vmatprep.subr.mxu0 0.0
          %1270 = vmatpush1.msra.mxu0 0.0
          %1271 = vmatprep.subr.mxu0 0.0
          %1272 = vmatpush1.msra.mxu0 0.0
          %1273 = vmatprep.subr.mxu0 0.0
          %1274 = vmatpush1.msra.mxu0 0.0
          %1275 = vmatprep.subr.mxu0 0.0
          %1276 = vmatpush1.msra.mxu0 0.0
          %1277 = vmatprep.subr.mxu0 0.0
          %1278 = vmatpush1.msra.mxu0 0.0
          %1279 = vmatprep.subr.mxu0 0.0
          %1280 = vmatpush1.msra.mxu0 0.0
          %1281 = vmatprep.subr.mxu0 0.0
          %1282 = vmatpush1.msra.mxu0 0.0
          %1283 = vmatprep.subr.mxu0 0.0
          %1284 = vmatpush1.msra.mxu0 0.0
          %1285 = vmatprep.subr.mxu0 0.0
          %1286 = vmatpush1.msra.mxu0 0.0
          %1287 = vmatprep.subr.mxu0 0.0
          %1288 = vmatpush1.msra.mxu0 0.0
          %1289 = vmatprep.subr.mxu0 0.0
          %1290 = vmatpush1.msra.mxu0 0.0
          %1291 = vmatprep.mubr.f32.mxu0 0.0
          %1292 = vmatmul.mubr.f32.gmra.mrb[0].mxu0 %v1222
          %v1293 = vpop.f32.mrb[0].mxu0
          %v1294 = vadd.f32 0.0, %v1293
          %v1295 = vpop.f32.mrb[0].mxu0
          %v1296 = vadd.f32 0.0, %v1295
          %1297 = vmatprep.mubr.f32.mxu0 0.0
          %1298 = vmatmul.mubr.f32.gmra.mrb[0].mxu0 %v1225
          %v1299 = vpop.f32.mrb[0].mxu0
          %v1300 = vadd.f32 0.0, %v1299
          %v1301 = vpop.f32.mrb[0].mxu0
          %v1302 = vadd.f32 0.0, %v1301
          %1303 = vdwg.mxu0
          %v1304 = vadd.f32 %v1203, %v1294
          %v1305 = vadd.f32 %v1204, %v1296
          %v1306 = vadd.f32 %v1205, %v1300
          %v1307 = vadd.f32 %v1206, %v1302
          %s1308 = scalar_lea.vmem [#allocation13], 128
          %v1309 = vld [vmem:[%s1308] sm:$0xff]
          %v1310 = vld [vmem:[%s1308 + $0x8] sm:$0xff]
          %1311 = vrot.lane.b32.xlu0 %v515, 106
          %v1312 = vpop.permute.xlu0 %1311
          %1313 = vrot.lane.b32.xlu0 %v516, 106
          %v1314 = vpop.permute.xlu0 %1313
          %1315 = vrot.lane.b32.xlu0 %v520, 106
          %v1316 = vpop.permute.xlu0 %1315
          %vm1317 = vcmask 867328
          %v1318 = vsel %vm1317, %v1312, %v1314
          %v1319 = vsel %vm1317, %v1314, %v1316
          %v1323 = vsel %vm535, %v1309, 0
          %v1326 = vsel %vm535, %v1310, 0
          %1328 = vmatprep.subr.mxu0 %v1319
          %1329 = vmatpush1.msra.mxu0 %v1318
          %1330 = vmatprep.subr.mxu0 0.0
          %1331 = vmatpush1.msra.mxu0 0.0
          %1332 = vmatprep.subr.mxu0 0.0
          %1333 = vmatpush1.msra.mxu0 0.0
          %1334 = vmatprep.subr.mxu0 0.0
          %1335 = vmatpush1.msra.mxu0 0.0
          %1336 = vmatprep.subr.mxu0 0.0
          %1337 = vmatpush1.msra.mxu0 0.0
          %1338 = vmatprep.subr.mxu0 0.0
          %1339 = vmatpush1.msra.mxu0 0.0
          %1340 = vmatprep.subr.mxu0 0.0
          %1341 = vmatpush1.msra.mxu0 0.0
          %1342 = vmatprep.subr.mxu0 0.0
          %1343 = vmatpush1.msra.mxu0 0.0
          %1344 = vmatprep.subr.mxu0 0.0
          %1345 = vmatpush1.msra.mxu0 0.0
          %1346 = vmatprep.subr.mxu0 0.0
          %1347 = vmatpush1.msra.mxu0 0.0
          %1348 = vmatprep.subr.mxu0 0.0
          %1349 = vmatpush1.msra.mxu0 0.0
          %1350 = vmatprep.subr.mxu0 0.0
          %1351 = vmatpush1.msra.mxu0 0.0
          %1352 = vmatprep.subr.mxu0 0.0
          %1353 = vmatpush1.msra.mxu0 0.0
          %1354 = vmatprep.subr.mxu0 0.0
          %1355 = vmatpush1.msra.mxu0 0.0
          %1356 = vmatprep.subr.mxu0 0.0
          %1357 = vmatpush1.msra.mxu0 0.0
          %1358 = vmatprep.subr.mxu0 0.0
          %1359 = vmatpush1.msra.mxu0 0.0
          %1360 = vmatprep.subr.mxu0 0.0
          %1361 = vmatpush1.msra.mxu0 0.0
          %1362 = vmatprep.subr.mxu0 0.0
          %1363 = vmatpush1.msra.mxu0 0.0
          %1364 = vmatprep.subr.mxu0 0.0
          %1365 = vmatpush1.msra.mxu0 0.0
          %1366 = vmatprep.subr.mxu0 0.0
          %1367 = vmatpush1.msra.mxu0 0.0
          %1368 = vmatprep.subr.mxu0 0.0
          %1369 = vmatpush1.msra.mxu0 0.0
          %1370 = vmatprep.subr.mxu0 0.0
          %1371 = vmatpush1.msra.mxu0 0.0
          %1372 = vmatprep.subr.mxu0 0.0
          %1373 = vmatpush1.msra.mxu0 0.0
          %1374 = vmatprep.subr.mxu0 0.0
          %1375 = vmatpush1.msra.mxu0 0.0
          %1376 = vmatprep.subr.mxu0 0.0
          %1377 = vmatpush1.msra.mxu0 0.0
          %1378 = vmatprep.subr.mxu0 0.0
          %1379 = vmatpush1.msra.mxu0 0.0
          %1380 = vmatprep.subr.mxu0 0.0
          %1381 = vmatpush1.msra.mxu0 0.0
          %1382 = vmatprep.subr.mxu0 0.0
          %1383 = vmatpush1.msra.mxu0 0.0
          %1384 = vmatprep.subr.mxu0 0.0
          %1385 = vmatpush1.msra.mxu0 0.0
          %1386 = vmatprep.subr.mxu0 0.0
          %1387 = vmatpush1.msra.mxu0 0.0
          %1388 = vmatprep.subr.mxu0 0.0
          %1389 = vmatpush1.msra.mxu0 0.0
          %1390 = vmatprep.subr.mxu0 0.0
          %1391 = vmatpush1.msra.mxu0 0.0
          %1392 = vmatprep.mubr.f32.mxu0 0.0
          %1393 = vmatmul.mubr.f32.gmra.mrb[0].mxu0 %v1323
          %v1394 = vpop.f32.mrb[0].mxu0
          %v1395 = vadd.f32 0.0, %v1394
          %v1396 = vpop.f32.mrb[0].mxu0
          %v1397 = vadd.f32 0.0, %v1396
          %1398 = vmatprep.mubr.f32.mxu0 0.0
          %1399 = vmatmul.mubr.f32.gmra.mrb[0].mxu0 %v1326
          %v1400 = vpop.f32.mrb[0].mxu0
          %v1401 = vadd.f32 0.0, %v1400
          %v1402 = vpop.f32.mrb[0].mxu0
          %v1403 = vadd.f32 0.0, %v1402
          %1404 = vdwg.mxu0
          %v1405 = vadd.f32 %v1304, %v1395
          %v1406 = vadd.f32 %v1305, %v1397
          %v1407 = vadd.f32 %v1306, %v1401
          %v1408 = vadd.f32 %v1307, %v1403
          %s1409 = scalar_lea.vmem [#allocation13], 144
          %v1410 = vld [vmem:[%s1409] sm:$0xff]
          %v1411 = vld [vmem:[%s1409 + $0x8] sm:$0xff]
          %1412 = vrot.lane.b32.xlu0 %v515, 28
          %v1413 = vpop.permute.xlu0 %1412
          %1414 = vrot.lane.b32.xlu0 %v516, 28
          %v1415 = vpop.permute.xlu0 %1414
          %1416 = vrot.lane.b32.xlu0 %v520, 28
          %v1417 = vpop.permute.xlu0 %1416
          %vm1418 = vcmask 228352
          %v1419 = vsel %vm1418, %v1413, %v1415
          %v1420 = vsel %vm1418, %v1415, %v1417
          %v1424 = vsel %vm535, %v1410, 0
          %v1427 = vsel %vm535, %v1411, 0
          %1429 = vmatprep.subr.mxu0 %v1420
          %1430 = vmatpush1.msra.mxu0 %v1419
          %1431 = vmatprep.subr.mxu0 0.0
          %1432 = vmatpush1.msra.mxu0 0.0
          %1433 = vmatprep.subr.mxu0 0.0
          %1434 = vmatpush1.msra.mxu0 0.0
          %1435 = vmatprep.subr.mxu0 0.0
          %1436 = vmatpush1.msra.mxu0 0.0
          %1437 = vmatprep.subr.mxu0 0.0
          %1438 = vmatpush1.msra.mxu0 0.0
          %1439 = vmatprep.subr.mxu0 0.0
          %1440 = vmatpush1.msra.mxu0 0.0
          %1441 = vmatprep.subr.mxu0 0.0
          %1442 = vmatpush1.msra.mxu0 0.0
          %1443 = vmatprep.subr.mxu0 0.0
          %1444 = vmatpush1.msra.mxu0 0.0
          %1445 = vmatprep.subr.mxu0 0.0
          %1446 = vmatpush1.msra.mxu0 0.0
          %1447 = vmatprep.subr.mxu0 0.0
          %1448 = vmatpush1.msra.mxu0 0.0
          %1449 = vmatprep.subr.mxu0 0.0
          %1450 = vmatpush1.msra.mxu0 0.0
          %1451 = vmatprep.subr.mxu0 0.0
          %1452 = vmatpush1.msra.mxu0 0.0
          %1453 = vmatprep.subr.mxu0 0.0
          %1454 = vmatpush1.msra.mxu0 0.0
          %1455 = vmatprep.subr.mxu0 0.0
          %1456 = vmatpush1.msra.mxu0 0.0
          %1457 = vmatprep.subr.mxu0 0.0
          %1458 = vmatpush1.msra.mxu0 0.0
          %1459 = vmatprep.subr.mxu0 0.0
          %1460 = vmatpush1.msra.mxu0 0.0
          %1461 = vmatprep.subr.mxu0 0.0
          %1462 = vmatpush1.msra.mxu0 0.0
          %1463 = vmatprep.subr.mxu0 0.0
          %1464 = vmatpush1.msra.mxu0 0.0
          %1465 = vmatprep.subr.mxu0 0.0
          %1466 = vmatpush1.msra.mxu0 0.0
          %1467 = vmatprep.subr.mxu0 0.0
          %1468 = vmatpush1.msra.mxu0 0.0
          %1469 = vmatprep.subr.mxu0 0.0
          %1470 = vmatpush1.msra.mxu0 0.0
          %1471 = vmatprep.subr.mxu0 0.0
          %1472 = vmatpush1.msra.mxu0 0.0
          %1473 = vmatprep.subr.mxu0 0.0
          %1474 = vmatpush1.msra.mxu0 0.0
          %1475 = vmatprep.subr.mxu0 0.0
          %1476 = vmatpush1.msra.mxu0 0.0
          %1477 = vmatprep.subr.mxu0 0.0
          %1478 = vmatpush1.msra.mxu0 0.0
          %1479 = vmatprep.subr.mxu0 0.0
          %1480 = vmatpush1.msra.mxu0 0.0
          %1481 = vmatprep.subr.mxu0 0.0
          %1482 = vmatpush1.msra.mxu0 0.0
          %1483 = vmatprep.subr.mxu0 0.0
          %1484 = vmatpush1.msra.mxu0 0.0
          %1485 = vmatprep.subr.mxu0 0.0
          %1486 = vmatpush1.msra.mxu0 0.0
          %1487 = vmatprep.subr.mxu0 0.0
          %1488 = vmatpush1.msra.mxu0 0.0
          %1489 = vmatprep.subr.mxu0 0.0
          %1490 = vmatpush1.msra.mxu0 0.0
          %1491 = vmatprep.subr.mxu0 0.0
          %1492 = vmatpush1.msra.mxu0 0.0
          %1493 = vmatprep.mubr.f32.mxu0 0.0
          %1494 = vmatmul.mubr.f32.gmra.mrb[0].mxu0 %v1424
          %v1495 = vpop.f32.mrb[0].mxu0
          %v1496 = vadd.f32 0.0, %v1495
          %v1497 = vpop.f32.mrb[0].mxu0
          %v1498 = vadd.f32 0.0, %v1497
          %1499 = vmatprep.mubr.f32.mxu0 0.0
          %1500 = vmatmul.mubr.f32.gmra.mrb[0].mxu0 %v1427
          %v1501 = vpop.f32.mrb[0].mxu0
          %v1502 = vadd.f32 0.0, %v1501
          %v1503 = vpop.f32.mrb[0].mxu0
          %v1504 = vadd.f32 0.0, %v1503
          %1505 = vdwg.mxu0
          %v1506 = vadd.f32 %v1405, %v1496
          %v1507 = vadd.f32 %v1406, %v1498
          %v1508 = vadd.f32 %v1407, %v1502
          %v1509 = vadd.f32 %v1408, %v1504
          %s1510 = scalar_lea.vmem [#allocation13], 160
          %v1511 = vld [vmem:[%s1510] sm:$0xff]
          %v1512 = vld [vmem:[%s1510 + $0x8] sm:$0xff]
          %1513 = vrot.lane.b32.xlu0 %v515, 27
          %v1514 = vpop.permute.xlu0 %1513
          %1515 = vrot.lane.b32.xlu0 %v516, 27
          %v1516 = vpop.permute.xlu0 %1515
          %1517 = vrot.lane.b32.xlu0 %v520, 27
          %v1518 = vpop.permute.xlu0 %1517
          %vm1519 = vcmask 220160
          %v1520 = vsel %vm1519, %v1514, %v1516
          %v1521 = vsel %vm1519, %v1516, %v1518
          %v1525 = vsel %vm535, %v1511, 0
          %v1528 = vsel %vm535, %v1512, 0
          %1530 = vmatprep.subr.mxu0 %v1521
          %1531 = vmatpush1.msra.mxu0 %v1520
          %1532 = vmatprep.subr.mxu0 0.0
          %1533 = vmatpush1.msra.mxu0 0.0
          %1534 = vmatprep.subr.mxu0 0.0
          %1535 = vmatpush1.msra.mxu0 0.0
          %1536 = vmatprep.subr.mxu0 0.0
          %1537 = vmatpush1.msra.mxu0 0.0
          %1538 = vmatprep.subr.mxu0 0.0
          %1539 = vmatpush1.msra.mxu0 0.0
          %1540 = vmatprep.subr.mxu0 0.0
          %1541 = vmatpush1.msra.mxu0 0.0
          %1542 = vmatprep.subr.mxu0 0.0
          %1543 = vmatpush1.msra.mxu0 0.0
          %1544 = vmatprep.subr.mxu0 0.0
          %1545 = vmatpush1.msra.mxu0 0.0
          %1546 = vmatprep.subr.mxu0 0.0
          %1547 = vmatpush1.msra.mxu0 0.0
          %1548 = vmatprep.subr.mxu0 0.0
          %1549 = vmatpush1.msra.mxu0 0.0
          %1550 = vmatprep.subr.mxu0 0.0
          %1551 = vmatpush1.msra.mxu0 0.0
          %1552 = vmatprep.subr.mxu0 0.0
          %1553 = vmatpush1.msra.mxu0 0.0
          %1554 = vmatprep.subr.mxu0 0.0
          %1555 = vmatpush1.msra.mxu0 0.0
          %1556 = vmatprep.subr.mxu0 0.0
          %1557 = vmatpush1.msra.mxu0 0.0
          %1558 = vmatprep.subr.mxu0 0.0
          %1559 = vmatpush1.msra.mxu0 0.0
          %1560 = vmatprep.subr.mxu0 0.0
          %1561 = vmatpush1.msra.mxu0 0.0
          %1562 = vmatprep.subr.mxu0 0.0
          %1563 = vmatpush1.msra.mxu0 0.0
          %1564 = vmatprep.subr.mxu0 0.0
          %1565 = vmatpush1.msra.mxu0 0.0
          %1566 = vmatprep.subr.mxu0 0.0
          %1567 = vmatpush1.msra.mxu0 0.0
          %1568 = vmatprep.subr.mxu0 0.0
          %1569 = vmatpush1.msra.mxu0 0.0
          %1570 = vmatprep.subr.mxu0 0.0
          %1571 = vmatpush1.msra.mxu0 0.0
          %1572 = vmatprep.subr.mxu0 0.0
          %1573 = vmatpush1.msra.mxu0 0.0
          %1574 = vmatprep.subr.mxu0 0.0
          %1575 = vmatpush1.msra.mxu0 0.0
          %1576 = vmatprep.subr.mxu0 0.0
          %1577 = vmatpush1.msra.mxu0 0.0
          %1578 = vmatprep.subr.mxu0 0.0
          %1579 = vmatpush1.msra.mxu0 0.0
          %1580 = vmatprep.subr.mxu0 0.0
          %1581 = vmatpush1.msra.mxu0 0.0
          %1582 = vmatprep.subr.mxu0 0.0
          %1583 = vmatpush1.msra.mxu0 0.0
          %1584 = vmatprep.subr.mxu0 0.0
          %1585 = vmatpush1.msra.mxu0 0.0
          %1586 = vmatprep.subr.mxu0 0.0
          %1587 = vmatpush1.msra.mxu0 0.0
          %1588 = vmatprep.subr.mxu0 0.0
          %1589 = vmatpush1.msra.mxu0 0.0
          %1590 = vmatprep.subr.mxu0 0.0
          %1591 = vmatpush1.msra.mxu0 0.0
          %1592 = vmatprep.subr.mxu0 0.0
          %1593 = vmatpush1.msra.mxu0 0.0
          %1594 = vmatprep.mubr.f32.mxu0 0.0
          %1595 = vmatmul.mubr.f32.gmra.mrb[0].mxu0 %v1525
          %v1596 = vpop.f32.mrb[0].mxu0
          %v1597 = vadd.f32 0.0, %v1596
          %v1598 = vpop.f32.mrb[0].mxu0
          %v1599 = vadd.f32 0.0, %v1598
          %1600 = vmatprep.mubr.f32.mxu0 0.0
          %1601 = vmatmul.mubr.f32.gmra.mrb[0].mxu0 %v1528
          %v1602 = vpop.f32.mrb[0].mxu0
          %v1603 = vadd.f32 0.0, %v1602
          %v1604 = vpop.f32.mrb[0].mxu0
          %v1605 = vadd.f32 0.0, %v1604
          %1606 = vdwg.mxu0
          %v1607 = vadd.f32 %v1506, %v1597
          %v1608 = vadd.f32 %v1507, %v1599
          %v1609 = vadd.f32 %v1508, %v1603
          %v1610 = vadd.f32 %v1509, %v1605
          %s1611 = scalar_lea.vmem [#allocation13], 176
          %v1612 = vld [vmem:[%s1611] sm:$0xff]
          %v1613 = vld [vmem:[%s1611 + $0x8] sm:$0xff]
          %1614 = vrot.lane.b32.xlu0 %v515, 26
          %v1615 = vpop.permute.xlu0 %1614
          %1616 = vrot.lane.b32.xlu0 %v516, 26
          %v1617 = vpop.permute.xlu0 %1616
          %1618 = vrot.lane.b32.xlu0 %v520, 26
          %v1619 = vpop.permute.xlu0 %1618
          %vm1620 = vcmask 211968
          %v1621 = vsel %vm1620, %v1615, %v1617
          %v1622 = vsel %vm1620, %v1617, %v1619
          %v1626 = vsel %vm535, %v1612, 0
          %v1629 = vsel %vm535, %v1613, 0
          %1631 = vmatprep.subr.mxu0 %v1622
          %1632 = vmatpush1.msra.mxu0 %v1621
          %1633 = vmatprep.subr.mxu0 0.0
          %1634 = vmatpush1.msra.mxu0 0.0
          %1635 = vmatprep.subr.mxu0 0.0
          %1636 = vmatpush1.msra.mxu0 0.0
          %1637 = vmatprep.subr.mxu0 0.0
          %1638 = vmatpush1.msra.mxu0 0.0
          %1639 = vmatprep.subr.mxu0 0.0
          %1640 = vmatpush1.msra.mxu0 0.0
          %1641 = vmatprep.subr.mxu0 0.0
          %1642 = vmatpush1.msra.mxu0 0.0
          %1643 = vmatprep.subr.mxu0 0.0
          %1644 = vmatpush1.msra.mxu0 0.0
          %1645 = vmatprep.subr.mxu0 0.0
          %1646 = vmatpush1.msra.mxu0 0.0
          %1647 = vmatprep.subr.mxu0 0.0
          %1648 = vmatpush1.msra.mxu0 0.0
          %1649 = vmatprep.subr.mxu0 0.0
          %1650 = vmatpush1.msra.mxu0 0.0
          %1651 = vmatprep.subr.mxu0 0.0
          %1652 = vmatpush1.msra.mxu0 0.0
          %1653 = vmatprep.subr.mxu0 0.0
          %1654 = vmatpush1.msra.mxu0 0.0
          %1655 = vmatprep.subr.mxu0 0.0
          %1656 = vmatpush1.msra.mxu0 0.0
          %1657 = vmatprep.subr.mxu0 0.0
          %1658 = vmatpush1.msra.mxu0 0.0
          %1659 = vmatprep.subr.mxu0 0.0
          %1660 = vmatpush1.msra.mxu0 0.0
          %1661 = vmatprep.subr.mxu0 0.0
          %1662 = vmatpush1.msra.mxu0 0.0
          %1663 = vmatprep.subr.mxu0 0.0
          %1664 = vmatpush1.msra.mxu0 0.0
          %1665 = vmatprep.subr.mxu0 0.0
          %1666 = vmatpush1.msra.mxu0 0.0
          %1667 = vmatprep.subr.mxu0 0.0
          %1668 = vmatpush1.msra.mxu0 0.0
          %1669 = vmatprep.subr.mxu0 0.0
          %1670 = vmatpush1.msra.mxu0 0.0
          %1671 = vmatprep.subr.mxu0 0.0
          %1672 = vmatpush1.msra.mxu0 0.0
          %1673 = vmatprep.subr.mxu0 0.0
          %1674 = vmatpush1.msra.mxu0 0.0
          %1675 = vmatprep.subr.mxu0 0.0
          %1676 = vmatpush1.msra.mxu0 0.0
          %1677 = vmatprep.subr.mxu0 0.0
          %1678 = vmatpush1.msra.mxu0 0.0
          %1679 = vmatprep.subr.mxu0 0.0
          %1680 = vmatpush1.msra.mxu0 0.0
          %1681 = vmatprep.subr.mxu0 0.0
          %1682 = vmatpush1.msra.mxu0 0.0
          %1683 = vmatprep.subr.mxu0 0.0
          %1684 = vmatpush1.msra.mxu0 0.0
          %1685 = vmatprep.subr.mxu0 0.0
          %1686 = vmatpush1.msra.mxu0 0.0
          %1687 = vmatprep.subr.mxu0 0.0
          %1688 = vmatpush1.msra.mxu0 0.0
          %1689 = vmatprep.subr.mxu0 0.0
          %1690 = vmatpush1.msra.mxu0 0.0
          %1691 = vmatprep.subr.mxu0 0.0
          %1692 = vmatpush1.msra.mxu0 0.0
          %1693 = vmatprep.subr.mxu0 0.0
          %1694 = vmatpush1.msra.mxu0 0.0
          %1695 = vmatprep.mubr.f32.mxu0 0.0
          %1696 = vmatmul.mubr.f32.gmra.mrb[0].mxu0 %v1626
          %v1697 = vpop.f32.mrb[0].mxu0
          %v1698 = vadd.f32 0.0, %v1697
          %v1699 = vpop.f32.mrb[0].mxu0
          %v1700 = vadd.f32 0.0, %v1699
          %1701 = vmatprep.mubr.f32.mxu0 0.0
          %1702 = vmatmul.mubr.f32.gmra.mrb[0].mxu0 %v1629
          %v1703 = vpop.f32.mrb[0].mxu0
          %v1704 = vadd.f32 0.0, %v1703
          %v1705 = vpop.f32.mrb[0].mxu0
          %v1706 = vadd.f32 0.0, %v1705
          %1707 = vdwg.mxu0
          %v1708 = vadd.f32 %v1607, %v1698
          %v1709 = vadd.f32 %v1608, %v1700
          %v1710 = vadd.f32 %v1609, %v1704
          %v1711 = vadd.f32 %v1610, %v1706
          %s1712 = scalar_lea.vmem [#allocation13], 192
          %v1713 = vld [vmem:[%s1712] sm:$0xff]
          %v1714 = vld [vmem:[%s1712 + $0x8] sm:$0xff]
          %1715 = vrot.lane.b32.xlu0 %v515, 18
          %v1716 = vpop.permute.xlu0 %1715
          %1717 = vrot.lane.b32.xlu0 %v516, 18
          %v1718 = vpop.permute.xlu0 %1717
          %1719 = vrot.lane.b32.xlu0 %v520, 18
          %v1720 = vpop.permute.xlu0 %1719
          %vm1721 = vcmask 146432
          %v1722 = vsel %vm1721, %v1716, %v1718
          %v1723 = vsel %vm1721, %v1718, %v1720
          %v1727 = vsel %vm535, %v1713, 0
          %v1730 = vsel %vm535, %v1714, 0
          %1732 = vmatprep.subr.mxu0 %v1723
          %1733 = vmatpush1.msra.mxu0 %v1722
          %1734 = vmatprep.subr.mxu0 0.0
          %1735 = vmatpush1.msra.mxu0 0.0
          %1736 = vmatprep.subr.mxu0 0.0
          %1737 = vmatpush1.msra.mxu0 0.0
          %1738 = vmatprep.subr.mxu0 0.0
          %1739 = vmatpush1.msra.mxu0 0.0
          %1740 = vmatprep.subr.mxu0 0.0
          %1741 = vmatpush1.msra.mxu0 0.0
          %1742 = vmatprep.subr.mxu0 0.0
          %1743 = vmatpush1.msra.mxu0 0.0
          %1744 = vmatprep.subr.mxu0 0.0
          %1745 = vmatpush1.msra.mxu0 0.0
          %1746 = vmatprep.subr.mxu0 0.0
          %1747 = vmatpush1.msra.mxu0 0.0
          %1748 = vmatprep.subr.mxu0 0.0
          %1749 = vmatpush1.msra.mxu0 0.0
          %1750 = vmatprep.subr.mxu0 0.0
          %1751 = vmatpush1.msra.mxu0 0.0
          %1752 = vmatprep.subr.mxu0 0.0
          %1753 = vmatpush1.msra.mxu0 0.0
          %1754 = vmatprep.subr.mxu0 0.0
          %1755 = vmatpush1.msra.mxu0 0.0
          %1756 = vmatprep.subr.mxu0 0.0
          %1757 = vmatpush1.msra.mxu0 0.0
          %1758 = vmatprep.subr.mxu0 0.0
          %1759 = vmatpush1.msra.mxu0 0.0
          %1760 = vmatprep.subr.mxu0 0.0
          %1761 = vmatpush1.msra.mxu0 0.0
          %1762 = vmatprep.subr.mxu0 0.0
          %1763 = vmatpush1.msra.mxu0 0.0
          %1764 = vmatprep.subr.mxu0 0.0
          %1765 = vmatpush1.msra.mxu0 0.0
          %1766 = vmatprep.subr.mxu0 0.0
          %1767 = vmatpush1.msra.mxu0 0.0
          %1768 = vmatprep.subr.mxu0 0.0
          %1769 = vmatpush1.msra.mxu0 0.0
          %1770 = vmatprep.subr.mxu0 0.0
          %1771 = vmatpush1.msra.mxu0 0.0
          %1772 = vmatprep.subr.mxu0 0.0
          %1773 = vmatpush1.msra.mxu0 0.0
          %1774 = vmatprep.subr.mxu0 0.0
          %1775 = vmatpush1.msra.mxu0 0.0
          %1776 = vmatprep.subr.mxu0 0.0
          %1777 = vmatpush1.msra.mxu0 0.0
          %1778 = vmatprep.subr.mxu0 0.0
          %1779 = vmatpush1.msra.mxu0 0.0
          %1780 = vmatprep.subr.mxu0 0.0
          %1781 = vmatpush1.msra.mxu0 0.0
          %1782 = vmatprep.subr.mxu0 0.0
          %1783 = vmatpush1.msra.mxu0 0.0
          %1784 = vmatprep.subr.mxu0 0.0
          %1785 = vmatpush1.msra.mxu0 0.0
          %1786 = vmatprep.subr.mxu0 0.0
          %1787 = vmatpush1.msra.mxu0 0.0
          %1788 = vmatprep.subr.mxu0 0.0
          %1789 = vmatpush1.msra.mxu0 0.0
          %1790 = vmatprep.subr.mxu0 0.0
          %1791 = vmatpush1.msra.mxu0 0.0
          %1792 = vmatprep.subr.mxu0 0.0
          %1793 = vmatpush1.msra.mxu0 0.0
          %1794 = vmatprep.subr.mxu0 0.0
          %1795 = vmatpush1.msra.mxu0 0.0
          %1796 = vmatprep.mubr.f32.mxu0 0.0
          %1797 = vmatmul.mubr.f32.gmra.mrb[0].mxu0 %v1727
          %v1798 = vpop.f32.mrb[0].mxu0
          %v1799 = vadd.f32 0.0, %v1798
          %v1800 = vpop.f32.mrb[0].mxu0
          %v1801 = vadd.f32 0.0, %v1800
          %1802 = vmatprep.mubr.f32.mxu0 0.0
          %1803 = vmatmul.mubr.f32.gmra.mrb[0].mxu0 %v1730
          %v1804 = vpop.f32.mrb[0].mxu0
          %v1805 = vadd.f32 0.0, %v1804
          %v1806 = vpop.f32.mrb[0].mxu0
          %v1807 = vadd.f32 0.0, %v1806
          %1808 = vdwg.mxu0
          %v1809 = vadd.f32 %v1708, %v1799
          %v1810 = vadd.f32 %v1709, %v1801
          %v1811 = vadd.f32 %v1710, %v1805
          %v1812 = vadd.f32 %v1711, %v1807
          %s1813 = scalar_lea.vmem [#allocation13], 208
          %v1814 = vld [vmem:[%s1813] sm:$0xff]
          %v1815 = vld [vmem:[%s1813 + $0x8] sm:$0xff]
          %1816 = vrot.lane.b32.xlu0 %v515, 17
          %v1817 = vpop.permute.xlu0 %1816
          %1818 = vrot.lane.b32.xlu0 %v516, 17
          %v1819 = vpop.permute.xlu0 %1818
          %1820 = vrot.lane.b32.xlu0 %v520, 17
          %v1821 = vpop.permute.xlu0 %1820
          %vm1822 = vcmask 138240
          %v1823 = vsel %vm1822, %v1817, %v1819
          %v1824 = vsel %vm1822, %v1819, %v1821
          %v1828 = vsel %vm535, %v1814, 0
          %v1831 = vsel %vm535, %v1815, 0
          %1833 = vmatprep.subr.mxu0 %v1824
          %1834 = vmatpush1.msra.mxu0 %v1823
          %1835 = vmatprep.subr.mxu0 0.0
          %1836 = vmatpush1.msra.mxu0 0.0
          %1837 = vmatprep.subr.mxu0 0.0
          %1838 = vmatpush1.msra.mxu0 0.0
          %1839 = vmatprep.subr.mxu0 0.0
          %1840 = vmatpush1.msra.mxu0 0.0
          %1841 = vmatprep.subr.mxu0 0.0
          %1842 = vmatpush1.msra.mxu0 0.0
          %1843 = vmatprep.subr.mxu0 0.0
          %1844 = vmatpush1.msra.mxu0 0.0
          %1845 = vmatprep.subr.mxu0 0.0
          %1846 = vmatpush1.msra.mxu0 0.0
          %1847 = vmatprep.subr.mxu0 0.0
          %1848 = vmatpush1.msra.mxu0 0.0
          %1849 = vmatprep.subr.mxu0 0.0
          %1850 = vmatpush1.msra.mxu0 0.0
          %1851 = vmatprep.subr.mxu0 0.0
          %1852 = vmatpush1.msra.mxu0 0.0
          %1853 = vmatprep.subr.mxu0 0.0
          %1854 = vmatpush1.msra.mxu0 0.0
          %1855 = vmatprep.subr.mxu0 0.0
          %1856 = vmatpush1.msra.mxu0 0.0
          %1857 = vmatprep.subr.mxu0 0.0
          %1858 = vmatpush1.msra.mxu0 0.0
          %1859 = vmatprep.subr.mxu0 0.0
          %1860 = vmatpush1.msra.mxu0 0.0
          %1861 = vmatprep.subr.mxu0 0.0
          %1862 = vmatpush1.msra.mxu0 0.0
          %1863 = vmatprep.subr.mxu0 0.0
          %1864 = vmatpush1.msra.mxu0 0.0
          %1865 = vmatprep.subr.mxu0 0.0
          %1866 = vmatpush1.msra.mxu0 0.0
          %1867 = vmatprep.subr.mxu0 0.0
          %1868 = vmatpush1.msra.mxu0 0.0
          %1869 = vmatprep.subr.mxu0 0.0
          %1870 = vmatpush1.msra.mxu0 0.0
          %1871 = vmatprep.subr.mxu0 0.0
          %1872 = vmatpush1.msra.mxu0 0.0
          %1873 = vmatprep.subr.mxu0 0.0
          %1874 = vmatpush1.msra.mxu0 0.0
          %1875 = vmatprep.subr.mxu0 0.0
          %1876 = vmatpush1.msra.mxu0 0.0
          %1877 = vmatprep.subr.mxu0 0.0
          %1878 = vmatpush1.msra.mxu0 0.0
          %1879 = vmatprep.subr.mxu0 0.0
          %1880 = vmatpush1.msra.mxu0 0.0
          %1881 = vmatprep.subr.mxu0 0.0
          %1882 = vmatpush1.msra.mxu0 0.0
          %1883 = vmatprep.subr.mxu0 0.0
          %1884 = vmatpush1.msra.mxu0 0.0
          %1885 = vmatprep.subr.mxu0 0.0
          %1886 = vmatpush1.msra.mxu0 0.0
          %1887 = vmatprep.subr.mxu0 0.0
          %1888 = vmatpush1.msra.mxu0 0.0
          %1889 = vmatprep.subr.mxu0 0.0
          %1890 = vmatpush1.msra.mxu0 0.0
          %1891 = vmatprep.subr.mxu0 0.0
          %1892 = vmatpush1.msra.mxu0 0.0
          %1893 = vmatprep.subr.mxu0 0.0
          %1894 = vmatpush1.msra.mxu0 0.0
          %1895 = vmatprep.subr.mxu0 0.0
          %1896 = vmatpush1.msra.mxu0 0.0
          %1897 = vmatprep.mubr.f32.mxu0 0.0
          %1898 = vmatmul.mubr.f32.gmra.mrb[0].mxu0 %v1828
          %v1899 = vpop.f32.mrb[0].mxu0
          %v1900 = vadd.f32 0.0, %v1899
          %v1901 = vpop.f32.mrb[0].mxu0
          %v1902 = vadd.f32 0.0, %v1901
          %1903 = vmatprep.mubr.f32.mxu0 0.0
          %1904 = vmatmul.mubr.f32.gmra.mrb[0].mxu0 %v1831
          %v1905 = vpop.f32.mrb[0].mxu0
          %v1906 = vadd.f32 0.0, %v1905
          %v1907 = vpop.f32.mrb[0].mxu0
          %v1908 = vadd.f32 0.0, %v1907
          %1909 = vdwg.mxu0
          %v1910 = vadd.f32 %v1809, %v1900
          %v1911 = vadd.f32 %v1810, %v1902
          %v1912 = vadd.f32 %v1811, %v1906
          %v1913 = vadd.f32 %v1812, %v1908
          %s1914 = scalar_lea.vmem [#allocation13], 224
          %v1915 = vld [vmem:[%s1914] sm:$0xff]
          %v1916 = vld [vmem:[%s1914 + $0x8] sm:$0xff]
          %1917 = vrot.lane.b32.xlu0 %v515, 16
          %v1918 = vpop.permute.xlu0 %1917
          %1919 = vrot.lane.b32.xlu0 %v516, 16
          %v1920 = vpop.permute.xlu0 %1919
          %1921 = vrot.lane.b32.xlu0 %v520, 16
          %v1922 = vpop.permute.xlu0 %1921
          %vm1923 = vcmask 130048
          %v1924 = vsel %vm1923, %v1918, %v1920
          %v1925 = vsel %vm1923, %v1920, %v1922
          %v1929 = vsel %vm535, %v1915, 0
          %v1932 = vsel %vm535, %v1916, 0
          %1934 = vmatprep.subr.mxu0 %v1925
          %1935 = vmatpush1.msra.mxu0 %v1924
          %1936 = vmatprep.subr.mxu0 0.0
          %1937 = vmatpush1.msra.mxu0 0.0
          %1938 = vmatprep.subr.mxu0 0.0
          %1939 = vmatpush1.msra.mxu0 0.0
          %1940 = vmatprep.subr.mxu0 0.0
          %1941 = vmatpush1.msra.mxu0 0.0
          %1942 = vmatprep.subr.mxu0 0.0
          %1943 = vmatpush1.msra.mxu0 0.0
          %1944 = vmatprep.subr.mxu0 0.0
          %1945 = vmatpush1.msra.mxu0 0.0
          %1946 = vmatprep.subr.mxu0 0.0
          %1947 = vmatpush1.msra.mxu0 0.0
          %1948 = vmatprep.subr.mxu0 0.0
          %1949 = vmatpush1.msra.mxu0 0.0
          %1950 = vmatprep.subr.mxu0 0.0
          %1951 = vmatpush1.msra.mxu0 0.0
          %1952 = vmatprep.subr.mxu0 0.0
          %1953 = vmatpush1.msra.mxu0 0.0
          %1954 = vmatprep.subr.mxu0 0.0
          %1955 = vmatpush1.msra.mxu0 0.0
          %1956 = vmatprep.subr.mxu0 0.0
          %1957 = vmatpush1.msra.mxu0 0.0
          %1958 = vmatprep.subr.mxu0 0.0
          %1959 = vmatpush1.msra.mxu0 0.0
          %1960 = vmatprep.subr.mxu0 0.0
          %1961 = vmatpush1.msra.mxu0 0.0
          %1962 = vmatprep.subr.mxu0 0.0
          %1963 = vmatpush1.msra.mxu0 0.0
          %1964 = vmatprep.subr.mxu0 0.0
          %1965 = vmatpush1.msra.mxu0 0.0
          %1966 = vmatprep.subr.mxu0 0.0
          %1967 = vmatpush1.msra.mxu0 0.0
          %1968 = vmatprep.subr.mxu0 0.0
          %1969 = vmatpush1.msra.mxu0 0.0
          %1970 = vmatprep.subr.mxu0 0.0
          %1971 = vmatpush1.msra.mxu0 0.0
          %1972 = vmatprep.subr.mxu0 0.0
          %1973 = vmatpush1.msra.mxu0 0.0
          %1974 = vmatprep.subr.mxu0 0.0
          %1975 = vmatpush1.msra.mxu0 0.0
          %1976 = vmatprep.subr.mxu0 0.0
          %1977 = vmatpush1.msra.mxu0 0.0
          %1978 = vmatprep.subr.mxu0 0.0
          %1979 = vmatpush1.msra.mxu0 0.0
          %1980 = vmatprep.subr.mxu0 0.0
          %1981 = vmatpush1.msra.mxu0 0.0
          %1982 = vmatprep.subr.mxu0 0.0
          %1983 = vmatpush1.msra.mxu0 0.0
          %1984 = vmatprep.subr.mxu0 0.0
          %1985 = vmatpush1.msra.mxu0 0.0
          %1986 = vmatprep.subr.mxu0 0.0
          %1987 = vmatpush1.msra.mxu0 0.0
          %1988 = vmatprep.subr.mxu0 0.0
          %1989 = vmatpush1.msra.mxu0 0.0
          %1990 = vmatprep.subr.mxu0 0.0
          %1991 = vmatpush1.msra.mxu0 0.0
          %1992 = vmatprep.subr.mxu0 0.0
          %1993 = vmatpush1.msra.mxu0 0.0
          %1994 = vmatprep.subr.mxu0 0.0
          %1995 = vmatpush1.msra.mxu0 0.0
          %1996 = vmatprep.subr.mxu0 0.0
          %1997 = vmatpush1.msra.mxu0 0.0
          %1998 = vmatprep.mubr.f32.mxu0 0.0
          %1999 = vmatmul.mubr.f32.gmra.mrb[0].mxu0 %v1929
          %v2000 = vpop.f32.mrb[0].mxu0
          %v2001 = vadd.f32 0.0, %v2000
          %v2002 = vpop.f32.mrb[0].mxu0
          %v2003 = vadd.f32 0.0, %v2002
          %2004 = vmatprep.mubr.f32.mxu0 0.0
          %2005 = vmatmul.mubr.f32.gmra.mrb[0].mxu0 %v1932
          %v2006 = vpop.f32.mrb[0].mxu0
          %v2007 = vadd.f32 0.0, %v2006
          %v2008 = vpop.f32.mrb[0].mxu0
          %v2009 = vadd.f32 0.0, %v2008
          %2010 = vdwg.mxu0
          %v2011 = vadd.f32 %v1910, %v2001
          %v2012 = vadd.f32 %v1911, %v2003
          %v2013 = vadd.f32 %v1912, %v2007
          %v2014 = vadd.f32 %v1913, %v2009
          %s2015 = scalar_lea.vmem [#allocation13], 240
          %v2016 = vld [vmem:[%s2015] sm:$0xff]
          %v2017 = vld [vmem:[%s2015 + $0x8] sm:$0xff]
          %2018 = vrot.lane.b32.xlu0 %v515, 8
          %v2019 = vpop.permute.xlu0 %2018
          %2020 = vrot.lane.b32.xlu0 %v516, 8
          %v2021 = vpop.permute.xlu0 %2020
          %2022 = vrot.lane.b32.xlu0 %v520, 8
          %v2023 = vpop.permute.xlu0 %2022
          %v2024 = vsel %vm535, %v2019, %v2021
          %v2025 = vsel %vm535, %v2021, %v2023
          %v2029 = vsel %vm535, %v2016, 0
          %v2032 = vsel %vm535, %v2017, 0
          %2034 = vmatprep.subr.mxu0 %v2025
          %2035 = vmatpush1.msra.mxu0 %v2024
          %2036 = vmatprep.subr.mxu0 0.0
          %2037 = vmatpush1.msra.mxu0 0.0
          %2038 = vmatprep.subr.mxu0 0.0
          %2039 = vmatpush1.msra.mxu0 0.0
          %2040 = vmatprep.subr.mxu0 0.0
          %2041 = vmatpush1.msra.mxu0 0.0
          %2042 = vmatprep.subr.mxu0 0.0
          %2043 = vmatpush1.msra.mxu0 0.0
          %2044 = vmatprep.subr.mxu0 0.0
          %2045 = vmatpush1.msra.mxu0 0.0
          %2046 = vmatprep.subr.mxu0 0.0
          %2047 = vmatpush1.msra.mxu0 0.0
          %2048 = vmatprep.subr.mxu0 0.0
          %2049 = vmatpush1.msra.mxu0 0.0
          %2050 = vmatprep.subr.mxu0 0.0
          %2051 = vmatpush1.msra.mxu0 0.0
          %2052 = vmatprep.subr.mxu0 0.0
          %2053 = vmatpush1.msra.mxu0 0.0
          %2054 = vmatprep.subr.mxu0 0.0
          %2055 = vmatpush1.msra.mxu0 0.0
          %2056 = vmatprep.subr.mxu0 0.0
          %2057 = vmatpush1.msra.mxu0 0.0
          %2058 = vmatprep.subr.mxu0 0.0
          %2059 = vmatpush1.msra.mxu0 0.0
          %2060 = vmatprep.subr.mxu0 0.0
          %2061 = vmatpush1.msra.mxu0 0.0
          %2062 = vmatprep.subr.mxu0 0.0
          %2063 = vmatpush1.msra.mxu0 0.0
          %2064 = vmatprep.subr.mxu0 0.0
          %2065 = vmatpush1.msra.mxu0 0.0
          %2066 = vmatprep.subr.mxu0 0.0
          %2067 = vmatpush1.msra.mxu0 0.0
          %2068 = vmatprep.subr.mxu0 0.0
          %2069 = vmatpush1.msra.mxu0 0.0
          %2070 = vmatprep.subr.mxu0 0.0
          %2071 = vmatpush1.msra.mxu0 0.0
          %2072 = vmatprep.subr.mxu0 0.0
          %2073 = vmatpush1.msra.mxu0 0.0
          %2074 = vmatprep.subr.mxu0 0.0
          %2075 = vmatpush1.msra.mxu0 0.0
          %2076 = vmatprep.subr.mxu0 0.0
          %2077 = vmatpush1.msra.mxu0 0.0
          %2078 = vmatprep.subr.mxu0 0.0
          %2079 = vmatpush1.msra.mxu0 0.0
          %2080 = vmatprep.subr.mxu0 0.0
          %2081 = vmatpush1.msra.mxu0 0.0
          %2082 = vmatprep.subr.mxu0 0.0
          %2083 = vmatpush1.msra.mxu0 0.0
          %2084 = vmatprep.subr.mxu0 0.0
          %2085 = vmatpush1.msra.mxu0 0.0
          %2086 = vmatprep.subr.mxu0 0.0
          %2087 = vmatpush1.msra.mxu0 0.0
          %2088 = vmatprep.subr.mxu0 0.0
          %2089 = vmatpush1.msra.mxu0 0.0
          %2090 = vmatprep.subr.mxu0 0.0
          %2091 = vmatpush1.msra.mxu0 0.0
          %2092 = vmatprep.subr.mxu0 0.0
          %2093 = vmatpush1.msra.mxu0 0.0
          %2094 = vmatprep.subr.mxu0 0.0
          %2095 = vmatpush1.msra.mxu0 0.0
          %2096 = vmatprep.subr.mxu0 0.0
          %2097 = vmatpush1.msra.mxu0 0.0
          %2098 = vmatprep.mubr.f32.mxu0 0.0
          %2099 = vmatmul.mubr.f32.gmra.mrb[0].mxu0 %v2029
          %v2100 = vpop.f32.mrb[0].mxu0
          %v2101 = vadd.f32 0.0, %v2100
          %v2102 = vpop.f32.mrb[0].mxu0
          %v2103 = vadd.f32 0.0, %v2102
          %2104 = vmatprep.mubr.f32.mxu0 0.0
          %2105 = vmatmul.mubr.f32.gmra.mrb[0].mxu0 %v2032
          %v2106 = vpop.f32.mrb[0].mxu0
          %v2107 = vadd.f32 0.0, %v2106
          %v2108 = vpop.f32.mrb[0].mxu0
          %v2109 = vadd.f32 0.0, %v2108
          %2110 = vdwg.mxu0
          %v2111 = vadd.f32 %v2011, %v2101
          %v2112 = vadd.f32 %v2012, %v2103
          %v2113 = vadd.f32 %v2013, %v2107
          %v2114 = vadd.f32 %v2014, %v2109
          %s2115 = scalar_lea.vmem [#allocation13], 256
          %v2116 = vld [vmem:[%s2115] sm:$0xff]
          %v2117 = vld [vmem:[%s2115 + $0x8] sm:$0xff]
          %2118 = vrot.lane.b32.xlu0 %v515, 7
          %v2119 = vpop.permute.xlu0 %2118
          %2120 = vrot.lane.b32.xlu0 %v516, 7
          %v2121 = vpop.permute.xlu0 %2120
          %2122 = vrot.lane.b32.xlu0 %v520, 7
          %v2123 = vpop.permute.xlu0 %2122
          %vm2124 = vcmask 56320
          %v2125 = vsel %vm2124, %v2119, %v2121
          %v2126 = vsel %vm2124, %v2121, %v2123
          %v2130 = vsel %vm535, %v2116, 0
          %v2133 = vsel %vm535, %v2117, 0
          %2135 = vmatprep.subr.mxu0 %v2126
          %2136 = vmatpush1.msra.mxu0 %v2125
          %2137 = vmatprep.subr.mxu0 0.0
          %2138 = vmatpush1.msra.mxu0 0.0
          %2139 = vmatprep.subr.mxu0 0.0
          %2140 = vmatpush1.msra.mxu0 0.0
          %2141 = vmatprep.subr.mxu0 0.0
          %2142 = vmatpush1.msra.mxu0 0.0
          %2143 = vmatprep.subr.mxu0 0.0
          %2144 = vmatpush1.msra.mxu0 0.0
          %2145 = vmatprep.subr.mxu0 0.0
          %2146 = vmatpush1.msra.mxu0 0.0
          %2147 = vmatprep.subr.mxu0 0.0
          %2148 = vmatpush1.msra.mxu0 0.0
          %2149 = vmatprep.subr.mxu0 0.0
          %2150 = vmatpush1.msra.mxu0 0.0
          %2151 = vmatprep.subr.mxu0 0.0
          %2152 = vmatpush1.msra.mxu0 0.0
          %2153 = vmatprep.subr.mxu0 0.0
          %2154 = vmatpush1.msra.mxu0 0.0
          %2155 = vmatprep.subr.mxu0 0.0
          %2156 = vmatpush1.msra.mxu0 0.0
          %2157 = vmatprep.subr.mxu0 0.0
          %2158 = vmatpush1.msra.mxu0 0.0
          %2159 = vmatprep.subr.mxu0 0.0
          %2160 = vmatpush1.msra.mxu0 0.0
          %2161 = vmatprep.subr.mxu0 0.0
          %2162 = vmatpush1.msra.mxu0 0.0
          %2163 = vmatprep.subr.mxu0 0.0
          %2164 = vmatpush1.msra.mxu0 0.0
          %2165 = vmatprep.subr.mxu0 0.0
          %2166 = vmatpush1.msra.mxu0 0.0
          %2167 = vmatprep.subr.mxu0 0.0
          %2168 = vmatpush1.msra.mxu0 0.0
          %2169 = vmatprep.subr.mxu0 0.0
          %2170 = vmatpush1.msra.mxu0 0.0
          %2171 = vmatprep.subr.mxu0 0.0
          %2172 = vmatpush1.msra.mxu0 0.0
          %2173 = vmatprep.subr.mxu0 0.0
          %2174 = vmatpush1.msra.mxu0 0.0
          %2175 = vmatprep.subr.mxu0 0.0
          %2176 = vmatpush1.msra.mxu0 0.0
          %2177 = vmatprep.subr.mxu0 0.0
          %2178 = vmatpush1.msra.mxu0 0.0
          %2179 = vmatprep.subr.mxu0 0.0
          %2180 = vmatpush1.msra.mxu0 0.0
          %2181 = vmatprep.subr.mxu0 0.0
          %2182 = vmatpush1.msra.mxu0 0.0
          %2183 = vmatprep.subr.mxu0 0.0
          %2184 = vmatpush1.msra.mxu0 0.0
          %2185 = vmatprep.subr.mxu0 0.0
          %2186 = vmatpush1.msra.mxu0 0.0
          %2187 = vmatprep.subr.mxu0 0.0
          %2188 = vmatpush1.msra.mxu0 0.0
          %2189 = vmatprep.subr.mxu0 0.0
          %2190 = vmatpush1.msra.mxu0 0.0
          %2191 = vmatprep.subr.mxu0 0.0
          %2192 = vmatpush1.msra.mxu0 0.0
          %2193 = vmatprep.subr.mxu0 0.0
          %2194 = vmatpush1.msra.mxu0 0.0
          %2195 = vmatprep.subr.mxu0 0.0
          %2196 = vmatpush1.msra.mxu0 0.0
          %2197 = vmatprep.subr.mxu0 0.0
          %2198 = vmatpush1.msra.mxu0 0.0
          %2199 = vmatprep.mubr.f32.mxu0 0.0
          %2200 = vmatmul.mubr.f32.gmra.mrb[0].mxu0 %v2130
          %v2201 = vpop.f32.mrb[0].mxu0
          %v2202 = vadd.f32 0.0, %v2201
          %v2203 = vpop.f32.mrb[0].mxu0
          %v2204 = vadd.f32 0.0, %v2203
          %2205 = vmatprep.mubr.f32.mxu0 0.0
          %2206 = vmatmul.mubr.f32.gmra.mrb[0].mxu0 %v2133
          %v2207 = vpop.f32.mrb[0].mxu0
          %v2208 = vadd.f32 0.0, %v2207
          %v2209 = vpop.f32.mrb[0].mxu0
          %v2210 = vadd.f32 0.0, %v2209
          %2211 = vdwg.mxu0
          %v2212 = vadd.f32 %v2111, %v2202
          %v2213 = vadd.f32 %v2112, %v2204
          %v2214 = vadd.f32 %v2113, %v2208
          %v2215 = vadd.f32 %v2114, %v2210
          %s2216 = scalar_lea.vmem [#allocation13], 272
          %v2217 = vld [vmem:[%s2216] sm:$0xff]
          %v2218 = vld [vmem:[%s2216 + $0x8] sm:$0xff]
          %2219 = vrot.lane.b32.xlu0 %v515, 6
          %v2220 = vpop.permute.xlu0 %2219
          %2221 = vrot.lane.b32.xlu0 %v516, 6
          %v2222 = vpop.permute.xlu0 %2221
          %2223 = vrot.lane.b32.xlu0 %v520, 6
          %v2224 = vpop.permute.xlu0 %2223
          %vm2225 = vcmask 48128
          %v2226 = vsel %vm2225, %v2220, %v2222
          %v2227 = vsel %vm2225, %v2222, %v2224
          %v2231 = vsel %vm535, %v2217, 0
          %v2234 = vsel %vm535, %v2218, 0
          %2236 = vmatprep.subr.mxu0 %v2227
          %2237 = vmatpush1.msra.mxu0 %v2226
          %2238 = vmatprep.subr.mxu0 0.0
          %2239 = vmatpush1.msra.mxu0 0.0
          %2240 = vmatprep.subr.mxu0 0.0
          %2241 = vmatpush1.msra.mxu0 0.0
          %2242 = vmatprep.subr.mxu0 0.0
          %2243 = vmatpush1.msra.mxu0 0.0
          %2244 = vmatprep.subr.mxu0 0.0
          %2245 = vmatpush1.msra.mxu0 0.0
          %2246 = vmatprep.subr.mxu0 0.0
          %2247 = vmatpush1.msra.mxu0 0.0
          %2248 = vmatprep.subr.mxu0 0.0
          %2249 = vmatpush1.msra.mxu0 0.0
          %2250 = vmatprep.subr.mxu0 0.0
          %2251 = vmatpush1.msra.mxu0 0.0
          %2252 = vmatprep.subr.mxu0 0.0
          %2253 = vmatpush1.msra.mxu0 0.0
          %2254 = vmatprep.subr.mxu0 0.0
          %2255 = vmatpush1.msra.mxu0 0.0
          %2256 = vmatprep.subr.mxu0 0.0
          %2257 = vmatpush1.msra.mxu0 0.0
          %2258 = vmatprep.subr.mxu0 0.0
          %2259 = vmatpush1.msra.mxu0 0.0
          %2260 = vmatprep.subr.mxu0 0.0
          %2261 = vmatpush1.msra.mxu0 0.0
          %2262 = vmatprep.subr.mxu0 0.0
          %2263 = vmatpush1.msra.mxu0 0.0
          %2264 = vmatprep.subr.mxu0 0.0
          %2265 = vmatpush1.msra.mxu0 0.0
          %2266 = vmatprep.subr.mxu0 0.0
          %2267 = vmatpush1.msra.mxu0 0.0
          %2268 = vmatprep.subr.mxu0 0.0
          %2269 = vmatpush1.msra.mxu0 0.0
          %2270 = vmatprep.subr.mxu0 0.0
          %2271 = vmatpush1.msra.mxu0 0.0
          %2272 = vmatprep.subr.mxu0 0.0
          %2273 = vmatpush1.msra.mxu0 0.0
          %2274 = vmatprep.subr.mxu0 0.0
          %2275 = vmatpush1.msra.mxu0 0.0
          %2276 = vmatprep.subr.mxu0 0.0
          %2277 = vmatpush1.msra.mxu0 0.0
          %2278 = vmatprep.subr.mxu0 0.0
          %2279 = vmatpush1.msra.mxu0 0.0
          %2280 = vmatprep.subr.mxu0 0.0
          %2281 = vmatpush1.msra.mxu0 0.0
          %2282 = vmatprep.subr.mxu0 0.0
          %2283 = vmatpush1.msra.mxu0 0.0
          %2284 = vmatprep.subr.mxu0 0.0
          %2285 = vmatpush1.msra.mxu0 0.0
          %2286 = vmatprep.subr.mxu0 0.0
          %2287 = vmatpush1.msra.mxu0 0.0
          %2288 = vmatprep.subr.mxu0 0.0
          %2289 = vmatpush1.msra.mxu0 0.0
          %2290 = vmatprep.subr.mxu0 0.0
          %2291 = vmatpush1.msra.mxu0 0.0
          %2292 = vmatprep.subr.mxu0 0.0
          %2293 = vmatpush1.msra.mxu0 0.0
          %2294 = vmatprep.subr.mxu0 0.0
          %2295 = vmatpush1.msra.mxu0 0.0
          %2296 = vmatprep.subr.mxu0 0.0
          %2297 = vmatpush1.msra.mxu0 0.0
          %2298 = vmatprep.subr.mxu0 0.0
          %2299 = vmatpush1.msra.mxu0 0.0
          %2300 = vmatprep.mubr.f32.mxu0 0.0
          %2301 = vmatmul.mubr.f32.gmra.mrb[0].mxu0 %v2231
          %v2302 = vpop.f32.mrb[0].mxu0
          %v2303 = vadd.f32 0.0, %v2302
          %v2304 = vpop.f32.mrb[0].mxu0
          %v2305 = vadd.f32 0.0, %v2304
          %2306 = vmatprep.mubr.f32.mxu0 0.0
          %2307 = vmatmul.mubr.f32.gmra.mrb[0].mxu0 %v2234
          %v2308 = vpop.f32.mrb[0].mxu0
          %v2309 = vadd.f32 0.0, %v2308
          %v2310 = vpop.f32.mrb[0].mxu0
          %v2311 = vadd.f32 0.0, %v2310
          %2312 = vdwg.mxu0
          %v2313 = vadd.f32 %v2212, %v2303
          %v2314 = vadd.f32 %v2213, %v2305
          %v2315 = vadd.f32 %v2214, %v2309
          %v2316 = vadd.f32 %v2215, %v2311
          %s2317 = scalar_lea.vmem [#allocation13], 288
          %v2318 = vld [vmem:[%s2317] sm:$0xff]
          %v2319 = vld [vmem:[%s2317 + $0x8] sm:$0xff]
          %v2320 = vld [vmem:[#allocation7 + $0x8] sm:$0xff]
          %v2321 = vld [vmem:[#allocation7 + $0x10] sm:$0xff]
          %v2322 = vld [vmem:[#allocation7 + $0x18] sm:$0xff]
          %2326 = vrot.lane.b32.xlu0 %v2320, 56
          %v2327 = vpop.permute.xlu0 %2326
          %2328 = vrot.lane.b32.xlu0 %v2321, 56
          %v2329 = vpop.permute.xlu0 %2328
          %2330 = vrot.lane.b32.xlu0 %v2322, 56
          %v2331 = vpop.permute.xlu0 %2330
          %vm2332 = vcmask 457728
          %v2333 = vsel %vm2332, %v2327, %v2329
          %v2334 = vsel %vm2332, %v2329, %v2331
          %v2338 = vsel %vm535, %v2318, 0
          %v2341 = vsel %vm535, %v2319, 0
          %2343 = vmatprep.subr.mxu0 %v2334
          %2344 = vmatpush1.msra.mxu0 %v2333
          %2345 = vmatprep.subr.mxu0 0.0
          %2346 = vmatpush1.msra.mxu0 0.0
          %2347 = vmatprep.subr.mxu0 0.0
          %2348 = vmatpush1.msra.mxu0 0.0
          %2349 = vmatprep.subr.mxu0 0.0
          %2350 = vmatpush1.msra.mxu0 0.0
          %2351 = vmatprep.subr.mxu0 0.0
          %2352 = vmatpush1.msra.mxu0 0.0
          %2353 = vmatprep.subr.mxu0 0.0
          %2354 = vmatpush1.msra.mxu0 0.0
          %2355 = vmatprep.subr.mxu0 0.0
          %2356 = vmatpush1.msra.mxu0 0.0
          %2357 = vmatprep.subr.mxu0 0.0
          %2358 = vmatpush1.msra.mxu0 0.0
          %2359 = vmatprep.subr.mxu0 0.0
          %2360 = vmatpush1.msra.mxu0 0.0
          %2361 = vmatprep.subr.mxu0 0.0
          %2362 = vmatpush1.msra.mxu0 0.0
          %2363 = vmatprep.subr.mxu0 0.0
          %2364 = vmatpush1.msra.mxu0 0.0
          %2365 = vmatprep.subr.mxu0 0.0
          %2366 = vmatpush1.msra.mxu0 0.0
          %2367 = vmatprep.subr.mxu0 0.0
          %2368 = vmatpush1.msra.mxu0 0.0
          %2369 = vmatprep.subr.mxu0 0.0
          %2370 = vmatpush1.msra.mxu0 0.0
          %2371 = vmatprep.subr.mxu0 0.0
          %2372 = vmatpush1.msra.mxu0 0.0
          %2373 = vmatprep.subr.mxu0 0.0
          %2374 = vmatpush1.msra.mxu0 0.0
          %2375 = vmatprep.subr.mxu0 0.0
          %2376 = vmatpush1.msra.mxu0 0.0
          %2377 = vmatprep.subr.mxu0 0.0
          %2378 = vmatpush1.msra.mxu0 0.0
          %2379 = vmatprep.subr.mxu0 0.0
          %2380 = vmatpush1.msra.mxu0 0.0
          %2381 = vmatprep.subr.mxu0 0.0
          %2382 = vmatpush1.msra.mxu0 0.0
          %2383 = vmatprep.subr.mxu0 0.0
          %2384 = vmatpush1.msra.mxu0 0.0
          %2385 = vmatprep.subr.mxu0 0.0
          %2386 = vmatpush1.msra.mxu0 0.0
          %2387 = vmatprep.subr.mxu0 0.0
          %2388 = vmatpush1.msra.mxu0 0.0
          %2389 = vmatprep.subr.mxu0 0.0
          %2390 = vmatpush1.msra.mxu0 0.0
          %2391 = vmatprep.subr.mxu0 0.0
          %2392 = vmatpush1.msra.mxu0 0.0
          %2393 = vmatprep.subr.mxu0 0.0
          %2394 = vmatpush1.msra.mxu0 0.0
          %2395 = vmatprep.subr.mxu0 0.0
          %2396 = vmatpush1.msra.mxu0 0.0
          %2397 = vmatprep.subr.mxu0 0.0
          %2398 = vmatpush1.msra.mxu0 0.0
          %2399 = vmatprep.subr.mxu0 0.0
          %2400 = vmatpush1.msra.mxu0 0.0
          %2401 = vmatprep.subr.mxu0 0.0
          %2402 = vmatpush1.msra.mxu0 0.0
          %2403 = vmatprep.subr.mxu0 0.0
          %2404 = vmatpush1.msra.mxu0 0.0
          %2405 = vmatprep.subr.mxu0 0.0
          %2406 = vmatpush1.msra.mxu0 0.0
          %2407 = vmatprep.mubr.f32.mxu0 0.0
          %2408 = vmatmul.mubr.f32.gmra.mrb[0].mxu0 %v2338
          %v2409 = vpop.f32.mrb[0].mxu0
          %v2410 = vadd.f32 0.0, %v2409
          %v2411 = vpop.f32.mrb[0].mxu0
          %v2412 = vadd.f32 0.0, %v2411
          %2413 = vmatprep.mubr.f32.mxu0 0.0
          %2414 = vmatmul.mubr.f32.gmra.mrb[0].mxu0 %v2341
          %v2415 = vpop.f32.mrb[0].mxu0
          %v2416 = vadd.f32 0.0, %v2415
          %v2417 = vpop.f32.mrb[0].mxu0
          %v2418 = vadd.f32 0.0, %v2417
          %2419 = vdwg.mxu0
          %v2420 = vadd.f32 %v2313, %v2410
          %v2421 = vadd.f32 %v2314, %v2412
          %v2422 = vadd.f32 %v2315, %v2416
          %v2423 = vadd.f32 %v2316, %v2418
          %s2424 = scalar_lea.vmem [#allocation13], 304
          %v2425 = vld [vmem:[%s2424] sm:$0xff]
          %v2426 = vld [vmem:[%s2424 + $0x8] sm:$0xff]
          %2427 = vrot.lane.b32.xlu0 %v2320, 55
          %v2428 = vpop.permute.xlu0 %2427
          %2429 = vrot.lane.b32.xlu0 %v2321, 55
          %v2430 = vpop.permute.xlu0 %2429
          %2431 = vrot.lane.b32.xlu0 %v2322, 55
          %v2432 = vpop.permute.xlu0 %2431
          %vm2433 = vcmask 449536
          %v2434 = vsel %vm2433, %v2428, %v2430
          %v2435 = vsel %vm2433, %v2430, %v2432
          %v2439 = vsel %vm535, %v2425, 0
          %v2442 = vsel %vm535, %v2426, 0
          %2444 = vmatprep.subr.mxu0 %v2435
          %2445 = vmatpush1.msra.mxu0 %v2434
          %2446 = vmatprep.subr.mxu0 0.0
          %2447 = vmatpush1.msra.mxu0 0.0
          %2448 = vmatprep.subr.mxu0 0.0
          %2449 = vmatpush1.msra.mxu0 0.0
          %2450 = vmatprep.subr.mxu0 0.0
          %2451 = vmatpush1.msra.mxu0 0.0
          %2452 = vmatprep.subr.mxu0 0.0
          %2453 = vmatpush1.msra.mxu0 0.0
          %2454 = vmatprep.subr.mxu0 0.0
          %2455 = vmatpush1.msra.mxu0 0.0
          %2456 = vmatprep.subr.mxu0 0.0
          %2457 = vmatpush1.msra.mxu0 0.0
          %2458 = vmatprep.subr.mxu0 0.0
          %2459 = vmatpush1.msra.mxu0 0.0
          %2460 = vmatprep.subr.mxu0 0.0
          %2461 = vmatpush1.msra.mxu0 0.0
          %2462 = vmatprep.subr.mxu0 0.0
          %2463 = vmatpush1.msra.mxu0 0.0
          %2464 = vmatprep.subr.mxu0 0.0
          %2465 = vmatpush1.msra.mxu0 0.0
          %2466 = vmatprep.subr.mxu0 0.0
          %2467 = vmatpush1.msra.mxu0 0.0
          %2468 = vmatprep.subr.mxu0 0.0
          %2469 = vmatpush1.msra.mxu0 0.0
          %2470 = vmatprep.subr.mxu0 0.0
          %2471 = vmatpush1.msra.mxu0 0.0
          %2472 = vmatprep.subr.mxu0 0.0
          %2473 = vmatpush1.msra.mxu0 0.0
          %2474 = vmatprep.subr.mxu0 0.0
          %2475 = vmatpush1.msra.mxu0 0.0
          %2476 = vmatprep.subr.mxu0 0.0
          %2477 = vmatpush1.msra.mxu0 0.0
          %2478 = vmatprep.subr.mxu0 0.0
          %2479 = vmatpush1.msra.mxu0 0.0
          %2480 = vmatprep.subr.mxu0 0.0
          %2481 = vmatpush1.msra.mxu0 0.0
          %2482 = vmatprep.subr.mxu0 0.0
          %2483 = vmatpush1.msra.mxu0 0.0
          %2484 = vmatprep.subr.mxu0 0.0
          %2485 = vmatpush1.msra.mxu0 0.0
          %2486 = vmatprep.subr.mxu0 0.0
          %2487 = vmatpush1.msra.mxu0 0.0
          %2488 = vmatprep.subr.mxu0 0.0
          %2489 = vmatpush1.msra.mxu0 0.0
          %2490 = vmatprep.subr.mxu0 0.0
          %2491 = vmatpush1.msra.mxu0 0.0
          %2492 = vmatprep.subr.mxu0 0.0
          %2493 = vmatpush1.msra.mxu0 0.0
          %2494 = vmatprep.subr.mxu0 0.0
          %2495 = vmatpush1.msra.mxu0 0.0
          %2496 = vmatprep.subr.mxu0 0.0
          %2497 = vmatpush1.msra.mxu0 0.0
          %2498 = vmatprep.subr.mxu0 0.0
          %2499 = vmatpush1.msra.mxu0 0.0
          %2500 = vmatprep.subr.mxu0 0.0
          %2501 = vmatpush1.msra.mxu0 0.0
          %2502 = vmatprep.subr.mxu0 0.0
          %2503 = vmatpush1.msra.mxu0 0.0
          %2504 = vmatprep.subr.mxu0 0.0
          %2505 = vmatpush1.msra.mxu0 0.0
          %2506 = vmatprep.subr.mxu0 0.0
          %2507 = vmatpush1.msra.mxu0 0.0
          %2508 = vmatprep.mubr.f32.mxu0 0.0
          %2509 = vmatmul.mubr.f32.gmra.mrb[0].mxu0 %v2439
          %v2510 = vpop.f32.mrb[0].mxu0
          %v2511 = vadd.f32 0.0, %v2510
          %v2512 = vpop.f32.mrb[0].mxu0
          %v2513 = vadd.f32 0.0, %v2512
          %2514 = vmatprep.mubr.f32.mxu0 0.0
          %2515 = vmatmul.mubr.f32.gmra.mrb[0].mxu0 %v2442
          %v2516 = vpop.f32.mrb[0].mxu0
          %v2517 = vadd.f32 0.0, %v2516
          %v2518 = vpop.f32.mrb[0].mxu0
          %v2519 = vadd.f32 0.0, %v2518
          %2520 = vdwg.mxu0
          %v2521 = vadd.f32 %v2420, %v2511
          %v2522 = vadd.f32 %v2421, %v2513
          %v2523 = vadd.f32 %v2422, %v2517
          %v2524 = vadd.f32 %v2423, %v2519
          %s2525 = scalar_lea.vmem [#allocation13], 320
          %v2526 = vld [vmem:[%s2525] sm:$0xff]
          %v2527 = vld [vmem:[%s2525 + $0x8] sm:$0xff]
          %2528 = vrot.lane.b32.xlu0 %v2320, 54
          %v2529 = vpop.permute.xlu0 %2528
          %2530 = vrot.lane.b32.xlu0 %v2321, 54
          %v2531 = vpop.permute.xlu0 %2530
          %2532 = vrot.lane.b32.xlu0 %v2322, 54
          %v2533 = vpop.permute.xlu0 %2532
          %vm2534 = vcmask 441344
          %v2535 = vsel %vm2534, %v2529, %v2531
          %v2536 = vsel %vm2534, %v2531, %v2533
          %v2540 = vsel %vm535, %v2526, 0
          %v2543 = vsel %vm535, %v2527, 0
          %2545 = vmatprep.subr.mxu0 %v2536
          %2546 = vmatpush1.msra.mxu0 %v2535
          %2547 = vmatprep.subr.mxu0 0.0
          %2548 = vmatpush1.msra.mxu0 0.0
          %2549 = vmatprep.subr.mxu0 0.0
          %2550 = vmatpush1.msra.mxu0 0.0
          %2551 = vmatprep.subr.mxu0 0.0
          %2552 = vmatpush1.msra.mxu0 0.0
          %2553 = vmatprep.subr.mxu0 0.0
          %2554 = vmatpush1.msra.mxu0 0.0
          %2555 = vmatprep.subr.mxu0 0.0
          %2556 = vmatpush1.msra.mxu0 0.0
          %2557 = vmatprep.subr.mxu0 0.0
          %2558 = vmatpush1.msra.mxu0 0.0
          %2559 = vmatprep.subr.mxu0 0.0
          %2560 = vmatpush1.msra.mxu0 0.0
          %2561 = vmatprep.subr.mxu0 0.0
          %2562 = vmatpush1.msra.mxu0 0.0
          %2563 = vmatprep.subr.mxu0 0.0
          %2564 = vmatpush1.msra.mxu0 0.0
          %2565 = vmatprep.subr.mxu0 0.0
          %2566 = vmatpush1.msra.mxu0 0.0
          %2567 = vmatprep.subr.mxu0 0.0
          %2568 = vmatpush1.msra.mxu0 0.0
          %2569 = vmatprep.subr.mxu0 0.0
          %2570 = vmatpush1.msra.mxu0 0.0
          %2571 = vmatprep.subr.mxu0 0.0
          %2572 = vmatpush1.msra.mxu0 0.0
          %2573 = vmatprep.subr.mxu0 0.0
          %2574 = vmatpush1.msra.mxu0 0.0
          %2575 = vmatprep.subr.mxu0 0.0
          %2576 = vmatpush1.msra.mxu0 0.0
          %2577 = vmatprep.subr.mxu0 0.0
          %2578 = vmatpush1.msra.mxu0 0.0
          %2579 = vmatprep.subr.mxu0 0.0
          %2580 = vmatpush1.msra.mxu0 0.0
          %2581 = vmatprep.subr.mxu0 0.0
          %2582 = vmatpush1.msra.mxu0 0.0
          %2583 = vmatprep.subr.mxu0 0.0
          %2584 = vmatpush1.msra.mxu0 0.0
          %2585 = vmatprep.subr.mxu0 0.0
          %2586 = vmatpush1.msra.mxu0 0.0
          %2587 = vmatprep.subr.mxu0 0.0
          %2588 = vmatpush1.msra.mxu0 0.0
          %2589 = vmatprep.subr.mxu0 0.0
          %2590 = vmatpush1.msra.mxu0 0.0
          %2591 = vmatprep.subr.mxu0 0.0
          %2592 = vmatpush1.msra.mxu0 0.0
          %2593 = vmatprep.subr.mxu0 0.0
          %2594 = vmatpush1.msra.mxu0 0.0
          %2595 = vmatprep.subr.mxu0 0.0
          %2596 = vmatpush1.msra.mxu0 0.0
          %2597 = vmatprep.subr.mxu0 0.0
          %2598 = vmatpush1.msra.mxu0 0.0
          %2599 = vmatprep.subr.mxu0 0.0
          %2600 = vmatpush1.msra.mxu0 0.0
          %2601 = vmatprep.subr.mxu0 0.0
          %2602 = vmatpush1.msra.mxu0 0.0
          %2603 = vmatprep.subr.mxu0 0.0
          %2604 = vmatpush1.msra.mxu0 0.0
          %2605 = vmatprep.subr.mxu0 0.0
          %2606 = vmatpush1.msra.mxu0 0.0
          %2607 = vmatprep.subr.mxu0 0.0
          %2608 = vmatpush1.msra.mxu0 0.0
          %2609 = vmatprep.mubr.f32.mxu0 0.0
          %2610 = vmatmul.mubr.f32.gmra.mrb[0].mxu0 %v2540
          %v2611 = vpop.f32.mrb[0].mxu0
          %v2612 = vadd.f32 0.0, %v2611
          %v2613 = vpop.f32.mrb[0].mxu0
          %v2614 = vadd.f32 0.0, %v2613
          %2615 = vmatprep.mubr.f32.mxu0 0.0
          %2616 = vmatmul.mubr.f32.gmra.mrb[0].mxu0 %v2543
          %v2617 = vpop.f32.mrb[0].mxu0
          %v2618 = vadd.f32 0.0, %v2617
          %v2619 = vpop.f32.mrb[0].mxu0
          %v2620 = vadd.f32 0.0, %v2619
          %2621 = vdwg.mxu0
          %v2622 = vadd.f32 %v2521, %v2612
          %v2623 = vadd.f32 %v2522, %v2614
          %v2624 = vadd.f32 %v2523, %v2618
          %v2625 = vadd.f32 %v2524, %v2620
          %s2626 = scalar_lea.vmem [#allocation13], 336
          %v2627 = vld [vmem:[%s2626] sm:$0xff]
          %v2628 = vld [vmem:[%s2626 + $0x8] sm:$0xff]
          %2629 = vrot.lane.b32.xlu0 %v2320, 46
          %v2630 = vpop.permute.xlu0 %2629
          %2631 = vrot.lane.b32.xlu0 %v2321, 46
          %v2632 = vpop.permute.xlu0 %2631
          %2633 = vrot.lane.b32.xlu0 %v2322, 46
          %v2634 = vpop.permute.xlu0 %2633
          %vm2635 = vcmask 375808
          %v2636 = vsel %vm2635, %v2630, %v2632
          %v2637 = vsel %vm2635, %v2632, %v2634
          %v2641 = vsel %vm535, %v2627, 0
          %v2644 = vsel %vm535, %v2628, 0
          %2646 = vmatprep.subr.mxu0 %v2637
          %2647 = vmatpush1.msra.mxu0 %v2636
          %2648 = vmatprep.subr.mxu0 0.0
          %2649 = vmatpush1.msra.mxu0 0.0
          %2650 = vmatprep.subr.mxu0 0.0
          %2651 = vmatpush1.msra.mxu0 0.0
          %2652 = vmatprep.subr.mxu0 0.0
          %2653 = vmatpush1.msra.mxu0 0.0
          %2654 = vmatprep.subr.mxu0 0.0
          %2655 = vmatpush1.msra.mxu0 0.0
          %2656 = vmatprep.subr.mxu0 0.0
          %2657 = vmatpush1.msra.mxu0 0.0
          %2658 = vmatprep.subr.mxu0 0.0
          %2659 = vmatpush1.msra.mxu0 0.0
          %2660 = vmatprep.subr.mxu0 0.0
          %2661 = vmatpush1.msra.mxu0 0.0
          %2662 = vmatprep.subr.mxu0 0.0
          %2663 = vmatpush1.msra.mxu0 0.0
          %2664 = vmatprep.subr.mxu0 0.0
          %2665 = vmatpush1.msra.mxu0 0.0
          %2666 = vmatprep.subr.mxu0 0.0
          %2667 = vmatpush1.msra.mxu0 0.0
          %2668 = vmatprep.subr.mxu0 0.0
          %2669 = vmatpush1.msra.mxu0 0.0
          %2670 = vmatprep.subr.mxu0 0.0
          %2671 = vmatpush1.msra.mxu0 0.0
          %2672 = vmatprep.subr.mxu0 0.0
          %2673 = vmatpush1.msra.mxu0 0.0
          %2674 = vmatprep.subr.mxu0 0.0
          %2675 = vmatpush1.msra.mxu0 0.0
          %2676 = vmatprep.subr.mxu0 0.0
          %2677 = vmatpush1.msra.mxu0 0.0
          %2678 = vmatprep.subr.mxu0 0.0
          %2679 = vmatpush1.msra.mxu0 0.0
          %2680 = vmatprep.subr.mxu0 0.0
          %2681 = vmatpush1.msra.mxu0 0.0
          %2682 = vmatprep.subr.mxu0 0.0
          %2683 = vmatpush1.msra.mxu0 0.0
          %2684 = vmatprep.subr.mxu0 0.0
          %2685 = vmatpush1.msra.mxu0 0.0
          %2686 = vmatprep.subr.mxu0 0.0
          %2687 = vmatpush1.msra.mxu0 0.0
          %2688 = vmatprep.subr.mxu0 0.0
          %2689 = vmatpush1.msra.mxu0 0.0
          %2690 = vmatprep.subr.mxu0 0.0
          %2691 = vmatpush1.msra.mxu0 0.0
          %2692 = vmatprep.subr.mxu0 0.0
          %2693 = vmatpush1.msra.mxu0 0.0
          %2694 = vmatprep.subr.mxu0 0.0
          %2695 = vmatpush1.msra.mxu0 0.0
          %2696 = vmatprep.subr.mxu0 0.0
          %2697 = vmatpush1.msra.mxu0 0.0
          %2698 = vmatprep.subr.mxu0 0.0
          %2699 = vmatpush1.msra.mxu0 0.0
          %2700 = vmatprep.subr.mxu0 0.0
          %2701 = vmatpush1.msra.mxu0 0.0
          %2702 = vmatprep.subr.mxu0 0.0
          %2703 = vmatpush1.msra.mxu0 0.0
          %2704 = vmatprep.subr.mxu0 0.0
          %2705 = vmatpush1.msra.mxu0 0.0
          %2706 = vmatprep.subr.mxu0 0.0
          %2707 = vmatpush1.msra.mxu0 0.0
          %2708 = vmatprep.subr.mxu0 0.0
          %2709 = vmatpush1.msra.mxu0 0.0
          %2710 = vmatprep.mubr.f32.mxu0 0.0
          %2711 = vmatmul.mubr.f32.gmra.mrb[0].mxu0 %v2641
          %v2712 = vpop.f32.mrb[0].mxu0
          %v2713 = vadd.f32 0.0, %v2712
          %v2714 = vpop.f32.mrb[0].mxu0
          %v2715 = vadd.f32 0.0, %v2714
          %2716 = vmatprep.mubr.f32.mxu0 0.0
          %2717 = vmatmul.mubr.f32.gmra.mrb[0].mxu0 %v2644
          %v2718 = vpop.f32.mrb[0].mxu0
          %v2719 = vadd.f32 0.0, %v2718
          %v2720 = vpop.f32.mrb[0].mxu0
          %v2721 = vadd.f32 0.0, %v2720
          %2722 = vdwg.mxu0
          %v2723 = vadd.f32 %v2622, %v2713
          %v2724 = vadd.f32 %v2623, %v2715
          %v2725 = vadd.f32 %v2624, %v2719
          %v2726 = vadd.f32 %v2625, %v2721
          %s2727 = scalar_lea.vmem [#allocation13], 352
          %v2728 = vld [vmem:[%s2727] sm:$0xff]
          %v2729 = vld [vmem:[%s2727 + $0x8] sm:$0xff]
          %2730 = vrot.lane.b32.xlu0 %v2320, 45
          %v2731 = vpop.permute.xlu0 %2730
          %2732 = vrot.lane.b32.xlu0 %v2321, 45
          %v2733 = vpop.permute.xlu0 %2732
          %2734 = vrot.lane.b32.xlu0 %v2322, 45
          %v2735 = vpop.permute.xlu0 %2734
          %vm2736 = vcmask 367616
          %v2737 = vsel %vm2736, %v2731, %v2733
          %v2738 = vsel %vm2736, %v2733, %v2735
          %v2742 = vsel %vm535, %v2728, 0
          %v2745 = vsel %vm535, %v2729, 0
          %2747 = vmatprep.subr.mxu0 %v2738
          %2748 = vmatpush1.msra.mxu0 %v2737
          %2749 = vmatprep.subr.mxu0 0.0
          %2750 = vmatpush1.msra.mxu0 0.0
          %2751 = vmatprep.subr.mxu0 0.0
          %2752 = vmatpush1.msra.mxu0 0.0
          %2753 = vmatprep.subr.mxu0 0.0
          %2754 = vmatpush1.msra.mxu0 0.0
          %2755 = vmatprep.subr.mxu0 0.0
          %2756 = vmatpush1.msra.mxu0 0.0
          %2757 = vmatprep.subr.mxu0 0.0
          %2758 = vmatpush1.msra.mxu0 0.0
          %2759 = vmatprep.subr.mxu0 0.0
          %2760 = vmatpush1.msra.mxu0 0.0
          %2761 = vmatprep.subr.mxu0 0.0
          %2762 = vmatpush1.msra.mxu0 0.0
          %2763 = vmatprep.subr.mxu0 0.0
          %2764 = vmatpush1.msra.mxu0 0.0
          %2765 = vmatprep.subr.mxu0 0.0
          %2766 = vmatpush1.msra.mxu0 0.0
          %2767 = vmatprep.subr.mxu0 0.0
          %2768 = vmatpush1.msra.mxu0 0.0
          %2769 = vmatprep.subr.mxu0 0.0
          %2770 = vmatpush1.msra.mxu0 0.0
          %2771 = vmatprep.subr.mxu0 0.0
          %2772 = vmatpush1.msra.mxu0 0.0
          %2773 = vmatprep.subr.mxu0 0.0
          %2774 = vmatpush1.msra.mxu0 0.0
          %2775 = vmatprep.subr.mxu0 0.0
          %2776 = vmatpush1.msra.mxu0 0.0
          %2777 = vmatprep.subr.mxu0 0.0
          %2778 = vmatpush1.msra.mxu0 0.0
          %2779 = vmatprep.subr.mxu0 0.0
          %2780 = vmatpush1.msra.mxu0 0.0
          %2781 = vmatprep.subr.mxu0 0.0
          %2782 = vmatpush1.msra.mxu0 0.0
          %2783 = vmatprep.subr.mxu0 0.0
          %2784 = vmatpush1.msra.mxu0 0.0
          %2785 = vmatprep.subr.mxu0 0.0
          %2786 = vmatpush1.msra.mxu0 0.0
          %2787 = vmatprep.subr.mxu0 0.0
          %2788 = vmatpush1.msra.mxu0 0.0
          %2789 = vmatprep.subr.mxu0 0.0
          %2790 = vmatpush1.msra.mxu0 0.0
          %2791 = vmatprep.subr.mxu0 0.0
          %2792 = vmatpush1.msra.mxu0 0.0
          %2793 = vmatprep.subr.mxu0 0.0
          %2794 = vmatpush1.msra.mxu0 0.0
          %2795 = vmatprep.subr.mxu0 0.0
          %2796 = vmatpush1.msra.mxu0 0.0
          %2797 = vmatprep.subr.mxu0 0.0
          %2798 = vmatpush1.msra.mxu0 0.0
          %2799 = vmatprep.subr.mxu0 0.0
          %2800 = vmatpush1.msra.mxu0 0.0
          %2801 = vmatprep.subr.mxu0 0.0
          %2802 = vmatpush1.msra.mxu0 0.0
          %2803 = vmatprep.subr.mxu0 0.0
          %2804 = vmatpush1.msra.mxu0 0.0
          %2805 = vmatprep.subr.mxu0 0.0
          %2806 = vmatpush1.msra.mxu0 0.0
          %2807 = vmatprep.subr.mxu0 0.0
          %2808 = vmatpush1.msra.mxu0 0.0
          %2809 = vmatprep.subr.mxu0 0.0
          %2810 = vmatpush1.msra.mxu0 0.0
          %2811 = vmatprep.mubr.f32.mxu0 0.0
          %2812 = vmatmul.mubr.f32.gmra.mrb[0].mxu0 %v2742
          %v2813 = vpop.f32.mrb[0].mxu0
          %v2814 = vadd.f32 0.0, %v2813
          %v2815 = vpop.f32.mrb[0].mxu0
          %v2816 = vadd.f32 0.0, %v2815
          %2817 = vmatprep.mubr.f32.mxu0 0.0
          %2818 = vmatmul.mubr.f32.gmra.mrb[0].mxu0 %v2745
          %v2819 = vpop.f32.mrb[0].mxu0
          %v2820 = vadd.f32 0.0, %v2819
          %v2821 = vpop.f32.mrb[0].mxu0
          %v2822 = vadd.f32 0.0, %v2821
          %2823 = vdwg.mxu0
          %v2824 = vadd.f32 %v2723, %v2814
          %v2825 = vadd.f32 %v2724, %v2816
          %v2826 = vadd.f32 %v2725, %v2820
          %v2827 = vadd.f32 %v2726, %v2822
          %s2828 = scalar_lea.vmem [#allocation13], 368
          %v2829 = vld [vmem:[%s2828] sm:$0xff]
          %v2830 = vld [vmem:[%s2828 + $0x8] sm:$0xff]
          %2831 = vrot.lane.b32.xlu0 %v2320, 44
          %v2832 = vpop.permute.xlu0 %2831
          %2833 = vrot.lane.b32.xlu0 %v2321, 44
          %v2834 = vpop.permute.xlu0 %2833
          %2835 = vrot.lane.b32.xlu0 %v2322, 44
          %v2836 = vpop.permute.xlu0 %2835
          %vm2837 = vcmask 359424
          %v2838 = vsel %vm2837, %v2832, %v2834
          %v2839 = vsel %vm2837, %v2834, %v2836
          %v2843 = vsel %vm535, %v2829, 0
          %v2846 = vsel %vm535, %v2830, 0
          %2848 = vmatprep.subr.mxu0 %v2839
          %2849 = vmatpush1.msra.mxu0 %v2838
          %2850 = vmatprep.subr.mxu0 0.0
          %2851 = vmatpush1.msra.mxu0 0.0
          %2852 = vmatprep.subr.mxu0 0.0
          %2853 = vmatpush1.msra.mxu0 0.0
          %2854 = vmatprep.subr.mxu0 0.0
          %2855 = vmatpush1.msra.mxu0 0.0
          %2856 = vmatprep.subr.mxu0 0.0
          %2857 = vmatpush1.msra.mxu0 0.0
          %2858 = vmatprep.subr.mxu0 0.0
          %2859 = vmatpush1.msra.mxu0 0.0
          %2860 = vmatprep.subr.mxu0 0.0
          %2861 = vmatpush1.msra.mxu0 0.0
          %2862 = vmatprep.subr.mxu0 0.0
          %2863 = vmatpush1.msra.mxu0 0.0
          %2864 = vmatprep.subr.mxu0 0.0
          %2865 = vmatpush1.msra.mxu0 0.0
          %2866 = vmatprep.subr.mxu0 0.0
          %2867 = vmatpush1.msra.mxu0 0.0
          %2868 = vmatprep.subr.mxu0 0.0
          %2869 = vmatpush1.msra.mxu0 0.0
          %2870 = vmatprep.subr.mxu0 0.0
          %2871 = vmatpush1.msra.mxu0 0.0
          %2872 = vmatprep.subr.mxu0 0.0
          %2873 = vmatpush1.msra.mxu0 0.0
          %2874 = vmatprep.subr.mxu0 0.0
          %2875 = vmatpush1.msra.mxu0 0.0
          %2876 = vmatprep.subr.mxu0 0.0
          %2877 = vmatpush1.msra.mxu0 0.0
          %2878 = vmatprep.subr.mxu0 0.0
          %2879 = vmatpush1.msra.mxu0 0.0
          %2880 = vmatprep.subr.mxu0 0.0
          %2881 = vmatpush1.msra.mxu0 0.0
          %2882 = vmatprep.subr.mxu0 0.0
          %2883 = vmatpush1.msra.mxu0 0.0
          %2884 = vmatprep.subr.mxu0 0.0
          %2885 = vmatpush1.msra.mxu0 0.0
          %2886 = vmatprep.subr.mxu0 0.0
          %2887 = vmatpush1.msra.mxu0 0.0
          %2888 = vmatprep.subr.mxu0 0.0
          %2889 = vmatpush1.msra.mxu0 0.0
          %2890 = vmatprep.subr.mxu0 0.0
          %2891 = vmatpush1.msra.mxu0 0.0
          %2892 = vmatprep.subr.mxu0 0.0
          %2893 = vmatpush1.msra.mxu0 0.0
          %2894 = vmatprep.subr.mxu0 0.0
          %2895 = vmatpush1.msra.mxu0 0.0
          %2896 = vmatprep.subr.mxu0 0.0
          %2897 = vmatpush1.msra.mxu0 0.0
          %2898 = vmatprep.subr.mxu0 0.0
          %2899 = vmatpush1.msra.mxu0 0.0
          %2900 = vmatprep.subr.mxu0 0.0
          %2901 = vmatpush1.msra.mxu0 0.0
          %2902 = vmatprep.subr.mxu0 0.0
          %2903 = vmatpush1.msra.mxu0 0.0
          %2904 = vmatprep.subr.mxu0 0.0
          %2905 = vmatpush1.msra.mxu0 0.0
          %2906 = vmatprep.subr.mxu0 0.0
          %2907 = vmatpush1.msra.mxu0 0.0
          %2908 = vmatprep.subr.mxu0 0.0
          %2909 = vmatpush1.msra.mxu0 0.0
          %2910 = vmatprep.subr.mxu0 0.0
          %2911 = vmatpush1.msra.mxu0 0.0
          %2912 = vmatprep.mubr.f32.mxu0 0.0
          %2913 = vmatmul.mubr.f32.gmra.mrb[0].mxu0 %v2843
          %v2914 = vpop.f32.mrb[0].mxu0
          %v2915 = vadd.f32 0.0, %v2914
          %v2916 = vpop.f32.mrb[0].mxu0
          %v2917 = vadd.f32 0.0, %v2916
          %2918 = vmatprep.mubr.f32.mxu0 0.0
          %2919 = vmatmul.mubr.f32.gmra.mrb[0].mxu0 %v2846
          %v2920 = vpop.f32.mrb[0].mxu0
          %v2921 = vadd.f32 0.0, %v2920
          %v2922 = vpop.f32.mrb[0].mxu0
          %v2923 = vadd.f32 0.0, %v2922
          %2924 = vdwg.mxu0
          %v2925 = vadd.f32 %v2824, %v2915
          %v2926 = vadd.f32 %v2825, %v2917
          %v2927 = vadd.f32 %v2826, %v2921
          %v2928 = vadd.f32 %v2827, %v2923
          %s2929 = scalar_lea.vmem [#allocation13], 384
          %v2930 = vld [vmem:[%s2929] sm:$0xff]
          %v2931 = vld [vmem:[%s2929 + $0x8] sm:$0xff]
          %2932 = vrot.lane.b32.xlu0 %v2320, 36
          %v2933 = vpop.permute.xlu0 %2932
          %2934 = vrot.lane.b32.xlu0 %v2321, 36
          %v2935 = vpop.permute.xlu0 %2934
          %2936 = vrot.lane.b32.xlu0 %v2322, 36
          %v2937 = vpop.permute.xlu0 %2936
          %vm2938 = vcmask 293888
          %v2939 = vsel %vm2938, %v2933, %v2935
          %v2940 = vsel %vm2938, %v2935, %v2937
          %v2944 = vsel %vm535, %v2930, 0
          %v2947 = vsel %vm535, %v2931, 0
          %2949 = vmatprep.subr.mxu0 %v2940
          %2950 = vmatpush1.msra.mxu0 %v2939
          %2951 = vmatprep.subr.mxu0 0.0
          %2952 = vmatpush1.msra.mxu0 0.0
          %2953 = vmatprep.subr.mxu0 0.0
          %2954 = vmatpush1.msra.mxu0 0.0
          %2955 = vmatprep.subr.mxu0 0.0
          %2956 = vmatpush1.msra.mxu0 0.0
          %2957 = vmatprep.subr.mxu0 0.0
          %2958 = vmatpush1.msra.mxu0 0.0
          %2959 = vmatprep.subr.mxu0 0.0
          %2960 = vmatpush1.msra.mxu0 0.0
          %2961 = vmatprep.subr.mxu0 0.0
          %2962 = vmatpush1.msra.mxu0 0.0
          %2963 = vmatprep.subr.mxu0 0.0
          %2964 = vmatpush1.msra.mxu0 0.0
          %2965 = vmatprep.subr.mxu0 0.0
          %2966 = vmatpush1.msra.mxu0 0.0
          %2967 = vmatprep.subr.mxu0 0.0
          %2968 = vmatpush1.msra.mxu0 0.0
          %2969 = vmatprep.subr.mxu0 0.0
          %2970 = vmatpush1.msra.mxu0 0.0
          %2971 = vmatprep.subr.mxu0 0.0
          %2972 = vmatpush1.msra.mxu0 0.0
          %2973 = vmatprep.subr.mxu0 0.0
          %2974 = vmatpush1.msra.mxu0 0.0
          %2975 = vmatprep.subr.mxu0 0.0
          %2976 = vmatpush1.msra.mxu0 0.0
          %2977 = vmatprep.subr.mxu0 0.0
          %2978 = vmatpush1.msra.mxu0 0.0
          %2979 = vmatprep.subr.mxu0 0.0
          %2980 = vmatpush1.msra.mxu0 0.0
          %2981 = vmatprep.subr.mxu0 0.0
          %2982 = vmatpush1.msra.mxu0 0.0
          %2983 = vmatprep.subr.mxu0 0.0
          %2984 = vmatpush1.msra.mxu0 0.0
          %2985 = vmatprep.subr.mxu0 0.0
          %2986 = vmatpush1.msra.mxu0 0.0
          %2987 = vmatprep.subr.mxu0 0.0
          %2988 = vmatpush1.msra.mxu0 0.0
          %2989 = vmatprep.subr.mxu0 0.0
          %2990 = vmatpush1.msra.mxu0 0.0
          %2991 = vmatprep.subr.mxu0 0.0
          %2992 = vmatpush1.msra.mxu0 0.0
          %2993 = vmatprep.subr.mxu0 0.0
          %2994 = vmatpush1.msra.mxu0 0.0
          %2995 = vmatprep.subr.mxu0 0.0
          %2996 = vmatpush1.msra.mxu0 0.0
          %2997 = vmatprep.subr.mxu0 0.0
          %2998 = vmatpush1.msra.mxu0 0.0
          %2999 = vmatprep.subr.mxu0 0.0
          %3000 = vmatpush1.msra.mxu0 0.0
          %3001 = vmatprep.subr.mxu0 0.0
          %3002 = vmatpush1.msra.mxu0 0.0
          %3003 = vmatprep.subr.mxu0 0.0
          %3004 = vmatpush1.msra.mxu0 0.0
          %3005 = vmatprep.subr.mxu0 0.0
          %3006 = vmatpush1.msra.mxu0 0.0
          %3007 = vmatprep.subr.mxu0 0.0
          %3008 = vmatpush1.msra.mxu0 0.0
          %3009 = vmatprep.subr.mxu0 0.0
          %3010 = vmatpush1.msra.mxu0 0.0
          %3011 = vmatprep.subr.mxu0 0.0
          %3012 = vmatpush1.msra.mxu0 0.0
          %3013 = vmatprep.mubr.f32.mxu0 0.0
          %3014 = vmatmul.mubr.f32.gmra.mrb[0].mxu0 %v2944
          %v3015 = vpop.f32.mrb[0].mxu0
          %v3016 = vadd.f32 0.0, %v3015
          %v3017 = vpop.f32.mrb[0].mxu0
          %v3018 = vadd.f32 0.0, %v3017
          %3019 = vmatprep.mubr.f32.mxu0 0.0
          %3020 = vmatmul.mubr.f32.gmra.mrb[0].mxu0 %v2947
          %v3021 = vpop.f32.mrb[0].mxu0
          %v3022 = vadd.f32 0.0, %v3021
          %v3023 = vpop.f32.mrb[0].mxu0
          %v3024 = vadd.f32 0.0, %v3023
          %3025 = vdwg.mxu0
          %v3026 = vadd.f32 %v2925, %v3016
          %v3027 = vadd.f32 %v2926, %v3018
          %v3028 = vadd.f32 %v2927, %v3022
          %v3029 = vadd.f32 %v2928, %v3024
          %s3030 = scalar_lea.vmem [#allocation13], 400
          %v3031 = vld [vmem:[%s3030] sm:$0xff]
          %v3032 = vld [vmem:[%s3030 + $0x8] sm:$0xff]
          %3033 = vrot.lane.b32.xlu0 %v2320, 35
          %v3034 = vpop.permute.xlu0 %3033
          %3035 = vrot.lane.b32.xlu0 %v2321, 35
          %v3036 = vpop.permute.xlu0 %3035
          %3037 = vrot.lane.b32.xlu0 %v2322, 35
          %v3038 = vpop.permute.xlu0 %3037
          %vm3039 = vcmask 285696
          %v3040 = vsel %vm3039, %v3034, %v3036
          %v3041 = vsel %vm3039, %v3036, %v3038
          %v3045 = vsel %vm535, %v3031, 0
          %v3048 = vsel %vm535, %v3032, 0
          %3050 = vmatprep.subr.mxu0 %v3041
          %3051 = vmatpush1.msra.mxu0 %v3040
          %3052 = vmatprep.subr.mxu0 0.0
          %3053 = vmatpush1.msra.mxu0 0.0
          %3054 = vmatprep.subr.mxu0 0.0
          %3055 = vmatpush1.msra.mxu0 0.0
          %3056 = vmatprep.subr.mxu0 0.0
          %3057 = vmatpush1.msra.mxu0 0.0
          %3058 = vmatprep.subr.mxu0 0.0
          %3059 = vmatpush1.msra.mxu0 0.0
          %3060 = vmatprep.subr.mxu0 0.0
          %3061 = vmatpush1.msra.mxu0 0.0
          %3062 = vmatprep.subr.mxu0 0.0
          %3063 = vmatpush1.msra.mxu0 0.0
          %3064 = vmatprep.subr.mxu0 0.0
          %3065 = vmatpush1.msra.mxu0 0.0
          %3066 = vmatprep.subr.mxu0 0.0
          %3067 = vmatpush1.msra.mxu0 0.0
          %3068 = vmatprep.subr.mxu0 0.0
          %3069 = vmatpush1.msra.mxu0 0.0
          %3070 = vmatprep.subr.mxu0 0.0
          %3071 = vmatpush1.msra.mxu0 0.0
          %3072 = vmatprep.subr.mxu0 0.0
          %3073 = vmatpush1.msra.mxu0 0.0
          %3074 = vmatprep.subr.mxu0 0.0
          %3075 = vmatpush1.msra.mxu0 0.0
          %3076 = vmatprep.subr.mxu0 0.0
          %3077 = vmatpush1.msra.mxu0 0.0
          %3078 = vmatprep.subr.mxu0 0.0
          %3079 = vmatpush1.msra.mxu0 0.0
          %3080 = vmatprep.subr.mxu0 0.0
          %3081 = vmatpush1.msra.mxu0 0.0
          %3082 = vmatprep.subr.mxu0 0.0
          %3083 = vmatpush1.msra.mxu0 0.0
          %3084 = vmatprep.subr.mxu0 0.0
          %3085 = vmatpush1.msra.mxu0 0.0
          %3086 = vmatprep.subr.mxu0 0.0
          %3087 = vmatpush1.msra.mxu0 0.0
          %3088 = vmatprep.subr.mxu0 0.0
          %3089 = vmatpush1.msra.mxu0 0.0
          %3090 = vmatprep.subr.mxu0 0.0
          %3091 = vmatpush1.msra.mxu0 0.0
          %3092 = vmatprep.subr.mxu0 0.0
          %3093 = vmatpush1.msra.mxu0 0.0
          %3094 = vmatprep.subr.mxu0 0.0
          %3095 = vmatpush1.msra.mxu0 0.0
          %3096 = vmatprep.subr.mxu0 0.0
          %3097 = vmatpush1.msra.mxu0 0.0
          %3098 = vmatprep.subr.mxu0 0.0
          %3099 = vmatpush1.msra.mxu0 0.0
          %3100 = vmatprep.subr.mxu0 0.0
          %3101 = vmatpush1.msra.mxu0 0.0
          %3102 = vmatprep.subr.mxu0 0.0
          %3103 = vmatpush1.msra.mxu0 0.0
          %3104 = vmatprep.subr.mxu0 0.0
          %3105 = vmatpush1.msra.mxu0 0.0
          %3106 = vmatprep.subr.mxu0 0.0
          %3107 = vmatpush1.msra.mxu0 0.0
          %3108 = vmatprep.subr.mxu0 0.0
          %3109 = vmatpush1.msra.mxu0 0.0
          %3110 = vmatprep.subr.mxu0 0.0
          %3111 = vmatpush1.msra.mxu0 0.0
          %3112 = vmatprep.subr.mxu0 0.0
          %3113 = vmatpush1.msra.mxu0 0.0
          %3114 = vmatprep.mubr.f32.mxu0 0.0
          %3115 = vmatmul.mubr.f32.gmra.mrb[0].mxu0 %v3045
          %v3116 = vpop.f32.mrb[0].mxu0
          %v3117 = vadd.f32 0.0, %v3116
          %v3118 = vpop.f32.mrb[0].mxu0
          %v3119 = vadd.f32 0.0, %v3118
          %3120 = vmatprep.mubr.f32.mxu0 0.0
          %3121 = vmatmul.mubr.f32.gmra.mrb[0].mxu0 %v3048
          %v3122 = vpop.f32.mrb[0].mxu0
          %v3123 = vadd.f32 0.0, %v3122
          %v3124 = vpop.f32.mrb[0].mxu0
          %v3125 = vadd.f32 0.0, %v3124
          %3126 = vdwg.mxu0
          %v3127 = vadd.f32 %v3026, %v3117
          %v3128 = vadd.f32 %v3027, %v3119
          %v3129 = vadd.f32 %v3028, %v3123
          %v3130 = vadd.f32 %v3029, %v3125
          %s3131 = scalar_lea.vmem [#allocation13], 416
          %v3132 = vld [vmem:[%s3131] sm:$0xff]
          %v3133 = vld [vmem:[%s3131 + $0x8] sm:$0xff]
          %3134 = vrot.lane.b32.xlu0 %v2320, 34
          %v3135 = vpop.permute.xlu0 %3134
          %3136 = vrot.lane.b32.xlu0 %v2321, 34
          %v3137 = vpop.permute.xlu0 %3136
          %3138 = vrot.lane.b32.xlu0 %v2322, 34
          %v3139 = vpop.permute.xlu0 %3138
          %vm3140 = vcmask 277504
          %v3141 = vsel %vm3140, %v3135, %v3137
          %v3142 = vsel %vm3140, %v3137, %v3139
          %v3146 = vsel %vm535, %v3132, 0
          %v3149 = vsel %vm535, %v3133, 0
          %3151 = vmatprep.subr.mxu0 %v3142
          %3152 = vmatpush1.msra.mxu0 %v3141
          %3153 = vmatprep.subr.mxu0 0.0
          %3154 = vmatpush1.msra.mxu0 0.0
          %3155 = vmatprep.subr.mxu0 0.0
          %3156 = vmatpush1.msra.mxu0 0.0
          %3157 = vmatprep.subr.mxu0 0.0
          %3158 = vmatpush1.msra.mxu0 0.0
          %3159 = vmatprep.subr.mxu0 0.0
          %3160 = vmatpush1.msra.mxu0 0.0
          %3161 = vmatprep.subr.mxu0 0.0
          %3162 = vmatpush1.msra.mxu0 0.0
          %3163 = vmatprep.subr.mxu0 0.0
          %3164 = vmatpush1.msra.mxu0 0.0
          %3165 = vmatprep.subr.mxu0 0.0
          %3166 = vmatpush1.msra.mxu0 0.0
          %3167 = vmatprep.subr.mxu0 0.0
          %3168 = vmatpush1.msra.mxu0 0.0
          %3169 = vmatprep.subr.mxu0 0.0
          %3170 = vmatpush1.msra.mxu0 0.0
          %3171 = vmatprep.subr.mxu0 0.0
          %3172 = vmatpush1.msra.mxu0 0.0
          %3173 = vmatprep.subr.mxu0 0.0
          %3174 = vmatpush1.msra.mxu0 0.0
          %3175 = vmatprep.subr.mxu0 0.0
          %3176 = vmatpush1.msra.mxu0 0.0
          %3177 = vmatprep.subr.mxu0 0.0
          %3178 = vmatpush1.msra.mxu0 0.0
          %3179 = vmatprep.subr.mxu0 0.0
          %3180 = vmatpush1.msra.mxu0 0.0
          %3181 = vmatprep.subr.mxu0 0.0
          %3182 = vmatpush1.msra.mxu0 0.0
          %3183 = vmatprep.subr.mxu0 0.0
          %3184 = vmatpush1.msra.mxu0 0.0
          %3185 = vmatprep.subr.mxu0 0.0
          %3186 = vmatpush1.msra.mxu0 0.0
          %3187 = vmatprep.subr.mxu0 0.0
          %3188 = vmatpush1.msra.mxu0 0.0
          %3189 = vmatprep.subr.mxu0 0.0
          %3190 = vmatpush1.msra.mxu0 0.0
          %3191 = vmatprep.subr.mxu0 0.0
          %3192 = vmatpush1.msra.mxu0 0.0
          %3193 = vmatprep.subr.mxu0 0.0
          %3194 = vmatpush1.msra.mxu0 0.0
          %3195 = vmatprep.subr.mxu0 0.0
          %3196 = vmatpush1.msra.mxu0 0.0
          %3197 = vmatprep.subr.mxu0 0.0
          %3198 = vmatpush1.msra.mxu0 0.0
          %3199 = vmatprep.subr.mxu0 0.0
          %3200 = vmatpush1.msra.mxu0 0.0
          %3201 = vmatprep.subr.mxu0 0.0
          %3202 = vmatpush1.msra.mxu0 0.0
          %3203 = vmatprep.subr.mxu0 0.0
          %3204 = vmatpush1.msra.mxu0 0.0
          %3205 = vmatprep.subr.mxu0 0.0
          %3206 = vmatpush1.msra.mxu0 0.0
          %3207 = vmatprep.subr.mxu0 0.0
          %3208 = vmatpush1.msra.mxu0 0.0
          %3209 = vmatprep.subr.mxu0 0.0
          %3210 = vmatpush1.msra.mxu0 0.0
          %3211 = vmatprep.subr.mxu0 0.0
          %3212 = vmatpush1.msra.mxu0 0.0
          %3213 = vmatprep.subr.mxu0 0.0
          %3214 = vmatpush1.msra.mxu0 0.0
          %3215 = vmatprep.mubr.f32.mxu0 0.0
          %3216 = vmatmul.mubr.f32.gmra.mrb[0].mxu0 %v3146
          %v3217 = vpop.f32.mrb[0].mxu0
          %v3218 = vadd.f32 0.0, %v3217
          %v3219 = vpop.f32.mrb[0].mxu0
          %v3220 = vadd.f32 0.0, %v3219
          %3221 = vmatprep.mubr.f32.mxu0 0.0
          %3222 = vmatmul.mubr.f32.gmra.mrb[0].mxu0 %v3149
          %v3223 = vpop.f32.mrb[0].mxu0
          %v3224 = vadd.f32 0.0, %v3223
          %v3225 = vpop.f32.mrb[0].mxu0
          %v3226 = vadd.f32 0.0, %v3225
          %3227 = vdwg.mxu0
          %v3228 = vadd.f32 %v3127, %v3218
          %v3229 = vadd.f32 %v3128, %v3220
          %v3230 = vadd.f32 %v3129, %v3224
          %v3231 = vadd.f32 %v3130, %v3226
          %s3232 = smul.u32 %s38, 256
          %s3233 = sshra.s32 %s3232, 7
          %s3234 = sand.u32 %s3232, 127
          %s3235 = smul.addr %s3233, 8
          %s3236 = scalar_lea.vmem [#allocation2], %s3235
          %3237 = vst [vmem:[%s3236] sm:$0xff] %v3228
          %3238 = vst [vmem:[%s3236 + $0x8] sm:$0xff] %v3229
          %3239 = vst [vmem:[%s3236 + $0x30] sm:$0xff] %v3230
          %3240 = vst [vmem:[%s3236 + $0x38] sm:$0xff] %v3231
          %v3241 = vld [vmem:[%s427] sm:$0x3]
          %v3243 = vlaneseq
          %v3244 = vshrl.u32 %v3243, 7
          %v3245 = vsub.s32 0, %v3244
          %v3246 = vrot.slane %v3241, %v3245
          %v3247 = vlaneseq
          %v3248 = vshrl.u32 %v3247, 7
          %v3249 = vsub.s32 1, %v3248
          %v3250 = vrot.slane %v3241, %v3249
          %v3253 = vmul.f32 %v3228, %v3246
          %v3254 = vmul.f32 %v3229, %v3250
          %v3255 = vmul.f32 %v3230, %v3246
          %v3256 = vmul.f32 %v3231, %v3250
          %v3257 = vld [vmem:[#allocation3] sm:$0xff]
          %v3258 = vld [vmem:[#allocation3 + $0x8] sm:$0xff]
          %3259 = vmatprep.subr.mxu0 0.0
          %3260 = vmatpush1.msra.mxu0 1.0
          %3261 = vmatprep.subr.mxu0 0.0
          %3262 = vmatpush1.msra.mxu0 1.0
          %3263 = vmatprep.subr.mxu0 0.0
          %3264 = vmatpush1.msra.mxu0 1.0
          %3265 = vmatprep.subr.mxu0 0.0
          %3266 = vmatpush1.msra.mxu0 1.0
          %3267 = vmatprep.subr.mxu0 0.0
          %3268 = vmatpush1.msra.mxu0 1.0
          %3269 = vmatprep.subr.mxu0 0.0
          %3270 = vmatpush1.msra.mxu0 1.0
          %3271 = vmatprep.subr.mxu0 0.0
          %3272 = vmatpush1.msra.mxu0 1.0
          %3273 = vmatprep.subr.mxu0 0.0
          %3274 = vmatpush1.msra.mxu0 1.0
          %3275 = vmatprep.subr.mxu0 0.0
          %3276 = vmatpush1.msra.mxu0 1.0
          %3277 = vmatprep.subr.mxu0 0.0
          %3278 = vmatpush1.msra.mxu0 1.0
          %3279 = vmatprep.subr.mxu0 0.0
          %3280 = vmatpush1.msra.mxu0 1.0
          %3281 = vmatprep.subr.mxu0 0.0
          %3282 = vmatpush1.msra.mxu0 1.0
          %3283 = vmatprep.subr.mxu0 0.0
          %3284 = vmatpush1.msra.mxu0 1.0
          %3285 = vmatprep.subr.mxu0 0.0
          %3286 = vmatpush1.msra.mxu0 1.0
          %3287 = vmatprep.subr.mxu0 0.0
          %3288 = vmatpush1.msra.mxu0 1.0
          %3289 = vmatprep.subr.mxu0 0.0
          %3290 = vmatpush1.msra.mxu0 1.0
          %3291 = vmatprep.subr.mxu0 0.0
          %3292 = vmatpush1.msra.mxu0 1.0
          %3293 = vmatprep.subr.mxu0 0.0
          %3294 = vmatpush1.msra.mxu0 1.0
          %3295 = vmatprep.subr.mxu0 0.0
          %3296 = vmatpush1.msra.mxu0 1.0
          %3297 = vmatprep.subr.mxu0 0.0
          %3298 = vmatpush1.msra.mxu0 1.0
          %3299 = vmatprep.subr.mxu0 0.0
          %3300 = vmatpush1.msra.mxu0 1.0
          %3301 = vmatprep.subr.mxu0 0.0
          %3302 = vmatpush1.msra.mxu0 1.0
          %3303 = vmatprep.subr.mxu0 0.0
          %3304 = vmatpush1.msra.mxu0 1.0
          %3305 = vmatprep.subr.mxu0 0.0
          %3306 = vmatpush1.msra.mxu0 1.0
          %3307 = vmatprep.subr.mxu0 0.0
          %3308 = vmatpush1.msra.mxu0 1.0
          %3309 = vmatprep.subr.mxu0 0.0
          %3310 = vmatpush1.msra.mxu0 1.0
          %3311 = vmatprep.subr.mxu0 0.0
          %3312 = vmatpush1.msra.mxu0 1.0
          %3313 = vmatprep.subr.mxu0 0.0
          %3314 = vmatpush1.msra.mxu0 1.0
          %3315 = vmatprep.subr.mxu0 0.0
          %3316 = vmatpush1.msra.mxu0 1.0
          %3317 = vmatprep.subr.mxu0 0.0
          %3318 = vmatpush1.msra.mxu0 1.0
          %3319 = vmatprep.subr.mxu0 0.0
          %3320 = vmatpush1.msra.mxu0 1.0
          %3321 = vmatprep.subr.mxu0 0.0
          %3322 = vmatpush1.msra.mxu0 1.0
          %3323 = vmatprep.mubr.f32.mxu0 %v3254
          %3324 = vmatmul.mubr.f32.gmra.mrb[0].mxu0 %v3253
          %v3325 = vpop.f32.mrb[0].mxu0
          %v3326 = vadd.f32 0.0, %v3325
          %v3327 = vpop.f32.mrb[0].mxu0
          %3328 = vmatprep.mubr.f32.mxu0 %v3256
          %3329 = vmatmul.mubr.f32.gmra.mrb[0].mxu0 %v3255
          %v3330 = vpop.f32.mrb[0].mxu0
          %v3331 = vadd.f32 0.0, %v3330
          %v3332 = vpop.f32.mrb[0].mxu0
          %3333 = vdwg.mxu0
          %v3334 = vadd.f32 %v3257, %v3326
          %v3335 = vadd.f32 %v3258, %v3331
          %vm3336 = vcmask 7168
          %3337 = vst.msk [vmem:[#allocation3] sm:$0xff] %vm3336, %v3334
          %3338 = vst.msk [vmem:[#allocation3 + $0x8] sm:$0xff] %vm3336, %v3335
          %v3339 = vld [vmem:[#allocation4] sm:$0xff]
          %v3340 = vld [vmem:[#allocation4 + $0x8] sm:$0xff]
          %v3341 = vmul.f32 %v3253, %v3228
          %v3342 = vmul.f32 %v3254, %v3229
          %v3343 = vmul.f32 %v3255, %v3230
          %v3344 = vmul.f32 %v3256, %v3231
          %3345 = vmatprep.subr.mxu0 0.0
          %3346 = vmatpush1.msra.mxu0 1.0
          %3347 = vmatprep.subr.mxu0 0.0
          %3348 = vmatpush1.msra.mxu0 1.0
          %3349 = vmatprep.subr.mxu0 0.0
          %3350 = vmatpush1.msra.mxu0 1.0
          %3351 = vmatprep.subr.mxu0 0.0
          %3352 = vmatpush1.msra.mxu0 1.0
          %3353 = vmatprep.subr.mxu0 0.0
          %3354 = vmatpush1.msra.mxu0 1.0
          %3355 = vmatprep.subr.mxu0 0.0
          %3356 = vmatpush1.msra.mxu0 1.0
          %3357 = vmatprep.subr.mxu0 0.0
          %3358 = vmatpush1.msra.mxu0 1.0
          %3359 = vmatprep.subr.mxu0 0.0
          %3360 = vmatpush1.msra.mxu0 1.0
          %3361 = vmatprep.subr.mxu0 0.0
          %3362 = vmatpush1.msra.mxu0 1.0
          %3363 = vmatprep.subr.mxu0 0.0
          %3364 = vmatpush1.msra.mxu0 1.0
          %3365 = vmatprep.subr.mxu0 0.0
          %3366 = vmatpush1.msra.mxu0 1.0
          %3367 = vmatprep.subr.mxu0 0.0
          %3368 = vmatpush1.msra.mxu0 1.0
          %3369 = vmatprep.subr.mxu0 0.0
          %3370 = vmatpush1.msra.mxu0 1.0
          %3371 = vmatprep.subr.mxu0 0.0
          %3372 = vmatpush1.msra.mxu0 1.0
          %3373 = vmatprep.subr.mxu0 0.0
          %3374 = vmatpush1.msra.mxu0 1.0
          %3375 = vmatprep.subr.mxu0 0.0
          %3376 = vmatpush1.msra.mxu0 1.0
          %3377 = vmatprep.subr.mxu0 0.0
          %3378 = vmatpush1.msra.mxu0 1.0
          %3379 = vmatprep.subr.mxu0 0.0
          %3380 = vmatpush1.msra.mxu0 1.0
          %3381 = vmatprep.subr.mxu0 0.0
          %3382 = vmatpush1.msra.mxu0 1.0
          %3383 = vmatprep.subr.mxu0 0.0
          %3384 = vmatpush1.msra.mxu0 1.0
          %3385 = vmatprep.subr.mxu0 0.0
          %3386 = vmatpush1.msra.mxu0 1.0
          %3387 = vmatprep.subr.mxu0 0.0
          %3388 = vmatpush1.msra.mxu0 1.0
          %3389 = vmatprep.subr.mxu0 0.0
          %3390 = vmatpush1.msra.mxu0 1.0
          %3391 = vmatprep.subr.mxu0 0.0
          %3392 = vmatpush1.msra.mxu0 1.0
          %3393 = vmatprep.subr.mxu0 0.0
          %3394 = vmatpush1.msra.mxu0 1.0
          %3395 = vmatprep.subr.mxu0 0.0
          %3396 = vmatpush1.msra.mxu0 1.0
          %3397 = vmatprep.subr.mxu0 0.0
          %3398 = vmatpush1.msra.mxu0 1.0
          %3399 = vmatprep.subr.mxu0 0.0
          %3400 = vmatpush1.msra.mxu0 1.0
          %3401 = vmatprep.subr.mxu0 0.0
          %3402 = vmatpush1.msra.mxu0 1.0
          %3403 = vmatprep.subr.mxu0 0.0
          %3404 = vmatpush1.msra.mxu0 1.0
          %3405 = vmatprep.subr.mxu0 0.0
          %3406 = vmatpush1.msra.mxu0 1.0
          %3407 = vmatprep.subr.mxu0 0.0
          %3408 = vmatpush1.msra.mxu0 1.0
          %3409 = vmatprep.mubr.f32.mxu0 %v3342
          %3410 = vmatmul.mubr.f32.gmra.mrb[0].mxu0 %v3341
          %v3411 = vpop.f32.mrb[0].mxu0
          %v3412 = vadd.f32 0.0, %v3411
          %v3413 = vpop.f32.mrb[0].mxu0
          %3414 = vmatprep.mubr.f32.mxu0 %v3344
          %3415 = vmatmul.mubr.f32.gmra.mrb[0].mxu0 %v3343
          %v3416 = vpop.f32.mrb[0].mxu0
          %v3417 = vadd.f32 0.0, %v3416
          %v3418 = vpop.f32.mrb[0].mxu0
          %3419 = vdwg.mxu0
          %v3420 = vadd.f32 %v3339, %v3412
          %v3421 = vadd.f32 %v3340, %v3417
          %3422 = vst.msk [vmem:[#allocation4] sm:$0xff] %vm3336, %v3420
          %3423 = vst.msk [vmem:[#allocation4 + $0x8] sm:$0xff] %vm3336, %v3421
        $region80: #{tpu_custom_call.1} parent=47 // pred_fallthru
          _
        %p3424 = scmp.eq.s32.totalorder %s37, 1
        // Predicated region
        $region85: #{tpu_custom_call.1} parent=47 // pred_check
          %p3425 = pneg %p3424
        $region86: #{tpu_custom_call.1} parent=47 // pred_check_branch
          %3427 = sbr.rel (%p3425) target = $region88
        $region87: #{tpu_custom_call.1} parent=47 // pred_region
          %p3428 = scmp.eq.s32.totalorder %s38, 0
          // Predicated region
          $region89: #{tpu_custom_call.1} parent=87 // pred_check
            %p3429 = pneg %p3428
          $region90: #{tpu_custom_call.1} parent=87 // pred_check_branch
            %3431 = sbr.rel (%p3429) target = $region92
          $region91: #{tpu_custom_call.1} parent=87 // pred_region
            %v3432 = vld [vmem:[#allocation16] sm:$0xff]
            %v3433 = vld [vmem:[#allocation16 + $0x8] sm:$0xff]
            %v3434 = vld [vmem:[#allocation3] sm:$0xff]
            %v3435 = vld [vmem:[#allocation3 + $0x8] sm:$0xff]
            %vm3436 = vcmask 130048
            %v3438 = vsel %vm3436, %v3432, 0
            %v3441 = vsel %vm3436, %v3433, 0
            %3443 = vmatprep.subr.mxu0 0.0
            %3444 = vmatpush1.msra.mxu0 %v3434
            %3445 = vmatprep.subr.mxu0 0.0
            %3446 = vmatpush1.msra.mxu0 %v3435
            %3447 = vmatprep.subr.mxu0 0.0
            %3448 = vmatpush1.msra.mxu0 0.0
            %3449 = vmatprep.subr.mxu0 0.0
            %3450 = vmatpush1.msra.mxu0 0.0
            %3451 = vmatprep.subr.mxu0 0.0
            %3452 = vmatpush1.msra.mxu0 0.0
            %3453 = vmatprep.subr.mxu0 0.0
            %3454 = vmatpush1.msra.mxu0 0.0
            %3455 = vmatprep.subr.mxu0 0.0
            %3456 = vmatpush1.msra.mxu0 0.0
            %3457 = vmatprep.subr.mxu0 0.0
            %3458 = vmatpush1.msra.mxu0 0.0
            %3459 = vmatprep.subr.mxu0 0.0
            %3460 = vmatpush1.msra.mxu0 0.0
            %3461 = vmatprep.subr.mxu0 0.0
            %3462 = vmatpush1.msra.mxu0 0.0
            %3463 = vmatprep.subr.mxu0 0.0
            %3464 = vmatpush1.msra.mxu0 0.0
            %3465 = vmatprep.subr.mxu0 0.0
            %3466 = vmatpush1.msra.mxu0 0.0
            %3467 = vmatprep.subr.mxu0 0.0
            %3468 = vmatpush1.msra.mxu0 0.0
            %3469 = vmatprep.subr.mxu0 0.0
            %3470 = vmatpush1.msra.mxu0 0.0
            %3471 = vmatprep.subr.mxu0 0.0
            %3472 = vmatpush1.msra.mxu0 0.0
            %3473 = vmatprep.subr.mxu0 0.0
            %3474 = vmatpush1.msra.mxu0 0.0
            %3475 = vmatprep.subr.mxu0 0.0
            %3476 = vmatpush1.msra.mxu0 0.0
            %3477 = vmatprep.subr.mxu0 0.0
            %3478 = vmatpush1.msra.mxu0 0.0
            %3479 = vmatprep.subr.mxu0 0.0
            %3480 = vmatpush1.msra.mxu0 0.0
            %3481 = vmatprep.subr.mxu0 0.0
            %3482 = vmatpush1.msra.mxu0 0.0
            %3483 = vmatprep.subr.mxu0 0.0
            %3484 = vmatpush1.msra.mxu0 0.0
            %3485 = vmatprep.subr.mxu0 0.0
            %3486 = vmatpush1.msra.mxu0 0.0
            %3487 = vmatprep.subr.mxu0 0.0
            %3488 = vmatpush1.msra.mxu0 0.0
            %3489 = vmatprep.subr.mxu0 0.0
            %3490 = vmatpush1.msra.mxu0 0.0
            %3491 = vmatprep.subr.mxu0 0.0
            %3492 = vmatpush1.msra.mxu0 0.0
            %3493 = vmatprep.subr.mxu0 0.0
            %3494 = vmatpush1.msra.mxu0 0.0
            %3495 = vmatprep.subr.mxu0 0.0
            %3496 = vmatpush1.msra.mxu0 0.0
            %3497 = vmatprep.subr.mxu0 0.0
            %3498 = vmatpush1.msra.mxu0 0.0
            %3499 = vmatprep.subr.mxu0 0.0
            %3500 = vmatpush1.msra.mxu0 0.0
            %3501 = vmatprep.subr.mxu0 0.0
            %3502 = vmatpush1.msra.mxu0 0.0
            %3503 = vmatprep.subr.mxu0 0.0
            %3504 = vmatpush1.msra.mxu0 0.0
            %3505 = vmatprep.subr.mxu0 0.0
            %3506 = vmatpush1.msra.mxu0 0.0
            %3507 = vmatprep.mubr.f32.mxu0 0.0
            %3508 = vmatmul.mubr.f32.gmra.mrb[0].mxu0 %v3438
            %v3509 = vpop.f32.mrb[0].mxu0
            %v3510 = vadd.f32 0.0, %v3509
            %v3511 = vpop.f32.mrb[0].mxu0
            %3512 = vmatprep.mubr.f32.mxu0 0.0
            %3513 = vmatmul.mubr.f32.gmra.mrb[0].mxu0 %v3441
            %v3514 = vpop.f32.mrb[0].mxu0
            %v3515 = vadd.f32 0.0, %v3514
            %v3516 = vpop.f32.mrb[0].mxu0
            %3517 = vdwg.mxu0
            %v3518 = vld [vmem:[#allocation4] sm:$0xff]
            %v3519 = vld [vmem:[#allocation4 + $0x8] sm:$0xff]
            %3520 = vmatprep.subr.mxu0 0.0
            %3521 = vmatpush1.msra.mxu0 %v3518
            %3522 = vmatprep.subr.mxu0 0.0
            %3523 = vmatpush1.msra.mxu0 %v3519
            %3524 = vmatprep.subr.mxu0 0.0
            %3525 = vmatpush1.msra.mxu0 0.0
            %3526 = vmatprep.subr.mxu0 0.0
            %3527 = vmatpush1.msra.mxu0 0.0
            %3528 = vmatprep.subr.mxu0 0.0
            %3529 = vmatpush1.msra.mxu0 0.0
            %3530 = vmatprep.subr.mxu0 0.0
            %3531 = vmatpush1.msra.mxu0 0.0
            %3532 = vmatprep.subr.mxu0 0.0
            %3533 = vmatpush1.msra.mxu0 0.0
            %3534 = vmatprep.subr.mxu0 0.0
            %3535 = vmatpush1.msra.mxu0 0.0
            %3536 = vmatprep.subr.mxu0 0.0
            %3537 = vmatpush1.msra.mxu0 0.0
            %3538 = vmatprep.subr.mxu0 0.0
            %3539 = vmatpush1.msra.mxu0 0.0
            %3540 = vmatprep.subr.mxu0 0.0
            %3541 = vmatpush1.msra.mxu0 0.0
            %3542 = vmatprep.subr.mxu0 0.0
            %3543 = vmatpush1.msra.mxu0 0.0
            %3544 = vmatprep.subr.mxu0 0.0
            %3545 = vmatpush1.msra.mxu0 0.0
            %3546 = vmatprep.subr.mxu0 0.0
            %3547 = vmatpush1.msra.mxu0 0.0
            %3548 = vmatprep.subr.mxu0 0.0
            %3549 = vmatpush1.msra.mxu0 0.0
            %3550 = vmatprep.subr.mxu0 0.0
            %3551 = vmatpush1.msra.mxu0 0.0
            %3552 = vmatprep.subr.mxu0 0.0
            %3553 = vmatpush1.msra.mxu0 0.0
            %3554 = vmatprep.subr.mxu0 0.0
            %3555 = vmatpush1.msra.mxu0 0.0
            %3556 = vmatprep.subr.mxu0 0.0
            %3557 = vmatpush1.msra.mxu0 0.0
            %3558 = vmatprep.subr.mxu0 0.0
            %3559 = vmatpush1.msra.mxu0 0.0
            %3560 = vmatprep.subr.mxu0 0.0
            %3561 = vmatpush1.msra.mxu0 0.0
            %3562 = vmatprep.subr.mxu0 0.0
            %3563 = vmatpush1.msra.mxu0 0.0
            %3564 = vmatprep.subr.mxu0 0.0
            %3565 = vmatpush1.msra.mxu0 0.0
            %3566 = vmatprep.subr.mxu0 0.0
            %3567 = vmatpush1.msra.mxu0 0.0
            %3568 = vmatprep.subr.mxu0 0.0
            %3569 = vmatpush1.msra.mxu0 0.0
            %3570 = vmatprep.subr.mxu0 0.0
            %3571 = vmatpush1.msra.mxu0 0.0
            %3572 = vmatprep.subr.mxu0 0.0
            %3573 = vmatpush1.msra.mxu0 0.0
            %3574 = vmatprep.subr.mxu0 0.0
            %3575 = vmatpush1.msra.mxu0 0.0
            %3576 = vmatprep.subr.mxu0 0.0
            %3577 = vmatpush1.msra.mxu0 0.0
            %3578 = vmatprep.subr.mxu0 0.0
            %3579 = vmatpush1.msra.mxu0 0.0
            %3580 = vmatprep.subr.mxu0 0.0
            %3581 = vmatpush1.msra.mxu0 0.0
            %3582 = vmatprep.subr.mxu0 0.0
            %3583 = vmatpush1.msra.mxu0 0.0
            %3584 = vmatprep.mubr.f32.mxu0 0.0
            %3585 = vmatmul.mubr.f32.gmra.mrb[0].mxu0 %v3438
            %v3586 = vpop.f32.mrb[0].mxu0
            %v3587 = vadd.f32 0.0, %v3586
            %v3588 = vpop.f32.mrb[0].mxu0
            %3589 = vmatprep.mubr.f32.mxu0 0.0
            %3590 = vmatmul.mubr.f32.gmra.mrb[0].mxu0 %v3441
            %v3591 = vpop.f32.mrb[0].mxu0
            %v3592 = vadd.f32 0.0, %v3591
            %v3593 = vpop.f32.mrb[0].mxu0
            %3594 = vdwg.mxu0
            %v3595 = vmul.f32 %v3510, 0.001953125
            %v3596 = vmul.f32 %v3515, 0.001953125
            %v3597 = vmul.f32 %v3587, 0.001953125
            %v3598 = vmul.f32 %v3592, 0.001953125
            %v3599 = vmul.f32 %v3595, %v3595
            %v3600 = vmul.f32 %v3596, %v3596
            %v3601 = vsub.f32 %v3597, %v3599
            %v3602 = vsub.f32 %v3598, %v3600
            %v3603 = vadd.f32 %v3601, 1e-05
            %v3604 = vadd.f32 %v3602, 1e-05
            %v3605 = vrsqrt.pop %v3603
            %v3606 = vrsqrt.pop %v3604
            %v3607 = vld [vmem:[#allocation17] sm:$0xff]
            %v3608 = vld [vmem:[#allocation17 + $0x8] sm:$0xff]
            %v3609 = vmul.f32 %v3605, %v3607
            %v3610 = vmul.f32 %v3606, %v3608
            %vm3611 = vcmask 7168
            %3612 = vst.msk [vmem:[#allocation5] sm:$0xff] %vm3611, %v3609
            %3613 = vst.msk [vmem:[#allocation5 + $0x8] sm:$0xff] %vm3611, %v3610
            %v3614 = vld [vmem:[#allocation19] sm:$0xff]
            %v3615 = vld [vmem:[#allocation19 + $0x8] sm:$0xff]
            %v3616 = vmul.f32 %v3595, %v3609
            %v3617 = vmul.f32 %v3596, %v3610
            %v3618 = vsub.f32 %v3614, %v3616
            %v3619 = vsub.f32 %v3615, %v3617
            %3620 = vst.msk [vmem:[#allocation6] sm:$0xff] %vm3611, %v3618
            %3621 = vst.msk [vmem:[#allocation6 + $0x8] sm:$0xff] %vm3611, %v3619
          $region92: #{tpu_custom_call.1} parent=87 // pred_fallthru
            _
          %s3622 = smul.u32 %s38, 256
          %s3623 = sshra.s32 %s3622, 7
          %s3624 = sand.u32 %s3622, 127
          %s3625 = smul.addr %s3623, 8
          %s3626 = scalar_lea.vmem [#allocation2], %s3625
          %v3627 = vld [vmem:[%s3626] sm:$0xff]
          %v3628 = vld [vmem:[%s3626 + $0x8] sm:$0xff]
          %v3629 = vld [vmem:[%s3626 + $0x30] sm:$0xff]
          %v3630 = vld [vmem:[%s3626 + $0x38] sm:$0xff]
          %v3631 = vld [vmem:[#allocation5] sm:$0xff]
          %v3632 = vld [vmem:[#allocation5 + $0x8] sm:$0xff]
          %3634 = vset.pattern.permute.xlu0 0
          %3635 = vperm.xlu0 %3634, %v3631
          %v3636 = vpop.permute.xlu0 %3635
          %3639 = vset.pattern.permute.xlu0 0
          %3640 = vperm.xlu0 %3639, %v3632
          %v3641 = vpop.permute.xlu0 %3640
          %v3643 = vmul.f32 %v3627, %v3636
          %v3644 = vmul.f32 %v3628, %v3636
          %v3645 = vmul.f32 %v3629, %v3641
          %v3646 = vmul.f32 %v3630, %v3641
          %v3647 = vld [vmem:[#allocation6] sm:$0xff]
          %v3648 = vld [vmem:[#allocation6 + $0x8] sm:$0xff]
          %3650 = vset.pattern.permute.xlu0 0
          %3651 = vperm.xlu0 %3650, %v3647
          %v3652 = vpop.permute.xlu0 %3651
          %3655 = vset.pattern.permute.xlu0 0
          %3656 = vperm.xlu0 %3655, %v3648
          %v3657 = vpop.permute.xlu0 %3656
          %v3659 = vadd.f32 %v3643, %v3652
          %v3660 = vadd.f32 %v3644, %v3652
          %v3661 = vadd.f32 %v3645, %v3657
          %v3662 = vadd.f32 %v3646, %v3657
          %vm3663 = vcmp.gt.f32.partialorder %v3659, 0.0
          %vm3664 = vcmp.gt.f32.partialorder %v3660, 0.0
          %vm3665 = vcmp.gt.f32.partialorder %v3661, 0.0
          %vm3666 = vcmp.gt.f32.partialorder %v3662, 0.0
          %v3667 = vmin.f32 %v3659, 0.0
          %v3668 = vmin.f32 %v3660, 0.0
          %v3669 = vmin.f32 %v3661, 0.0
          %v3670 = vmin.f32 %v3662, 0.0
          %v3671 = vmul.f32 %v3667, 1.442695
          %v3672 = vpow.pop %v3671
          %v3673 = vmul.f32 %v3668, 1.442695
          %v3674 = vpow.pop %v3673
          %v3675 = vmul.f32 %v3669, 1.442695
          %v3676 = vpow.pop %v3675
          %v3677 = vmul.f32 %v3670, 1.442695
          %v3678 = vpow.pop %v3677
          %v3679 = vsub.f32 %v3672, 1.0
          %v3680 = vsub.f32 %v3674, 1.0
          %v3681 = vsub.f32 %v3676, 1.0
          %v3682 = vsub.f32 %v3678, 1.0
          %v3683 = vsel %vm3663, %v3659, %v3679
          %v3684 = vsel %vm3664, %v3660, %v3680
          %v3685 = vsel %vm3665, %v3661, %v3681
          %v3686 = vsel %vm3666, %v3662, %v3682
          %3687 = vst [vmem:[%s479] sm:$0xff] %v3683
          %3688 = vst [vmem:[%s479 + $0x8] sm:$0xff] %v3684
          %3689 = vst [vmem:[%s479 + $0x10] sm:$0xff] %v3685
          %3690 = vst [vmem:[%s479 + $0x18] sm:$0xff] %v3686
        $region88: #{tpu_custom_call.1} parent=47 // pred_fallthru
          _
        %s3691 = sand.u32 %s242, 1
        %s3692 = scalar_lea.sflag [#allocation10], %s3691
        %s3693 = sand.u32 %s242, 1
        %s3694 = smul.addr %s3693, 32
        %s3695 = scalar_lea.vmem [#allocation20], %s3694
        // Predicated region
        $region93: #{tpu_custom_call.1} parent=47 // pred_check
          %p3696 = pneg %p252
        $region94: #{tpu_custom_call.1} parent=47 // pred_check_branch
          %3698 = sbr.rel (%p3696) target = $region96
        $region95: #{tpu_custom_call.1} parent=47 // pred_region
          %s3699 = smul.u32 %s38, %s37
          %s3700 = smul.u32 2, %s3699
          %s3702 = ssub.s32 512, 512
          %3703 = vsyncadd %s3692, %s3702
          %s3704 = smul.addr %s36, 12
          %s3705 = sadd.s32 %s3700, %s3704
          %s3706 = smul.addr %s3705, 128
          %s3707 = scalar_lea.hbm %s7, %s3706
          %s3708 = sshll.u32 %s3695, 4
          %s3709 = int_to_ptr.vmem [resolvable:$true] %s3708
          %3714 = dma.vmem_to_hbm [thread:$0]  %s3709, 512, %s3707, %s3692, 256, 768, 16
        $region96: #{tpu_custom_call.1} parent=47 // pred_fallthru
          _
      $region48: #{tpu_custom_call.1} parent=5 // pred_fallthru
        _
      %p3715 = scmp.le.s32.totalorder 2, %s26
      // Predicated region
      $region97: #{tpu_custom_call.1} parent=5 // pred_check
        %p3716 = pneg %p3715
      $region98: #{tpu_custom_call.1} parent=5 // pred_check_branch
        %3718 = sbr.rel (%p3716) target = $region100
      $region99: #{tpu_custom_call.1} parent=5 // pred_region
        %s3719 = ssub.s32 %s26, 2
        // Predicated region
        $region101: #{tpu_custom_call.1} parent=99 // pred_check
          %p3720 = pneg %p258
        $region102: #{tpu_custom_call.1} parent=99 // pred_check_branch
          %3722 = sbr.rel (%p3720) target = $region104
        $region103: #{tpu_custom_call.1} parent=99 // pred_region
          %s3723 = sand.u32 %s243, 1
          %s3724 = scalar_lea.sflag [#allocation10], %s3723
          %s3725 = sand.u32 %s243, 1
          %s3726 = smul.addr %s3725, 32
          %s3727 = scalar_lea.vmem [#allocation20], %s3726
          %3728 = dma.done %s3724, 512
        $region104: #{tpu_custom_call.1} parent=99 // pred_fallthru
          _
      $region100: #{tpu_custom_call.1} parent=5 // pred_fallthru
        _
    $region6: #{tpu_custom_call.1} parent=1 // loop_footer
      %s30 = sadd.s32 1, %s26
    $region7: #{tpu_custom_call.1} parent=1 // loop_footer_branch
      %25 = sbr.rel target = $region3
    $region8: #{tpu_custom_call.1} parent=1 // loop_exit
      _
    %3729 = vsyncpa [#allocation9], 1
    %s3730 = scalar_lea.sflag [#allocation9], 1
    %3731 = vsyncpa %s3730, 1
    %3732 = vsyncpa [#allocation12], 1
    %s3733 = scalar_lea.sflag [#allocation12], 1
    %3734 = vsyncpa %s3733, 1
    %3735 = vsyncpa [#allocation15], 1
    %s3736 = scalar_lea.sflag [#allocation15], 1
    %3737 = vsyncpa %s3736, 1
    %3738 = vsyncpa [#allocation18], 1
    %3739 = vsyncpa [#allocation10], 1
    %s3740 = scalar_lea.sflag [#allocation10], 1
    %3741 = vsyncpa %s3740, 1

</llo_original>
